<compile_context>
chip_gen: v5e
topology: v5e:2x2
jax: 0.10.0
libtpu: 0.0.40
codegen_flags: <defaults>
</compile_context>

<pallas_src>
import functools

import jax
import jax.numpy as jnp
from jax import lax
from jax.experimental import pallas as pl
from jax.experimental.pallas import tpu as pltpu

DILATIONS = (1, 6, 12, 18)
BN_EPS = 1e-5
LANE = 128


def _round_up(v, m):
    return (v + m - 1) // m * m


# ----------------------------------------------------------------------------
# Pallas kernel: grid = (batch, H-tile).  One (tile_h, W, Cout_p) output slab
# per step; padded input plane lives in a persistent VMEM scratch per batch.
# ----------------------------------------------------------------------------
def _aspp_kernel(x_ref, w_ref, b_ref, wout_ref, bias_ref, out_ref, xp_ref, *,
                 H, W, Cin, Cout_p, pad, tile_h, dilations):
    t = pl.program_id(1)
    Wp = W + 2 * pad
    dt = xp_ref.dtype

    # Fill the persistent padded plane once per batch element (first tile):
    # zero only the halo ring (the interior is fully overwritten), then copy
    # the interior from the auto-pipelined bf16 input block.  The halo is never
    # written anywhere else, so no stale VMEM can leak into the dilated taps.
    @pl.when(t == 0)
    def _fill_plane():
        xp_ref[:pad, :, :] = jnp.zeros((pad, Wp, Cin), dt)
        xp_ref[pad + H:, :, :] = jnp.zeros((pad, Wp, Cin), dt)
        xp_ref[pad:pad + H, :pad, :] = jnp.zeros((H, pad, Cin), dt)
        xp_ref[pad:pad + H, pad + W:, :] = jnp.zeros((H, pad, Cin), dt)
        xp_ref[pad:pad + H, pad:pad + W, :] = x_ref[0].astype(dt)

    r0 = t * tile_h                      # first output row of this tile
    rows = tile_h * W

    acc = jnp.zeros((rows, Cout_p), jnp.float32)
    for b, d in enumerate(dilations):
        y = jnp.zeros((rows, Cout_p), jnp.float32)
        for ky in range(3):
            # Merge the 3 kx taps into a single matmul with K = 3*Cin.
            oy = r0 + pad + (ky - 1) * d                    # >= 0 (pad == max d)
            taps = [xp_ref[pl.ds(oy, tile_h),
                           pad + (kx - 1) * d: pad + (kx - 1) * d + W, :]
                    for kx in range(3)]
            patch = (jnp.concatenate(taps, axis=-1)
                     .reshape(rows, 3 * Cin).astype(w_ref.dtype))
            y = y + jnp.dot(patch, w_ref[b, ky],
                            preferred_element_type=jnp.float32)
        # Folded conv-bias + BatchNorm + ReLU (kept out of the tap loop).
        y = jnp.maximum(y + b_ref[b], 0.0)
        # Fused per-branch slice of the 1x1 output conv (concat never hits HBM).
        acc = acc + jnp.dot(y.astype(wout_ref.dtype), wout_ref[b],
                            preferred_element_type=jnp.float32)

    # bias_ref folds: output-conv bias + output BN + the global-avg-pool branch.
    out = jnp.maximum(acc + bias_ref[0], 0.0)
    out_ref[0] = out.reshape(tile_h, W, Cout_p).astype(out_ref.dtype)


def aspp_pallas(x_nhwc, w_br, b_br, wout_br, bias_total, *, pad, tile_h):
    N, H, W, Cin = x_nhwc.shape
    Cout_p = wout_br.shape[-1]
    assert pad >= max(DILATIONS), "pad must cover the largest dilation"
    assert H % tile_h == 0, "tile_h must divide H"
    n_t = H // tile_h
    Hp, Wp = H + 2 * pad, W + 2 * pad

    kernel = functools.partial(_aspp_kernel, H=H, W=W, Cin=Cin, Cout_p=Cout_p,
                               pad=pad, tile_h=tile_h, dilations=DILATIONS)

    # Explicit VMEM budget: padded-plane scratch + double-buffered blocks +
    # headroom for matmul temporaries (acc / y / im2col patch).
    est = (Hp * Wp * Cin * 4
           + 2 * H * W * Cin * x_nhwc.dtype.itemsize
           + 2 * tile_h * W * Cout_p * 4
           + 2 * (w_br.size * 2 + wout_br.size * 2
                  + b_br.size * 4 + bias_total.size * 4)
           + 6 * tile_h * W * (2 * Cout_p * 4 + 3 * Cin * 4))
    vmem_limit = int(min(max(2 * est, 32 * 1024 * 1024), 100 * 1024 * 1024))

    return pl.pallas_call(
        kernel,
        out_shape=jax.ShapeDtypeStruct((N, H, W, Cout_p), jnp.float32),
        grid_spec=pltpu.PrefetchScalarGridSpec(
            num_scalar_prefetch=0,
            grid=(N, n_t),
            in_specs=[
                # Full plane; block index only depends on n, so the pipeline
                # fetches it once per batch element (no re-DMA across tiles).
                pl.BlockSpec((1, H, W, Cin), lambda n, t: (n, 0, 0, 0)),
                pl.BlockSpec(w_br.shape, lambda n, t: (0, 0, 0, 0)),
                pl.BlockSpec(b_br.shape, lambda n, t: (0, 0, 0)),
                pl.BlockSpec(wout_br.shape, lambda n, t: (0, 0, 0)),
                pl.BlockSpec((1, 1, Cout_p), lambda n, t: (n, 0, 0)),
            ],
            out_specs=pl.BlockSpec((1, tile_h, W, Cout_p),
                                   lambda n, t: (n, t, 0, 0)),
            scratch_shapes=[pltpu.VMEM((Hp, Wp, Cin), jnp.float32)],
        ),
        compiler_params=pltpu.CompilerParams(
            # Batch splits across TensorCores; the tile axis must stay
            # "arbitrary" because the padded plane is filled at t == 0.
            dimension_semantics=("parallel", "arbitrary"),
            vmem_limit_bytes=vmem_limit),
    )(x_nhwc, w_br, b_br, wout_br, bias_total)


# ----------------------------------------------------------------------------
# Parameter construction (PyTorch layout) and BatchNorm folding.
# ----------------------------------------------------------------------------
def _bn_params(cout, i):
    r = jnp.arange(cout, dtype=jnp.float32)
    return dict(gamma=1.0 + 0.07 * i + 0.05 * r,
                beta=0.02 * i + 0.01 * r,
                mean=0.03 * i + 0.02 * r,
                var=1.0 + 0.05 * i + 0.03 * r)


def init_params(key, cin, cout):
    keys = jax.random.split(key, 12)
    branches = []
    for i, _ in enumerate(DILATIONS):
        w = jax.random.normal(keys[2 * i], (cout, cin, 3, 3), jnp.float32) * 0.2
        b = jax.random.normal(keys[2 * i + 1], (cout,), jnp.float32) * 0.1
        branches.append(dict(w=w, b=b, bn=_bn_params(cout, i)))
    wg = jax.random.normal(keys[8], (cout, cin), jnp.float32) * 0.2
    bg = jax.random.normal(keys[9], (cout,), jnp.float32) * 0.1
    wo = jax.random.normal(keys[10], (cout, 5 * cout), jnp.float32) * 0.2
    bo = jax.random.normal(keys[11], (cout,), jnp.float32) * 0.1
    return dict(branches=branches,
                glob=dict(w=wg, b=bg, bn=_bn_params(cout, 4)),
                out=dict(w=wo, b=bo, bn=_bn_params(cout, 5)))


def _fold_scale_bias(b, bn):
    scale = bn['gamma'] / jnp.sqrt(bn['var'] + BN_EPS)
    bias = (b - bn['mean']) * scale + bn['beta']
    return scale, bias


def prepare_pallas_params(params):
    cout = params['out']['b'].shape[0]
    cin = params['branches'][0]['w'].shape[1]
    cout_p = _round_up(cout, LANE)        # lane-dense output channels

    w_list, b_list = [], []
    for br in params['branches']:
        scale, bias = _fold_scale_bias(br['b'], br['bn'])
        w_f = br['w'] * scale[:, None, None, None]          # (Cout, Cin, 3, 3)
        w_f = jnp.transpose(w_f, (2, 3, 1, 0))              # (ky, kx, Cin, Cout)
        w_f = w_f.reshape(3, 3 * cin, cout)                 # kx folded into K
        w_list.append(jnp.pad(w_f, ((0, 0), (0, 0), (0, cout_p - cout))))
        b_list.append(jnp.pad(bias, (0, cout_p - cout)))
    w_br = jnp.stack(w_list, axis=0).astype(jnp.bfloat16)   # (4, 3, 3*Cin, Cout_p)
    b_br = jnp.stack(b_list, axis=0)[:, None, :]            # (4, 1, Cout_p) f32

    g = params['glob']
    gscale, bg_f = _fold_scale_bias(g['b'], g['bn'])
    wg_f = g['w'] * gscale[:, None]                         # (Cout, Cin)

    o = params['out']
    oscale, bo_f = _fold_scale_bias(o['b'], o['bn'])
    wo_mat = (o['w'] * oscale[:, None]).T                   # (5*Cout, Cout)
    wout_br = wo_mat[:4 * cout].reshape(4, cout, cout)
    wout_br = jnp.pad(wout_br, ((0, 0), (0, cout_p - cout), (0, cout_p - cout)))
    wout_br = wout_br.astype(jnp.bfloat16)                  # (4, Cout_p, Cout_p)
    wout_g = wo_mat[4 * cout:]                              # (Cout, Cout) f32
    return dict(w_br=w_br, b_br=b_br, wout_br=wout_br, wout_g=wout_g,
                wg_f=wg_f, bg_f=bg_f, bo_f=bo_f, cout=cout, cout_p=cout_p)


# ----------------------------------------------------------------------------
# Forward wrapper (NCHW in / NCHW out, matching the PyTorch module).
# ----------------------------------------------------------------------------
def aspp_forward(x_nchw, params, *, pad=max(DILATIONS), tile_h=8):
    pp = prepare_pallas_params(params)
    cout, cout_p = pp['cout'], pp['cout_p']

    # Global-average-pool branch (tiny, f32): its contribution through the 1x1
    # output conv is a per-batch bias vector, constant over space.
    xmean = jnp.mean(x_nchw, axis=(2, 3))                                  # (N, Cin)
    g = jnp.maximum(jnp.dot(xmean, pp['wg_f'].T,
                            precision=lax.Precision.HIGHEST) + pp['bg_f'], 0.0)
    bias_total = jnp.dot(g, pp['wout_g'],
                         precision=lax.Precision.HIGHEST) + pp['bo_f'][None, :]
    bias_total = jnp.pad(bias_total, ((0, 0), (0, cout_p - cout)))[:, None, :]

    x_nhwc = jnp.transpose(x_nchw, (0, 2, 3, 1)).astype(jnp.bfloat16)      # layout glue
    out_nhwc = aspp_pallas(x_nhwc, pp['w_br'], pp['b_br'], pp['wout_br'],
                           bias_total, pad=pad, tile_h=tile_h)
    return jnp.transpose(out_nhwc[..., :cout], (0, 3, 1, 2))


# ----------------------------------------------------------------------------
# Pure-JAX reference mirroring the PyTorch module (eval mode, f32).
# ----------------------------------------------------------------------------
def _bn_nchw(y, bn):
    inv = bn['gamma'] / jnp.sqrt(bn['var'] + BN_EPS)
    return ((y - bn['mean'][None, :, None, None]) * inv[None, :, None, None]
            + bn['beta'][None, :, None, None])


def aspp_reference(x, params):
    N, Cin, H, W = x.shape
    outs = []
    for br, d in zip(params['branches'], DILATIONS):
        y = lax.conv_general_dilated(
            x, br['w'], window_strides=(1, 1), padding=[(d, d), (d, d)],
            rhs_dilation=(d, d), dimension_numbers=('NCHW', 'OIHW', 'NCHW'),
            precision=lax.Precision.HIGHEST)
        y = y + br['b'][None, :, None, None]
        outs.append(jnp.maximum(_bn_nchw(y, br['bn']), 0.0))

    g = params['glob']
    xmean = jnp.mean(x, axis=(2, 3))
    gy = jnp.dot(xmean, g['w'].T, precision=lax.Precision.HIGHEST) + g['b']
    inv = g['bn']['gamma'] / jnp.sqrt(g['bn']['var'] + BN_EPS)
    gy = jnp.maximum((gy - g['bn']['mean']) * inv + g['bn']['beta'], 0.0)
    outs.append(jnp.broadcast_to(gy[:, :, None, None], (N, gy.shape[1], H, W)))

    cat = jnp.concatenate(outs, axis=1)
    o = params['out']
    out = jnp.einsum('nchw,oc->nohw', cat, o['w'],
                     precision=lax.Precision.HIGHEST) + o['b'][None, :, None, None]
    out = jnp.maximum(_bn_nchw(out, o['bn']), 0.0)
    # Dropout2d(0.1) is identity in eval mode.
    return out


# ----------------------------------------------------------------------------
if __name__ == "__main__":
    key = jax.random.PRNGKey(0)
    k_x, k_p = jax.random.split(key)

    N, Cin, Cout, H, W = 2, 8, 8, 16, 16
    x = jax.random.normal(k_x, (N, Cin, H, W), jnp.float32)
    params = init_params(k_p, Cin, Cout)

    out = aspp_forward(x, params, tile_h=8)      # grid = (2 batches, 2 row tiles)
    out = jax.block_until_ready(out)

    ref = aspp_reference(x, params)
    assert out.shape == (N, Cout, H, W), (out.shape, (N, Cout, H, W))
    # Tolerance sized for bf16 MXU operands on the two chained matmuls
    # (accumulation stays f32); the pure-JAX reference is full f32/HIGHEST.
    max_err = float(jnp.max(jnp.abs(out - ref)))
    assert jnp.allclose(out, ref, atol=6e-2, rtol=6e-2), \
        f"mismatch vs reference: {max_err}"

    print("KERNEL_OK")
</pallas_src>

<mosaic_0001>
module attributes {stable_mosaic.version = 11 : i64} {
  func.func @_aspp_kernel(%arg0: i32, %arg1: i32, %arg2: memref<1x16x16x8xbf16, #tpu.memory_space<vmem>>, %arg3: memref<4x3x24x128xbf16, #tpu.memory_space<vmem>>, %arg4: memref<4x1x128xf32, #tpu.memory_space<vmem>>, %arg5: memref<4x128x128xbf16, #tpu.memory_space<vmem>>, %arg6: memref<1x1x128xf32, #tpu.memory_space<vmem>>, %arg7: memref<1x8x16x128xf32, #tpu.memory_space<vmem>>, %arg8: memref<52x52x8xf32, #tpu.memory_space<vmem>>) attributes {dimension_semantics = [#tpu.dimension_semantics<parallel>, #tpu.dimension_semantics<arbitrary>], iteration_bounds = array<i64: 2, 2>, scalar_prefetch = 0 : i64, scratch_operands = 1 : i64, tpu.core_type = #tpu.core_type<tc>, window_params = [{transform_indices = @transform_0, window_bounds = array<i64: 1, 16, 16, 8>}, {pipeline_mode = #tpu.pipeline_mode<synchronous>, transform_indices = @transform_1, window_bounds = array<i64: 4, 3, 24, 128>}, {pipeline_mode = #tpu.pipeline_mode<synchronous>, transform_indices = @transform_2, window_bounds = array<i64: 4, 1, 128>}, {pipeline_mode = #tpu.pipeline_mode<synchronous>, transform_indices = @transform_3, window_bounds = array<i64: 4, 128, 128>}, {transform_indices = @transform_4, window_bounds = array<i64: 1, 1, 128>}, {transform_indices = @transform_5, window_bounds = array<i64: 1, 8, 16, 128>}]} {
    %c0_i32 = arith.constant 0 : i32
    %0 = arith.cmpi eq, %arg1, %c0_i32 : i32
    %1 = arith.extui %0 : i1 to i32
    %c0_i32_0 = arith.constant 0 : i32
    %2 = arith.cmpi ne, %1, %c0_i32_0 : i32
    scf.if %2 {
      %cst_181 = arith.constant 0.000000e+00 : f32
      %243 = vector.broadcast %cst_181 : f32 to vector<18x52x8xf32>
      %c0_182 = arith.constant 0 : index
      %c0_183 = arith.constant 0 : index
      %c0_184 = arith.constant 0 : index
      %244 = vector.load %arg8[%c0_182, %c0_183, %c0_184] : memref<52x52x8xf32, #tpu.memory_space<vmem>>, vector<18x52x8xf32>
      tpu.vector_store %arg8[%c0_182, %c0_183, %c0_184], %243 {strides = array<i32>} : memref<52x52x8xf32, #tpu.memory_space<vmem>>, vector<18x52x8xf32>,
      %cst_185 = arith.constant 0.000000e+00 : f32
      %245 = vector.broadcast %cst_185 : f32 to vector<18x52x8xf32>
      %c34 = arith.constant 34 : index
      %c0_186 = arith.constant 0 : index
      %c0_187 = arith.constant 0 : index
      %246 = vector.load %arg8[%c34, %c0_186, %c0_187] : memref<52x52x8xf32, #tpu.memory_space<vmem>>, vector<18x52x8xf32>
      tpu.vector_store %arg8[%c34, %c0_186, %c0_187], %245 {strides = array<i32>} : memref<52x52x8xf32, #tpu.memory_space<vmem>>, vector<18x52x8xf32>,
      %cst_188 = arith.constant 0.000000e+00 : f32
      %247 = vector.broadcast %cst_188 : f32 to vector<16x18x8xf32>
      %c18_189 = arith.constant 18 : index
      %c0_190 = arith.constant 0 : index
      %c0_191 = arith.constant 0 : index
      %248 = vector.load %arg8[%c18_189, %c0_190, %c0_191] : memref<52x52x8xf32, #tpu.memory_space<vmem>>, vector<16x18x8xf32>
      tpu.vector_store %arg8[%c18_189, %c0_190, %c0_191], %247 {strides = array<i32>} : memref<52x52x8xf32, #tpu.memory_space<vmem>>, vector<16x18x8xf32>,
      %cst_192 = arith.constant 0.000000e+00 : f32
      %249 = vector.broadcast %cst_192 : f32 to vector<16x18x8xf32>
      %c18_193 = arith.constant 18 : index
      %c34_194 = arith.constant 34 : index
      %c0_195 = arith.constant 0 : index
      %250 = vector.load %arg8[%c18_193, %c34_194, %c0_195] : memref<52x52x8xf32, #tpu.memory_space<vmem>>, vector<16x18x8xf32>
      tpu.vector_store %arg8[%c18_193, %c34_194, %c0_195], %249 {strides = array<i32>} : memref<52x52x8xf32, #tpu.memory_space<vmem>>, vector<16x18x8xf32>,
      %c0_196 = arith.constant 0 : index
      %c0_197 = arith.constant 0 : index
      %c0_198 = arith.constant 0 : index
      %c0_199 = arith.constant 0 : index
      %251 = vector.load %arg2[%c0_196, %c0_197, %c0_198, %c0_199] : memref<1x16x16x8xbf16, #tpu.memory_space<vmem>>, vector<1x16x16x8xbf16>
      %252 = vector.shape_cast %251 : vector<1x16x16x8xbf16> to vector<16x16x8xbf16>
      %253 = arith.extf %252 : vector<16x16x8xbf16> to vector<16x16x8xf32>
      %c18_200 = arith.constant 18 : index
      %c18_201 = arith.constant 18 : index
      %c0_202 = arith.constant 0 : index
      %254 = vector.load %arg8[%c18_200, %c18_201, %c0_202] : memref<52x52x8xf32, #tpu.memory_space<vmem>>, vector<16x16x8xf32>
      tpu.vector_store %arg8[%c18_200, %c18_201, %c0_202], %253 {strides = array<i32>} : memref<52x52x8xf32, #tpu.memory_space<vmem>>, vector<16x16x8xf32>,
    } else {
    }
    %c8_i32 = arith.constant 8 : i32
    %3 = arith.muli %arg1, %c8_i32 : i32
    %cst = arith.constant 0.000000e+00 : f32
    %4 = vector.broadcast %cst : f32 to vector<128x128xf32>
    %cst_1 = arith.constant 0.000000e+00 : f32
    %5 = vector.broadcast %cst_1 : f32 to vector<128x128xf32>
    %c18_i32 = arith.constant 18 : i32
    %6 = arith.addi %3, %c18_i32 : i32
    %c-1_i32 = arith.constant -1 : i32
    %7 = arith.addi %6, %c-1_i32 : i32
    %8 = arith.index_cast %7 : i32 to index
    %c17 = arith.constant 17 : index
    %c0 = arith.constant 0 : index
    %9 = vector.load %arg8[%8, %c17, %c0] : memref<52x52x8xf32, #tpu.memory_space<vmem>>, vector<8x16x8xf32>
    %10 = arith.index_cast %7 : i32 to index
    %c18 = arith.constant 18 : index
    %c0_2 = arith.constant 0 : index
    %11 = vector.load %arg8[%10, %c18, %c0_2] : memref<52x52x8xf32, #tpu.memory_space<vmem>>, vector<8x16x8xf32>
    %12 = arith.index_cast %7 : i32 to index
    %c19 = arith.constant 19 : index
    %c0_3 = arith.constant 0 : index
    %13 = vector.load %arg8[%12, %c19, %c0_3] : memref<52x52x8xf32, #tpu.memory_space<vmem>>, vector<8x16x8xf32>
    %14 = tpu.concatenate %9, %11, %13 in 2 : vector<8x16x8xf32>, vector<8x16x8xf32>, vector<8x16x8xf32> -> vector<8x16x24xf32>
    %15 = vector.shape_cast %14 : vector<8x16x24xf32> to vector<128x24xf32>
    %16 = arith.truncf %15 : vector<128x24xf32> to vector<128x24xbf16>
    %c0_4 = arith.constant 0 : index
    %c0_5 = arith.constant 0 : index
    %c0_6 = arith.constant 0 : index
    %c0_7 = arith.constant 0 : index
    %17 = vector.load %arg3[%c0_4, %c0_5, %c0_6, %c0_7] : memref<4x3x24x128xbf16, #tpu.memory_space<vmem>>, vector<1x1x24x128xbf16>
    %18 = vector.shape_cast %17 : vector<1x1x24x128xbf16> to vector<24x128xbf16>
    %cst_8 = arith.constant dense<0.000000e+00> : vector<128x128xf32>
    %19 = tpu.matmul %16, %18, %cst_8 {dimension_numbers = #tpu.dot_dimension_numbers<[1], [0], [0], [1], [0, 0, 1, 1], [], []>} : vector<128x24xbf16>, vector<24x128xbf16>, vector<128x128xf32> -> vector<128x128xf32>
    %20 = arith.addf %5, %19 : vector<128x128xf32>
    %c18_i32_9 = arith.constant 18 : i32
    %21 = arith.addi %3, %c18_i32_9 : i32
    %c0_i32_10 = arith.constant 0 : i32
    %22 = arith.addi %21, %c0_i32_10 : i32
    %23 = arith.index_cast %22 : i32 to index
    %c17_11 = arith.constant 17 : index
    %c0_12 = arith.constant 0 : index
    %24 = vector.load %arg8[%23, %c17_11, %c0_12] : memref<52x52x8xf32, #tpu.memory_space<vmem>>, vector<8x16x8xf32>
    %25 = arith.index_cast %22 : i32 to index
    %c18_13 = arith.constant 18 : index
    %c0_14 = arith.constant 0 : index
    %26 = vector.load %arg8[%25, %c18_13, %c0_14] : memref<52x52x8xf32, #tpu.memory_space<vmem>>, vector<8x16x8xf32>
    %27 = arith.index_cast %22 : i32 to index
    %c19_15 = arith.constant 19 : index
    %c0_16 = arith.constant 0 : index
    %28 = vector.load %arg8[%27, %c19_15, %c0_16] : memref<52x52x8xf32, #tpu.memory_space<vmem>>, vector<8x16x8xf32>
    %29 = tpu.concatenate %24, %26, %28 in 2 : vector<8x16x8xf32>, vector<8x16x8xf32>, vector<8x16x8xf32> -> vector<8x16x24xf32>
    %30 = vector.shape_cast %29 : vector<8x16x24xf32> to vector<128x24xf32>
    %31 = arith.truncf %30 : vector<128x24xf32> to vector<128x24xbf16>
    %c0_17 = arith.constant 0 : index
    %c1 = arith.constant 1 : index
    %c0_18 = arith.constant 0 : index
    %c0_19 = arith.constant 0 : index
    %32 = vector.load %arg3[%c0_17, %c1, %c0_18, %c0_19] : memref<4x3x24x128xbf16, #tpu.memory_space<vmem>>, vector<1x1x24x128xbf16>
    %33 = vector.shape_cast %32 : vector<1x1x24x128xbf16> to vector<24x128xbf16>
    %cst_20 = arith.constant dense<0.000000e+00> : vector<128x128xf32>
    %34 = tpu.matmul %31, %33, %cst_20 {dimension_numbers = #tpu.dot_dimension_numbers<[1], [0], [0], [1], [0, 0, 1, 1], [], []>} : vector<128x24xbf16>, vector<24x128xbf16>, vector<128x128xf32> -> vector<128x128xf32>
    %35 = arith.addf %20, %34 : vector<128x128xf32>
    %c18_i32_21 = arith.constant 18 : i32
    %36 = arith.addi %3, %c18_i32_21 : i32
    %c1_i32 = arith.constant 1 : i32
    %37 = arith.addi %36, %c1_i32 : i32
    %38 = arith.index_cast %37 : i32 to index
    %c17_22 = arith.constant 17 : index
    %c0_23 = arith.constant 0 : index
    %39 = vector.load %arg8[%38, %c17_22, %c0_23] : memref<52x52x8xf32, #tpu.memory_space<vmem>>, vector<8x16x8xf32>
    %40 = arith.index_cast %37 : i32 to index
    %c18_24 = arith.constant 18 : index
    %c0_25 = arith.constant 0 : index
    %41 = vector.load %arg8[%40, %c18_24, %c0_25] : memref<52x52x8xf32, #tpu.memory_space<vmem>>, vector<8x16x8xf32>
    %42 = arith.index_cast %37 : i32 to index
    %c19_26 = arith.constant 19 : index
    %c0_27 = arith.constant 0 : index
    %43 = vector.load %arg8[%42, %c19_26, %c0_27] : memref<52x52x8xf32, #tpu.memory_space<vmem>>, vector<8x16x8xf32>
    %44 = tpu.concatenate %39, %41, %43 in 2 : vector<8x16x8xf32>, vector<8x16x8xf32>, vector<8x16x8xf32> -> vector<8x16x24xf32>
    %45 = vector.shape_cast %44 : vector<8x16x24xf32> to vector<128x24xf32>
    %46 = arith.truncf %45 : vector<128x24xf32> to vector<128x24xbf16>
    %c0_28 = arith.constant 0 : index
    %c2 = arith.constant 2 : index
    %c0_29 = arith.constant 0 : index
    %c0_30 = arith.constant 0 : index
    %47 = vector.load %arg3[%c0_28, %c2, %c0_29, %c0_30] : memref<4x3x24x128xbf16, #tpu.memory_space<vmem>>, vector<1x1x24x128xbf16>
    %48 = vector.shape_cast %47 : vector<1x1x24x128xbf16> to vector<24x128xbf16>
    %cst_31 = arith.constant dense<0.000000e+00> : vector<128x128xf32>
    %49 = tpu.matmul %46, %48, %cst_31 {dimension_numbers = #tpu.dot_dimension_numbers<[1], [0], [0], [1], [0, 0, 1, 1], [], []>} : vector<128x24xbf16>, vector<24x128xbf16>, vector<128x128xf32> -> vector<128x128xf32>
    %50 = arith.addf %35, %49 : vector<128x128xf32>
    %c0_32 = arith.constant 0 : index
    %c0_33 = arith.constant 0 : index
    %c0_34 = arith.constant 0 : index
    %51 = vector.load %arg4[%c0_32, %c0_33, %c0_34] : memref<4x1x128xf32, #tpu.memory_space<vmem>>, vector<1x1x128xf32>
    %52 = vector.shape_cast %51 : vector<1x1x128xf32> to vector<1x128xf32>
    %53 = vector.broadcast %52 : vector<1x128xf32> to vector<128x128xf32>
    %54 = arith.addf %50, %53 : vector<128x128xf32>
    %cst_35 = arith.constant 0.000000e+00 : f32
    %55 = vector.broadcast %cst_35 : f32 to vector<128x128xf32>
    %56 = arith.maximumf %54, %55 : vector<128x128xf32>
    %57 = arith.truncf %56 : vector<128x128xf32> to vector<128x128xbf16>
    %c0_36 = arith.constant 0 : index
    %c0_37 = arith.constant 0 : index
    %c0_38 = arith.constant 0 : index
    %58 = vector.load %arg5[%c0_36, %c0_37, %c0_38] : memref<4x128x128xbf16, #tpu.memory_space<vmem>>, vector<1x128x128xbf16>
    %59 = vector.shape_cast %58 : vector<1x128x128xbf16> to vector<128x128xbf16>
    %cst_39 = arith.constant dense<0.000000e+00> : vector<128x128xf32>
    %60 = tpu.matmul %57, %59, %cst_39 {dimension_numbers = #tpu.dot_dimension_numbers<[1], [0], [0], [1], [0, 0, 1, 1], [], []>} : vector<128x128xbf16>, vector<128x128xbf16>, vector<128x128xf32> -> vector<128x128xf32>
    %61 = arith.addf %4, %60 : vector<128x128xf32>
    %cst_40 = arith.constant 0.000000e+00 : f32
    %62 = vector.broadcast %cst_40 : f32 to vector<128x128xf32>
    %c18_i32_41 = arith.constant 18 : i32
    %63 = arith.addi %3, %c18_i32_41 : i32
    %c-6_i32 = arith.constant -6 : i32
    %64 = arith.addi %63, %c-6_i32 : i32
    %65 = arith.index_cast %64 : i32 to index
    %c12 = arith.constant 12 : index
    %c0_42 = arith.constant 0 : index
    %66 = vector.load %arg8[%65, %c12, %c0_42] : memref<52x52x8xf32, #tpu.memory_space<vmem>>, vector<8x16x8xf32>
    %67 = arith.index_cast %64 : i32 to index
    %c18_43 = arith.constant 18 : index
    %c0_44 = arith.constant 0 : index
    %68 = vector.load %arg8[%67, %c18_43, %c0_44] : memref<52x52x8xf32, #tpu.memory_space<vmem>>, vector<8x16x8xf32>
    %69 = arith.index_cast %64 : i32 to index
    %c24 = arith.constant 24 : index
    %c0_45 = arith.constant 0 : index
    %70 = vector.load %arg8[%69, %c24, %c0_45] : memref<52x52x8xf32, #tpu.memory_space<vmem>>, vector<8x16x8xf32>
    %71 = tpu.concatenate %66, %68, %70 in 2 : vector<8x16x8xf32>, vector<8x16x8xf32>, vector<8x16x8xf32> -> vector<8x16x24xf32>
    %72 = vector.shape_cast %71 : vector<8x16x24xf32> to vector<128x24xf32>
    %73 = arith.truncf %72 : vector<128x24xf32> to vector<128x24xbf16>
    %c1_46 = arith.constant 1 : index
    %c0_47 = arith.constant 0 : index
    %c0_48 = arith.constant 0 : index
    %c0_49 = arith.constant 0 : index
    %74 = vector.load %arg3[%c1_46, %c0_47, %c0_48, %c0_49] : memref<4x3x24x128xbf16, #tpu.memory_space<vmem>>, vector<1x1x24x128xbf16>
    %75 = vector.shape_cast %74 : vector<1x1x24x128xbf16> to vector<24x128xbf16>
    %cst_50 = arith.constant dense<0.000000e+00> : vector<128x128xf32>
    %76 = tpu.matmul %73, %75, %cst_50 {dimension_numbers = #tpu.dot_dimension_numbers<[1], [0], [0], [1], [0, 0, 1, 1], [], []>} : vector<128x24xbf16>, vector<24x128xbf16>, vector<128x128xf32> -> vector<128x128xf32>
    %77 = arith.addf %62, %76 : vector<128x128xf32>
    %c18_i32_51 = arith.constant 18 : i32
    %78 = arith.addi %3, %c18_i32_51 : i32
    %c0_i32_52 = arith.constant 0 : i32
    %79 = arith.addi %78, %c0_i32_52 : i32
    %80 = arith.index_cast %79 : i32 to index
    %c12_53 = arith.constant 12 : index
    %c0_54 = arith.constant 0 : index
    %81 = vector.load %arg8[%80, %c12_53, %c0_54] : memref<52x52x8xf32, #tpu.memory_space<vmem>>, vector<8x16x8xf32>
    %82 = arith.index_cast %79 : i32 to index
    %c18_55 = arith.constant 18 : index
    %c0_56 = arith.constant 0 : index
    %83 = vector.load %arg8[%82, %c18_55, %c0_56] : memref<52x52x8xf32, #tpu.memory_space<vmem>>, vector<8x16x8xf32>
    %84 = arith.index_cast %79 : i32 to index
    %c24_57 = arith.constant 24 : index
    %c0_58 = arith.constant 0 : index
    %85 = vector.load %arg8[%84, %c24_57, %c0_58] : memref<52x52x8xf32, #tpu.memory_space<vmem>>, vector<8x16x8xf32>
    %86 = tpu.concatenate %81, %83, %85 in 2 : vector<8x16x8xf32>, vector<8x16x8xf32>, vector<8x16x8xf32> -> vector<8x16x24xf32>
    %87 = vector.shape_cast %86 : vector<8x16x24xf32> to vector<128x24xf32>
    %88 = arith.truncf %87 : vector<128x24xf32> to vector<128x24xbf16>
    %c1_59 = arith.constant 1 : index
    %c1_60 = arith.constant 1 : index
    %c0_61 = arith.constant 0 : index
    %c0_62 = arith.constant 0 : index
    %89 = vector.load %arg3[%c1_59, %c1_60, %c0_61, %c0_62] : memref<4x3x24x128xbf16, #tpu.memory_space<vmem>>, vector<1x1x24x128xbf16>
    %90 = vector.shape_cast %89 : vector<1x1x24x128xbf16> to vector<24x128xbf16>
    %cst_63 = arith.constant dense<0.000000e+00> : vector<128x128xf32>
    %91 = tpu.matmul %88, %90, %cst_63 {dimension_numbers = #tpu.dot_dimension_numbers<[1], [0], [0], [1], [0, 0, 1, 1], [], []>} : vector<128x24xbf16>, vector<24x128xbf16>, vector<128x128xf32> -> vector<128x128xf32>
    %92 = arith.addf %77, %91 : vector<128x128xf32>
    %c18_i32_64 = arith.constant 18 : i32
    %93 = arith.addi %3, %c18_i32_64 : i32
    %c6_i32 = arith.constant 6 : i32
    %94 = arith.addi %93, %c6_i32 : i32
    %95 = arith.index_cast %94 : i32 to index
    %c12_65 = arith.constant 12 : index
    %c0_66 = arith.constant 0 : index
    %96 = vector.load %arg8[%95, %c12_65, %c0_66] : memref<52x52x8xf32, #tpu.memory_space<vmem>>, vector<8x16x8xf32>
    %97 = arith.index_cast %94 : i32 to index
    %c18_67 = arith.constant 18 : index
    %c0_68 = arith.constant 0 : index
    %98 = vector.load %arg8[%97, %c18_67, %c0_68] : memref<52x52x8xf32, #tpu.memory_space<vmem>>, vector<8x16x8xf32>
    %99 = arith.index_cast %94 : i32 to index
    %c24_69 = arith.constant 24 : index
    %c0_70 = arith.constant 0 : index
    %100 = vector.load %arg8[%99, %c24_69, %c0_70] : memref<52x52x8xf32, #tpu.memory_space<vmem>>, vector<8x16x8xf32>
    %101 = tpu.concatenate %96, %98, %100 in 2 : vector<8x16x8xf32>, vector<8x16x8xf32>, vector<8x16x8xf32> -> vector<8x16x24xf32>
    %102 = vector.shape_cast %101 : vector<8x16x24xf32> to vector<128x24xf32>
    %103 = arith.truncf %102 : vector<128x24xf32> to vector<128x24xbf16>
    %c1_71 = arith.constant 1 : index
    %c2_72 = arith.constant 2 : index
    %c0_73 = arith.constant 0 : index
    %c0_74 = arith.constant 0 : index
    %104 = vector.load %arg3[%c1_71, %c2_72, %c0_73, %c0_74] : memref<4x3x24x128xbf16, #tpu.memory_space<vmem>>, vector<1x1x24x128xbf16>
    %105 = vector.shape_cast %104 : vector<1x1x24x128xbf16> to vector<24x128xbf16>
    %cst_75 = arith.constant dense<0.000000e+00> : vector<128x128xf32>
    %106 = tpu.matmul %103, %105, %cst_75 {dimension_numbers = #tpu.dot_dimension_numbers<[1], [0], [0], [1], [0, 0, 1, 1], [], []>} : vector<128x24xbf16>, vector<24x128xbf16>, vector<128x128xf32> -> vector<128x128xf32>
    %107 = arith.addf %92, %106 : vector<128x128xf32>
    %c1_76 = arith.constant 1 : index
    %c0_77 = arith.constant 0 : index
    %c0_78 = arith.constant 0 : index
    %108 = vector.load %arg4[%c1_76, %c0_77, %c0_78] : memref<4x1x128xf32, #tpu.memory_space<vmem>>, vector<1x1x128xf32>
    %109 = vector.shape_cast %108 : vector<1x1x128xf32> to vector<1x128xf32>
    %110 = vector.broadcast %109 : vector<1x128xf32> to vector<128x128xf32>
    %111 = arith.addf %107, %110 : vector<128x128xf32>
    %cst_79 = arith.constant 0.000000e+00 : f32
    %112 = vector.broadcast %cst_79 : f32 to vector<128x128xf32>
    %113 = arith.maximumf %111, %112 : vector<128x128xf32>
    %114 = arith.truncf %113 : vector<128x128xf32> to vector<128x128xbf16>
    %c1_80 = arith.constant 1 : index
    %c0_81 = arith.constant 0 : index
    %c0_82 = arith.constant 0 : index
    %115 = vector.load %arg5[%c1_80, %c0_81, %c0_82] : memref<4x128x128xbf16, #tpu.memory_space<vmem>>, vector<1x128x128xbf16>
    %116 = vector.shape_cast %115 : vector<1x128x128xbf16> to vector<128x128xbf16>
    %cst_83 = arith.constant dense<0.000000e+00> : vector<128x128xf32>
    %117 = tpu.matmul %114, %116, %cst_83 {dimension_numbers = #tpu.dot_dimension_numbers<[1], [0], [0], [1], [0, 0, 1, 1], [], []>} : vector<128x128xbf16>, vector<128x128xbf16>, vector<128x128xf32> -> vector<128x128xf32>
    %118 = arith.addf %61, %117 : vector<128x128xf32>
    %cst_84 = arith.constant 0.000000e+00 : f32
    %119 = vector.broadcast %cst_84 : f32 to vector<128x128xf32>
    %c18_i32_85 = arith.constant 18 : i32
    %120 = arith.addi %3, %c18_i32_85 : i32
    %c-12_i32 = arith.constant -12 : i32
    %121 = arith.addi %120, %c-12_i32 : i32
    %122 = arith.index_cast %121 : i32 to index
    %c6 = arith.constant 6 : index
    %c0_86 = arith.constant 0 : index
    %123 = vector.load %arg8[%122, %c6, %c0_86] : memref<52x52x8xf32, #tpu.memory_space<vmem>>, vector<8x16x8xf32>
    %124 = arith.index_cast %121 : i32 to index
    %c18_87 = arith.constant 18 : index
    %c0_88 = arith.constant 0 : index
    %125 = vector.load %arg8[%124, %c18_87, %c0_88] : memref<52x52x8xf32, #tpu.memory_space<vmem>>, vector<8x16x8xf32>
    %126 = arith.index_cast %121 : i32 to index
    %c30 = arith.constant 30 : index
    %c0_89 = arith.constant 0 : index
    %127 = vector.load %arg8[%126, %c30, %c0_89] : memref<52x52x8xf32, #tpu.memory_space<vmem>>, vector<8x16x8xf32>
    %128 = tpu.concatenate %123, %125, %127 in 2 : vector<8x16x8xf32>, vector<8x16x8xf32>, vector<8x16x8xf32> -> vector<8x16x24xf32>
    %129 = vector.shape_cast %128 : vector<8x16x24xf32> to vector<128x24xf32>
    %130 = arith.truncf %129 : vector<128x24xf32> to vector<128x24xbf16>
    %c2_90 = arith.constant 2 : index
    %c0_91 = arith.constant 0 : index
    %c0_92 = arith.constant 0 : index
    %c0_93 = arith.constant 0 : index
    %131 = vector.load %arg3[%c2_90, %c0_91, %c0_92, %c0_93] : memref<4x3x24x128xbf16, #tpu.memory_space<vmem>>, vector<1x1x24x128xbf16>
    %132 = vector.shape_cast %131 : vector<1x1x24x128xbf16> to vector<24x128xbf16>
    %cst_94 = arith.constant dense<0.000000e+00> : vector<128x128xf32>
    %133 = tpu.matmul %130, %132, %cst_94 {dimension_numbers = #tpu.dot_dimension_numbers<[1], [0], [0], [1], [0, 0, 1, 1], [], []>} : vector<128x24xbf16>, vector<24x128xbf16>, vector<128x128xf32> -> vector<128x128xf32>
    %134 = arith.addf %119, %133 : vector<128x128xf32>
    %c18_i32_95 = arith.constant 18 : i32
    %135 = arith.addi %3, %c18_i32_95 : i32
    %c0_i32_96 = arith.constant 0 : i32
    %136 = arith.addi %135, %c0_i32_96 : i32
    %137 = arith.index_cast %136 : i32 to index
    %c6_97 = arith.constant 6 : index
    %c0_98 = arith.constant 0 : index
    %138 = vector.load %arg8[%137, %c6_97, %c0_98] : memref<52x52x8xf32, #tpu.memory_space<vmem>>, vector<8x16x8xf32>
    %139 = arith.index_cast %136 : i32 to index
    %c18_99 = arith.constant 18 : index
    %c0_100 = arith.constant 0 : index
    %140 = vector.load %arg8[%139, %c18_99, %c0_100] : memref<52x52x8xf32, #tpu.memory_space<vmem>>, vector<8x16x8xf32>
    %141 = arith.index_cast %136 : i32 to index
    %c30_101 = arith.constant 30 : index
    %c0_102 = arith.constant 0 : index
    %142 = vector.load %arg8[%141, %c30_101, %c0_102] : memref<52x52x8xf32, #tpu.memory_space<vmem>>, vector<8x16x8xf32>
    %143 = tpu.concatenate %138, %140, %142 in 2 : vector<8x16x8xf32>, vector<8x16x8xf32>, vector<8x16x8xf32> -> vector<8x16x24xf32>
    %144 = vector.shape_cast %143 : vector<8x16x24xf32> to vector<128x24xf32>
    %145 = arith.truncf %144 : vector<128x24xf32> to vector<128x24xbf16>
    %c2_103 = arith.constant 2 : index
    %c1_104 = arith.constant 1 : index
    %c0_105 = arith.constant 0 : index
    %c0_106 = arith.constant 0 : index
    %146 = vector.load %arg3[%c2_103, %c1_104, %c0_105, %c0_106] : memref<4x3x24x128xbf16, #tpu.memory_space<vmem>>, vector<1x1x24x128xbf16>
    %147 = vector.shape_cast %146 : vector<1x1x24x128xbf16> to vector<24x128xbf16>
    %cst_107 = arith.constant dense<0.000000e+00> : vector<128x128xf32>
    %148 = tpu.matmul %145, %147, %cst_107 {dimension_numbers = #tpu.dot_dimension_numbers<[1], [0], [0], [1], [0, 0, 1, 1], [], []>} : vector<128x24xbf16>, vector<24x128xbf16>, vector<128x128xf32> -> vector<128x128xf32>
    %149 = arith.addf %134, %148 : vector<128x128xf32>
    %c18_i32_108 = arith.constant 18 : i32
    %150 = arith.addi %3, %c18_i32_108 : i32
    %c12_i32 = arith.constant 12 : i32
    %151 = arith.addi %150, %c12_i32 : i32
    %152 = arith.index_cast %151 : i32 to index
    %c6_109 = arith.constant 6 : index
    %c0_110 = arith.constant 0 : index
    %153 = vector.load %arg8[%152, %c6_109, %c0_110] : memref<52x52x8xf32, #tpu.memory_space<vmem>>, vector<8x16x8xf32>
    %154 = arith.index_cast %151 : i32 to index
    %c18_111 = arith.constant 18 : index
    %c0_112 = arith.constant 0 : index
    %155 = vector.load %arg8[%154, %c18_111, %c0_112] : memref<52x52x8xf32, #tpu.memory_space<vmem>>, vector<8x16x8xf32>
    %156 = arith.index_cast %151 : i32 to index
    %c30_113 = arith.constant 30 : index
    %c0_114 = arith.constant 0 : index
    %157 = vector.load %arg8[%156, %c30_113, %c0_114] : memref<52x52x8xf32, #tpu.memory_space<vmem>>, vector<8x16x8xf32>
    %158 = tpu.concatenate %153, %155, %157 in 2 : vector<8x16x8xf32>, vector<8x16x8xf32>, vector<8x16x8xf32> -> vector<8x16x24xf32>
    %159 = vector.shape_cast %158 : vector<8x16x24xf32> to vector<128x24xf32>
    %160 = arith.truncf %159 : vector<128x24xf32> to vector<128x24xbf16>
    %c2_115 = arith.constant 2 : index
    %c2_116 = arith.constant 2 : index
    %c0_117 = arith.constant 0 : index
    %c0_118 = arith.constant 0 : index
    %161 = vector.load %arg3[%c2_115, %c2_116, %c0_117, %c0_118] : memref<4x3x24x128xbf16, #tpu.memory_space<vmem>>, vector<1x1x24x128xbf16>
    %162 = vector.shape_cast %161 : vector<1x1x24x128xbf16> to vector<24x128xbf16>
    %cst_119 = arith.constant dense<0.000000e+00> : vector<128x128xf32>
    %163 = tpu.matmul %160, %162, %cst_119 {dimension_numbers = #tpu.dot_dimension_numbers<[1], [0], [0], [1], [0, 0, 1, 1], [], []>} : vector<128x24xbf16>, vector<24x128xbf16>, vector<128x128xf32> -> vector<128x128xf32>
    %164 = arith.addf %149, %163 : vector<128x128xf32>
    %c2_120 = arith.constant 2 : index
    %c0_121 = arith.constant 0 : index
    %c0_122 = arith.constant 0 : index
    %165 = vector.load %arg4[%c2_120, %c0_121, %c0_122] : memref<4x1x128xf32, #tpu.memory_space<vmem>>, vector<1x1x128xf32>
    %166 = vector.shape_cast %165 : vector<1x1x128xf32> to vector<1x128xf32>
    %167 = vector.broadcast %166 : vector<1x128xf32> to vector<128x128xf32>
    %168 = arith.addf %164, %167 : vector<128x128xf32>
    %cst_123 = arith.constant 0.000000e+00 : f32
    %169 = vector.broadcast %cst_123 : f32 to vector<128x128xf32>
    %170 = arith.maximumf %168, %169 : vector<128x128xf32>
    %171 = arith.truncf %170 : vector<128x128xf32> to vector<128x128xbf16>
    %c2_124 = arith.constant 2 : index
    %c0_125 = arith.constant 0 : index
    %c0_126 = arith.constant 0 : index
    %172 = vector.load %arg5[%c2_124, %c0_125, %c0_126] : memref<4x128x128xbf16, #tpu.memory_space<vmem>>, vector<1x128x128xbf16>
    %173 = vector.shape_cast %172 : vector<1x128x128xbf16> to vector<128x128xbf16>
    %cst_127 = arith.constant dense<0.000000e+00> : vector<128x128xf32>
    %174 = tpu.matmul %171, %173, %cst_127 {dimension_numbers = #tpu.dot_dimension_numbers<[1], [0], [0], [1], [0, 0, 1, 1], [], []>} : vector<128x128xbf16>, vector<128x128xbf16>, vector<128x128xf32> -> vector<128x128xf32>
    %175 = arith.addf %118, %174 : vector<128x128xf32>
    %cst_128 = arith.constant 0.000000e+00 : f32
    %176 = vector.broadcast %cst_128 : f32 to vector<128x128xf32>
    %c18_i32_129 = arith.constant 18 : i32
    %177 = arith.addi %3, %c18_i32_129 : i32
    %c-18_i32 = arith.constant -18 : i32
    %178 = arith.addi %177, %c-18_i32 : i32
    %179 = arith.index_cast %178 : i32 to index
    %c0_130 = arith.constant 0 : index
    %c0_131 = arith.constant 0 : index
    %180 = vector.load %arg8[%179, %c0_130, %c0_131] : memref<52x52x8xf32, #tpu.memory_space<vmem>>, vector<8x16x8xf32>
    %181 = arith.index_cast %178 : i32 to index
    %c18_132 = arith.constant 18 : index
    %c0_133 = arith.constant 0 : index
    %182 = vector.load %arg8[%181, %c18_132, %c0_133] : memref<52x52x8xf32, #tpu.memory_space<vmem>>, vector<8x16x8xf32>
    %183 = arith.index_cast %178 : i32 to index
    %c36 = arith.constant 36 : index
    %c0_134 = arith.constant 0 : index
    %184 = vector.load %arg8[%183, %c36, %c0_134] : memref<52x52x8xf32, #tpu.memory_space<vmem>>, vector<8x16x8xf32>
    %185 = tpu.concatenate %180, %182, %184 in 2 : vector<8x16x8xf32>, vector<8x16x8xf32>, vector<8x16x8xf32> -> vector<8x16x24xf32>
    %186 = vector.shape_cast %185 : vector<8x16x24xf32> to vector<128x24xf32>
    %187 = arith.truncf %186 : vector<128x24xf32> to vector<128x24xbf16>
    %c3 = arith.constant 3 : index
    %c0_135 = arith.constant 0 : index
    %c0_136 = arith.constant 0 : index
    %c0_137 = arith.constant 0 : index
    %188 = vector.load %arg3[%c3, %c0_135, %c0_136, %c0_137] : memref<4x3x24x128xbf16, #tpu.memory_space<vmem>>, vector<1x1x24x128xbf16>
    %189 = vector.shape_cast %188 : vector<1x1x24x128xbf16> to vector<24x128xbf16>
    %cst_138 = arith.constant dense<0.000000e+00> : vector<128x128xf32>
    %190 = tpu.matmul %187, %189, %cst_138 {dimension_numbers = #tpu.dot_dimension_numbers<[1], [0], [0], [1], [0, 0, 1, 1], [], []>} : vector<128x24xbf16>, vector<24x128xbf16>, vector<128x128xf32> -> vector<128x128xf32>
    %191 = arith.addf %176, %190 : vector<128x128xf32>
    %c18_i32_139 = arith.constant 18 : i32
    %192 = arith.addi %3, %c18_i32_139 : i32
    %c0_i32_140 = arith.constant 0 : i32
    %193 = arith.addi %192, %c0_i32_140 : i32
    %194 = arith.index_cast %193 : i32 to index
    %c0_141 = arith.constant 0 : index
    %c0_142 = arith.constant 0 : index
    %195 = vector.load %arg8[%194, %c0_141, %c0_142] : memref<52x52x8xf32, #tpu.memory_space<vmem>>, vector<8x16x8xf32>
    %196 = arith.index_cast %193 : i32 to index
    %c18_143 = arith.constant 18 : index
    %c0_144 = arith.constant 0 : index
    %197 = vector.load %arg8[%196, %c18_143, %c0_144] : memref<52x52x8xf32, #tpu.memory_space<vmem>>, vector<8x16x8xf32>
    %198 = arith.index_cast %193 : i32 to index
    %c36_145 = arith.constant 36 : index
    %c0_146 = arith.constant 0 : index
    %199 = vector.load %arg8[%198, %c36_145, %c0_146] : memref<52x52x8xf32, #tpu.memory_space<vmem>>, vector<8x16x8xf32>
    %200 = tpu.concatenate %195, %197, %199 in 2 : vector<8x16x8xf32>, vector<8x16x8xf32>, vector<8x16x8xf32> -> vector<8x16x24xf32>
    %201 = vector.shape_cast %200 : vector<8x16x24xf32> to vector<128x24xf32>
    %202 = arith.truncf %201 : vector<128x24xf32> to vector<128x24xbf16>
    %c3_147 = arith.constant 3 : index
    %c1_148 = arith.constant 1 : index
    %c0_149 = arith.constant 0 : index
    %c0_150 = arith.constant 0 : index
    %203 = vector.load %arg3[%c3_147, %c1_148, %c0_149, %c0_150] : memref<4x3x24x128xbf16, #tpu.memory_space<vmem>>, vector<1x1x24x128xbf16>
    %204 = vector.shape_cast %203 : vector<1x1x24x128xbf16> to vector<24x128xbf16>
    %cst_151 = arith.constant dense<0.000000e+00> : vector<128x128xf32>
    %205 = tpu.matmul %202, %204, %cst_151 {dimension_numbers = #tpu.dot_dimension_numbers<[1], [0], [0], [1], [0, 0, 1, 1], [], []>} : vector<128x24xbf16>, vector<24x128xbf16>, vector<128x128xf32> -> vector<128x128xf32>
    %206 = arith.addf %191, %205 : vector<128x128xf32>
    %c18_i32_152 = arith.constant 18 : i32
    %207 = arith.addi %3, %c18_i32_152 : i32
    %c18_i32_153 = arith.constant 18 : i32
    %208 = arith.addi %207, %c18_i32_153 : i32
    %209 = arith.index_cast %208 : i32 to index
    %c0_154 = arith.constant 0 : index
    %c0_155 = arith.constant 0 : index
    %210 = vector.load %arg8[%209, %c0_154, %c0_155] : memref<52x52x8xf32, #tpu.memory_space<vmem>>, vector<8x16x8xf32>
    %211 = arith.index_cast %208 : i32 to index
    %c18_156 = arith.constant 18 : index
    %c0_157 = arith.constant 0 : index
    %212 = vector.load %arg8[%211, %c18_156, %c0_157] : memref<52x52x8xf32, #tpu.memory_space<vmem>>, vector<8x16x8xf32>
    %213 = arith.index_cast %208 : i32 to index
    %c36_158 = arith.constant 36 : index
    %c0_159 = arith.constant 0 : index
    %214 = vector.load %arg8[%213, %c36_158, %c0_159] : memref<52x52x8xf32, #tpu.memory_space<vmem>>, vector<8x16x8xf32>
    %215 = tpu.concatenate %210, %212, %214 in 2 : vector<8x16x8xf32>, vector<8x16x8xf32>, vector<8x16x8xf32> -> vector<8x16x24xf32>
    %216 = vector.shape_cast %215 : vector<8x16x24xf32> to vector<128x24xf32>
    %217 = arith.truncf %216 : vector<128x24xf32> to vector<128x24xbf16>
    %c3_160 = arith.constant 3 : index
    %c2_161 = arith.constant 2 : index
    %c0_162 = arith.constant 0 : index
    %c0_163 = arith.constant 0 : index
    %218 = vector.load %arg3[%c3_160, %c2_161, %c0_162, %c0_163] : memref<4x3x24x128xbf16, #tpu.memory_space<vmem>>, vector<1x1x24x128xbf16>
    %219 = vector.shape_cast %218 : vector<1x1x24x128xbf16> to vector<24x128xbf16>
    %cst_164 = arith.constant dense<0.000000e+00> : vector<128x128xf32>
    %220 = tpu.matmul %217, %219, %cst_164 {dimension_numbers = #tpu.dot_dimension_numbers<[1], [0], [0], [1], [0, 0, 1, 1], [], []>} : vector<128x24xbf16>, vector<24x128xbf16>, vector<128x128xf32> -> vector<128x128xf32>
    %221 = arith.addf %206, %220 : vector<128x128xf32>
    %c3_165 = arith.constant 3 : index
    %c0_166 = arith.constant 0 : index
    %c0_167 = arith.constant 0 : index
    %222 = vector.load %arg4[%c3_165, %c0_166, %c0_167] : memref<4x1x128xf32, #tpu.memory_space<vmem>>, vector<1x1x128xf32>
    %223 = vector.shape_cast %222 : vector<1x1x128xf32> to vector<1x128xf32>
    %224 = vector.broadcast %223 : vector<1x128xf32> to vector<128x128xf32>
    %225 = arith.addf %221, %224 : vector<128x128xf32>
    %cst_168 = arith.constant 0.000000e+00 : f32
    %226 = vector.broadcast %cst_168 : f32 to vector<128x128xf32>
    %227 = arith.maximumf %225, %226 : vector<128x128xf32>
    %228 = arith.truncf %227 : vector<128x128xf32> to vector<128x128xbf16>
    %c3_169 = arith.constant 3 : index
    %c0_170 = arith.constant 0 : index
    %c0_171 = arith.constant 0 : index
    %229 = vector.load %arg5[%c3_169, %c0_170, %c0_171] : memref<4x128x128xbf16, #tpu.memory_space<vmem>>, vector<1x128x128xbf16>
    %230 = vector.shape_cast %229 : vector<1x128x128xbf16> to vector<128x128xbf16>
    %cst_172 = arith.constant dense<0.000000e+00> : vector<128x128xf32>
    %231 = tpu.matmul %228, %230, %cst_172 {dimension_numbers = #tpu.dot_dimension_numbers<[1], [0], [0], [1], [0, 0, 1, 1], [], []>} : vector<128x128xbf16>, vector<128x128xbf16>, vector<128x128xf32> -> vector<128x128xf32>
    %232 = arith.addf %175, %231 : vector<128x128xf32>
    %c0_173 = arith.constant 0 : index
    %c0_174 = arith.constant 0 : index
    %c0_175 = arith.constant 0 : index
    %233 = vector.load %arg6[%c0_173, %c0_174, %c0_175] : memref<1x1x128xf32, #tpu.memory_space<vmem>>, vector<1x1x128xf32>
    %234 = vector.shape_cast %233 : vector<1x1x128xf32> to vector<1x128xf32>
    %235 = vector.broadcast %234 : vector<1x128xf32> to vector<128x128xf32>
    %236 = arith.addf %232, %235 : vector<128x128xf32>
    %cst_176 = arith.constant 0.000000e+00 : f32
    %237 = vector.broadcast %cst_176 : f32 to vector<128x128xf32>
    %238 = arith.maximumf %236, %237 : vector<128x128xf32>
    %239 = vector.shape_cast %238 : vector<128x128xf32> to vector<8x16x128xf32>
    %c0_177 = arith.constant 0 : index
    %c0_178 = arith.constant 0 : index
    %c0_179 = arith.constant 0 : index
    %c0_180 = arith.constant 0 : index
    %240 = vector.load %arg7[%c0_177, %c0_178, %c0_179, %c0_180] : memref<1x8x16x128xf32, #tpu.memory_space<vmem>>, vector<1x8x16x128xf32>
    %241 = vector.shape_cast %240 : vector<1x8x16x128xf32> to vector<8x16x128xf32>
    %242 = vector.shape_cast %239 : vector<8x16x128xf32> to vector<1x8x16x128xf32>
    tpu.vector_store %arg7[%c0_177, %c0_178, %c0_179, %c0_180], %242 {strides = array<i32>} : memref<1x8x16x128xf32, #tpu.memory_space<vmem>>, vector<1x8x16x128xf32>,
    return
  }
  func.func @transform_0(%arg0: i32, %arg1: i32) -> (i32, i32, i32, i32) {
    %c0_i32 = arith.constant 0 : i32
    %c0_i32_0 = arith.constant 0 : i32
    %c0_i32_1 = arith.constant 0 : i32
    %c0_i32_2 = arith.constant 0 : i32
    return %arg0, %c0_i32, %c0_i32_0, %c0_i32_1 : i32, i32, i32, i32
  }
  func.func @transform_1(%arg0: i32, %arg1: i32) -> (i32, i32, i32, i32) {
    %c0_i32 = arith.constant 0 : i32
    %c0_i32_0 = arith.constant 0 : i32
    %c0_i32_1 = arith.constant 0 : i32
    %c0_i32_2 = arith.constant 0 : i32
    %c0_i32_3 = arith.constant 0 : i32
    return %c0_i32, %c0_i32_0, %c0_i32_1, %c0_i32_2 : i32, i32, i32, i32
  }
  func.func @transform_2(%arg0: i32, %arg1: i32) -> (i32, i32, i32) {
    %c0_i32 = arith.constant 0 : i32
    %c0_i32_0 = arith.constant 0 : i32
    %c0_i32_1 = arith.constant 0 : i32
    %c0_i32_2 = arith.constant 0 : i32
    return %c0_i32, %c0_i32_0, %c0_i32_1 : i32, i32, i32
  }
  func.func @transform_3(%arg0: i32, %arg1: i32) -> (i32, i32, i32) {
    %c0_i32 = arith.constant 0 : i32
    %c0_i32_0 = arith.constant 0 : i32
    %c0_i32_1 = arith.constant 0 : i32
    %c0_i32_2 = arith.constant 0 : i32
    return %c0_i32, %c0_i32_0, %c0_i32_1 : i32, i32, i32
  }
  func.func @transform_4(%arg0: i32, %arg1: i32) -> (i32, i32, i32) {
    %c0_i32 = arith.constant 0 : i32
    %c0_i32_0 = arith.constant 0 : i32
    %c0_i32_1 = arith.constant 0 : i32
    return %arg0, %c0_i32, %c0_i32_0 : i32, i32, i32
  }
  func.func @transform_5(%arg0: i32, %arg1: i32) -> (i32, i32, i32, i32) {
    %c0_i32 = arith.constant 0 : i32
    %c0_i32_0 = arith.constant 0 : i32
    %c0_i32_1 = arith.constant 0 : i32
    return %arg0, %arg1, %c0_i32, %c0_i32_0 : i32, i32, i32, i32
  }
}

</mosaic_0001>

<llo_original>
// kernel: tpu_custom_call.1
$region0: #{tpu_custom_call.1}
  #allocation0 [shape = 'u32[]', space=smem, size = 0x4, offset = 0x4, fixed_abs, tag = 'smem constant byte address 0x4 - core index']
  #allocation1 [shape = 'u32[72,128]{1,0:T(1,128)}', space=vmem, size = 0x9000, scoped, tag = 'internal scratch']
  #allocation2 [shape = 'f32[52,52,8]{2,1,0:T(8,128)}', space=vmem, size = 0x16c000, scoped, tag = 'scratch operand']
  %s0 = inlined_call_operand.vmem [shape: bf16[2,16,16,8], index: 0, kind: input, shape index: {}]
  %s1 = inlined_call_operand.hbm [shape: bf16[4,3,24,128], index: 1, kind: input, shape index: {}]
  %s2 = inlined_call_operand.vmem [shape: f32[4,1,128], index: 2, kind: input, shape index: {}]
  %s3 = inlined_call_operand.vmem [shape: bf16[4,128,128], index: 3, kind: input, shape index: {}]
  %s4 = inlined_call_operand.vmem [shape: f32[2,1,128], index: 4, kind: input, shape index: {}]
  %s5 = inlined_call_operand.hbm [shape: f32[2,16,16,128], index: 5, kind: output, shape index: {}]
  %s6 = sld [smem:[#allocation0]]
  $region61: #{tpu_custom_call.1} parent=0
    _
  %s8 = ssub.s32 1, %s6
  %s9 = scalar_select 0, %s8, %s6
  $region1: #{tpu_custom_call.1} parent=0
    #allocation3 [shape = 'u8[73728]{0}', space=vmem, size = 0x12000, scoped, tag = 'input window, operand 1, single buffered']
    #allocation4 [shape = 's32[2]{0}', space=sflag, size = 0x8, scoped, tag = 'scoped memory for tpu_custom_call.1']
    #allocation5 [shape = 's32[2]{0}', space=sflag, size = 0x8, scoped, tag = 'scoped memory for tpu_custom_call.1']
    #allocation6 [shape = 'u8[131072]{0}', space=vmem, size = 0x20000, scoped, tag = 'output window, operand 0']
    %10 = vsyncpa [#allocation4], 0
    %11 = vsyncpa [#allocation5], 0
    %s12 = scalar_lea.sflag [#allocation5], 1
    %13 = vsyncpa %s12, 0
    loop: start=0, step=1, limit=6
    $region2: #{tpu_custom_call.1} parent=1 // loop_pre_header
      _
    $region3: #{tpu_custom_call.1} parent=1 // loop_header
      %s15 = sphi 0, %s19
      %p16 = scmp.ge.s32.totalorder %s15, 6
      %s22 = sphi 0, %s34
      %s23 = sphi 0, %s30
      %s24 = sphi 0, %s22
      %s25 = sphi 0, %s23
      %s26 = sphi 0, %s24
      %s27 = sphi 0, %s25
      %s37 = sphi 0, %s39
      %s40 = sphi 0, %s37
      %s41 = sphi 0, %s40
      %s57 = sphi 0, %s41
      %s61 = sphi 0, %s61
      %s63 = sphi 0, %s61
      %s64 = sphi 0, %s63
      %s78 = sphi 0, %s64
      %s82 = sphi 0, %s82
      %s84 = sphi 0, %s82
      %s85 = sphi 0, %s84
      %s99 = sphi 0, %s85
      %s103 = sphi 0, %s103
      %s105 = sphi 0, %s103
      %s106 = sphi 0, %s105
      %s120 = sphi 0, %s106
      %s126 = sphi 0, %s128
      %s129 = sphi 0, %s126
      %s130 = sphi 0, %s129
      %s146 = sphi 0, %s130
      %s154 = sphi 0, %s156
      %s157 = sphi 0, %s154
      %s158 = sphi 0, %s157
      %s174 = sphi 0, %s158
    $region4: #{tpu_custom_call.1} parent=1 // loop_header_branch
      %18 = sbr.rel (%p16) target = $region8
    $region5: #{tpu_custom_call.1} parent=1 // loop_body
      %s20 = ssub.s32 %s15, 1
      %s21 = ssub.s32 %s15, 2
      %s28 = sadd.s32 1, %s23
      %p29 = scmp.ge.s32.totalorder %s28, 2
      %s30 = scalar_select %p29, 0, %s28
      %s31 = sadd.s32 1, %s22
      %s32 = scalar_select %p29, %s31, %s22
      %p33 = scmp.ge.s32.totalorder %s32, 2
      %s34 = scalar_select %p33, 0, %s32
      %s35 = ssub.s32 %s22, %s34
      %p36 = scmp.eq.s32.totalorder %s35, 0
      %s38 = sadd.s32 %s37, 1
      %s39 = scalar_select %p36, %s37, %s38
      %p42 = pneg %p36
      %p43 = scmp.eq.s32.totalorder %s15, 3
      %p44 = por %p42, %p43
      %p45 = scmp.ne.s32.totalorder %s37, %s40
      %p46 = scmp.eq.s32.totalorder %s15, 0
      %p47 = por %p45, %p46
      %p48 = scmp.ne.s32.totalorder %s37, %s40
      %p49 = scmp.eq.s32.totalorder %s20, 3
      %p50 = por %p48, %p49
      %p51 = scmp.ne.s32.totalorder %s40, %s41
      %p52 = scmp.eq.s32.totalorder %s20, 0
      %p53 = por %p51, %p52
      %p54 = scmp.ne.s32.totalorder %s40, %s41
      %p55 = scmp.eq.s32.totalorder %s21, 3
      %p56 = por %p54, %p55
      %p58 = scmp.ne.s32.totalorder %s41, %s57
      %p59 = scmp.eq.s32.totalorder %s21, 0
      %p60 = por %p58, %p59
      %s62 = sadd.s32 %s61, 1
      %p65 = scmp.eq.s32.totalorder %s15, 3
      %p66 = scmp.ne.s32.totalorder %s61, %s63
      %p67 = scmp.eq.s32.totalorder %s15, 0
      %p68 = por %p66, %p67
      %p69 = scmp.ne.s32.totalorder %s61, %s63
      %p70 = scmp.eq.s32.totalorder %s20, 3
      %p71 = por %p69, %p70
      %p72 = scmp.ne.s32.totalorder %s63, %s64
      %p73 = scmp.eq.s32.totalorder %s20, 0
      %p74 = por %p72, %p73
      %p75 = scmp.ne.s32.totalorder %s63, %s64
      %p76 = scmp.eq.s32.totalorder %s21, 3
      %p77 = por %p75, %p76
      %p79 = scmp.ne.s32.totalorder %s64, %s78
      %p80 = scmp.eq.s32.totalorder %s21, 0
      %p81 = por %p79, %p80
      %s83 = sadd.s32 %s82, 1
      %p86 = scmp.eq.s32.totalorder %s15, 3
      %p87 = scmp.ne.s32.totalorder %s82, %s84
      %p88 = scmp.eq.s32.totalorder %s15, 0
      %p89 = por %p87, %p88
      %p90 = scmp.ne.s32.totalorder %s82, %s84
      %p91 = scmp.eq.s32.totalorder %s20, 3
      %p92 = por %p90, %p91
      %p93 = scmp.ne.s32.totalorder %s84, %s85
      %p94 = scmp.eq.s32.totalorder %s20, 0
      %p95 = por %p93, %p94
      %p96 = scmp.ne.s32.totalorder %s84, %s85
      %p97 = scmp.eq.s32.totalorder %s21, 3
      %p98 = por %p96, %p97
      %p100 = scmp.ne.s32.totalorder %s85, %s99
      %p101 = scmp.eq.s32.totalorder %s21, 0
      %p102 = por %p100, %p101
      %s104 = sadd.s32 %s103, 1
      %p107 = scmp.eq.s32.totalorder %s15, 3
      %p108 = scmp.ne.s32.totalorder %s103, %s105
      %p109 = scmp.eq.s32.totalorder %s15, 0
      %p110 = por %p108, %p109
      %p111 = scmp.ne.s32.totalorder %s103, %s105
      %p112 = scmp.eq.s32.totalorder %s20, 3
      %p113 = por %p111, %p112
      %p114 = scmp.ne.s32.totalorder %s105, %s106
      %p115 = scmp.eq.s32.totalorder %s20, 0
      %p116 = por %p114, %p115
      %p117 = scmp.ne.s32.totalorder %s105, %s106
      %p118 = scmp.eq.s32.totalorder %s21, 3
      %p119 = por %p117, %p118
      %p121 = scmp.ne.s32.totalorder %s106, %s120
      %p122 = scmp.eq.s32.totalorder %s21, 0
      %p123 = por %p121, %p122
      %s124 = ssub.s32 %s22, %s34
      %p125 = scmp.eq.s32.totalorder %s124, 0
      %s127 = sadd.s32 %s126, 1
      %s128 = scalar_select %p125, %s126, %s127
      %p131 = pneg %p125
      %p132 = scmp.eq.s32.totalorder %s15, 3
      %p133 = por %p131, %p132
      %p134 = scmp.ne.s32.totalorder %s126, %s129
      %p135 = scmp.eq.s32.totalorder %s15, 0
      %p136 = por %p134, %p135
      %p137 = scmp.ne.s32.totalorder %s126, %s129
      %p138 = scmp.eq.s32.totalorder %s20, 3
      %p139 = por %p137, %p138
      %p140 = scmp.ne.s32.totalorder %s129, %s130
      %p141 = scmp.eq.s32.totalorder %s20, 0
      %p142 = por %p140, %p141
      %p143 = scmp.ne.s32.totalorder %s129, %s130
      %p144 = scmp.eq.s32.totalorder %s21, 3
      %p145 = por %p143, %p144
      %p147 = scmp.ne.s32.totalorder %s130, %s146
      %p148 = scmp.eq.s32.totalorder %s21, 0
      %p149 = por %p147, %p148
      %s150 = ssub.s32 %s22, %s34
      %s151 = ssub.s32 %s23, %s30
      %s152 = sor.u32 %s150, %s151
      %p153 = scmp.eq.s32.totalorder %s152, 0
      %s155 = sadd.s32 %s154, 1
      %s156 = scalar_select %p153, %s154, %s155
      %p159 = pneg %p153
      %p160 = scmp.eq.s32.totalorder %s15, 3
      %p161 = por %p159, %p160
      %p162 = scmp.ne.s32.totalorder %s154, %s157
      %p163 = scmp.eq.s32.totalorder %s15, 0
      %p164 = por %p162, %p163
      %p165 = scmp.ne.s32.totalorder %s154, %s157
      %p166 = scmp.eq.s32.totalorder %s20, 3
      %p167 = por %p165, %p166
      %p168 = scmp.ne.s32.totalorder %s157, %s158
      %p169 = scmp.eq.s32.totalorder %s20, 0
      %p170 = por %p168, %p169
      %p171 = scmp.ne.s32.totalorder %s157, %s158
      %p172 = scmp.eq.s32.totalorder %s21, 3
      %p173 = por %p171, %p172
      %p175 = scmp.ne.s32.totalorder %s158, %s174
      %p176 = scmp.eq.s32.totalorder %s21, 0
      %p177 = por %p175, %p176
      %p178 = scmp.le.s32.totalorder 1, %s15
      %p179 = scmp.lt.s32.totalorder %s15, 5
      %p180 = pnand %p178, %p179
      %p181 = pneg %p180
      // Predicated region
      $region9: #{tpu_custom_call.1} parent=5 // pred_check
        _
      $region10: #{tpu_custom_call.1} parent=5 // pred_check_branch
        %183 = sbr.rel (%p180) target = $region12
      $region11: #{tpu_custom_call.1} parent=5 // pred_region
        %s184 = ssub.s32 %s15, 1
        // Predicated region
        $region13: #{tpu_custom_call.1} parent=11 // pred_check
          %p185 = pneg %p74
        $region14: #{tpu_custom_call.1} parent=11 // pred_check_branch
          %187 = sbr.rel (%p185) target = $region16
        $region15: #{tpu_custom_call.1} parent=11 // pred_region
          %189 = vsyncadd [#allocation4], 0
          %s190 = sshll.u32 %s1, 4
          %s191 = int_to_ptr.hbm [resolvable:$true] %s190
          %s192 = sshll.u32 [#allocation3], 4
          %s193 = int_to_ptr.vmem [resolvable:$true] %s192
          %198 = dma.hbm_to_vmem [thread:$0]  %s191, 2304, %s193, [#allocation4], 64, 64, 4
        $region16: #{tpu_custom_call.1} parent=11 // pred_fallthru
          _
        // Predicated region
        $region17: #{tpu_custom_call.1} parent=11 // pred_check
          %p199 = pneg %p95
        $region18: #{tpu_custom_call.1} parent=11 // pred_check_branch
          %201 = sbr.rel (%p199) target = $region20
        $region19: #{tpu_custom_call.1} parent=11 // pred_region
          _
        $region20: #{tpu_custom_call.1} parent=11 // pred_fallthru
          _
        // Predicated region
        $region21: #{tpu_custom_call.1} parent=11 // pred_check
          %p202 = pneg %p116
        $region22: #{tpu_custom_call.1} parent=11 // pred_check_branch
          %204 = sbr.rel (%p202) target = $region24
        $region23: #{tpu_custom_call.1} parent=11 // pred_region
          _
        $region24: #{tpu_custom_call.1} parent=11 // pred_fallthru
          _
      $region12: #{tpu_custom_call.1} parent=5 // pred_fallthru
        _
      %p205 = scmp.lt.s32.totalorder %s15, 4
      // Predicated region
      $region25: #{tpu_custom_call.1} parent=5 // pred_check
        %p206 = pneg %p205
      $region26: #{tpu_custom_call.1} parent=5 // pred_check_branch
        %208 = sbr.rel (%p206) target = $region28
      $region27: #{tpu_custom_call.1} parent=5 // pred_region
        // Predicated region
        $region29: #{tpu_custom_call.1} parent=27 // pred_check
          %p209 = pneg %p47
        $region30: #{tpu_custom_call.1} parent=27 // pred_check_branch
          %211 = sbr.rel (%p209) target = $region32
        $region31: #{tpu_custom_call.1} parent=27 // pred_region
          %p212 = scmp.lt.s32.totalorder %s22, 1
          %s213 = scalar_select %p212, %s22, 1
          %s214 = smul.addr %s213, 32
          %s215 = smul.addr %s214, 4
          %s216 = scalar_lea.vmem %s0, %s215
        $region32: #{tpu_custom_call.1} parent=27 // pred_fallthru
          _
        // Predicated region
        $region33: #{tpu_custom_call.1} parent=27 // pred_check
          %p217 = pneg %p136
        $region34: #{tpu_custom_call.1} parent=27 // pred_check_branch
          %219 = sbr.rel (%p217) target = $region36
        $region35: #{tpu_custom_call.1} parent=27 // pred_region
          %p220 = scmp.lt.s32.totalorder %s22, 1
          %s221 = scalar_select %p220, %s22, 1
          %s222 = scalar_lea.vmem %s4, %s221
        $region36: #{tpu_custom_call.1} parent=27 // pred_fallthru
          _
      $region28: #{tpu_custom_call.1} parent=5 // pred_fallthru
        _
      %p223 = scmp.le.s32.totalorder 1, %s15
      %p224 = scmp.lt.s32.totalorder %s15, 5
      %p225 = pnand %p223, %p224
      %p226 = pneg %p225
      // Predicated region
      $region37: #{tpu_custom_call.1} parent=5 // pred_check
        _
      $region38: #{tpu_custom_call.1} parent=5 // pred_check_branch
        %228 = sbr.rel (%p225) target = $region40
      $region39: #{tpu_custom_call.1} parent=5 // pred_region
        %s229 = ssub.s32 %s15, 1
        // Predicated region
        $region41: #{tpu_custom_call.1} parent=39 // pred_check
          %p230 = pneg %p74
        $region42: #{tpu_custom_call.1} parent=39 // pred_check_branch
          %232 = sbr.rel (%p230) target = $region44
        $region43: #{tpu_custom_call.1} parent=39 // pred_region
          %234 = dma.done [#allocation4], 2304
        $region44: #{tpu_custom_call.1} parent=39 // pred_fallthru
          _
        %p235 = scmp.lt.s32.totalorder %s24, 1
        %s236 = scalar_select %p235, %s24, 1
        %s237 = smul.addr %s236, 32
        %s238 = smul.addr %s237, 4
        %s239 = scalar_lea.vmem %s0, %s238
        %p240 = pneg %p53
        %p241 = pneg %p50
        %p242 = pneg %p74
        %p243 = pneg %p71
        %p244 = pneg %p95
        %p245 = pneg %p92
        %p246 = pneg %p116
        %p247 = pneg %p113
        %p248 = scmp.lt.s32.totalorder %s24, 1
        %s249 = scalar_select %p248, %s24, 1
        %s250 = scalar_lea.vmem %s4, %s249
        %p251 = pneg %p142
        %p252 = pneg %p139
        %p253 = pneg %p170
        %p254 = pneg %p167
        %s255 = sand.u32 %s157, 1
        %s256 = scalar_lea.sflag [#allocation5], %s255
        %s257 = sand.u32 %s157, 1
        %s258 = smul.addr %s257, 128
        %s259 = scalar_lea.vmem [#allocation6], %s258
        %p260 = scmp.lt.s32.totalorder %s24, 1
        %s261 = scalar_select %p260, %s24, 1
        %s262 = smul.addr %s261, 32
        %s263 = smul.addr %s262, 4
        %s264 = scalar_lea.vmem %s0, %s263
        %p265 = scmp.lt.s32.totalorder %s24, 1
        %s266 = scalar_select %p265, %s24, 1
        %s267 = scalar_lea.vmem %s4, %s266
        %s268 = smul.u32 8, %s25
        %p270 = scmp.eq.s32.totalorder %s25, 0
        // Predicated region
        $region45: #{tpu_custom_call.1} parent=39 // pred_check
          %p271 = pneg %p270
        $region46: #{tpu_custom_call.1} parent=39 // pred_check_branch
          %273 = sbr.rel (%p271) target = $region48
        $region47: #{tpu_custom_call.1} parent=39 // pred_region
          %vm274 = vcmask 64512
          %275 = vst.msk [vmem:[#allocation2] sm:$0xff] %vm274, 0.0
          %276 = vst.msk [vmem:[#allocation2 + $0x8] sm:$0xff] %vm274, 0.0
          %277 = vst.msk [vmem:[#allocation2 + $0x10] sm:$0xff] %vm274, 0.0
          %278 = vst.msk [vmem:[#allocation2 + $0x18] sm:$0xff] %vm274, 0.0
          %279 = vst.msk [vmem:[#allocation2 + $0x20] sm:$0xff] %vm274, 0.0
          %280 = vst.msk [vmem:[#allocation2 + $0x28] sm:$0xff] %vm274, 0.0
          %vm281 = vcmask 60416
          %282 = vst.msk [vmem:[#allocation2 + $0x30] sm:$0xf] %vm281, 0.0
          %283 = vst.msk [vmem:[#allocation2 + $0x38] sm:$0xff] %vm274, 0.0
          %284 = vst.msk [vmem:[#allocation2 + $0x40] sm:$0xff] %vm274, 0.0
          %285 = vst.msk [vmem:[#allocation2 + $0x48] sm:$0xff] %vm274, 0.0
          %286 = vst.msk [vmem:[#allocation2 + $0x50] sm:$0xff] %vm274, 0.0
          %287 = vst.msk [vmem:[#allocation2 + $0x58] sm:$0xff] %vm274, 0.0
          %288 = vst.msk [vmem:[#allocation2 + $0x60] sm:$0xff] %vm274, 0.0
          %289 = vst.msk [vmem:[#allocation2 + $0x68] sm:$0xf] %vm281, 0.0
          %290 = vst.msk [vmem:[#allocation2 + $0x70] sm:$0xff] %vm274, 0.0
          %291 = vst.msk [vmem:[#allocation2 + $0x78] sm:$0xff] %vm274, 0.0
          %292 = vst.msk [vmem:[#allocation2 + $0x80] sm:$0xff] %vm274, 0.0
          %293 = vst.msk [vmem:[#allocation2 + $0x88] sm:$0xff] %vm274, 0.0
          %294 = vst.msk [vmem:[#allocation2 + $0x90] sm:$0xff] %vm274, 0.0
          %295 = vst.msk [vmem:[#allocation2 + $0x98] sm:$0xff] %vm274, 0.0
          %296 = vst.msk [vmem:[#allocation2 + $0xa0] sm:$0xf] %vm281, 0.0
          %297 = vst.msk [vmem:[#allocation2 + $0xa8] sm:$0xff] %vm274, 0.0
          %298 = vst.msk [vmem:[#allocation2 + $0xb0] sm:$0xff] %vm274, 0.0
          %299 = vst.msk [vmem:[#allocation2 + $0xb8] sm:$0xff] %vm274, 0.0
          %300 = vst.msk [vmem:[#allocation2 + $0xc0] sm:$0xff] %vm274, 0.0
          %301 = vst.msk [vmem:[#allocation2 + $0xc8] sm:$0xff] %vm274, 0.0
          %302 = vst.msk [vmem:[#allocation2 + $0xd0] sm:$0xff] %vm274, 0.0
          %303 = vst.msk [vmem:[#allocation2 + $0xd8] sm:$0xf] %vm281, 0.0
          %304 = vst.msk [vmem:[#allocation2 + $0xe0] sm:$0xff] %vm274, 0.0
          %305 = vst.msk [vmem:[#allocation2 + $0xe8] sm:$0xff] %vm274, 0.0
          %306 = vst.msk [vmem:[#allocation2 + $0xf0] sm:$0xff] %vm274, 0.0
          %307 = vst.msk [vmem:[#allocation2 + $0xf8] sm:$0xff] %vm274, 0.0
          %308 = vst.msk [vmem:[#allocation2 + $0x100] sm:$0xff] %vm274, 0.0
          %309 = vst.msk [vmem:[#allocation2 + $0x108] sm:$0xff] %vm274, 0.0
          %310 = vst.msk [vmem:[#allocation2 + $0x110] sm:$0xf] %vm281, 0.0
          %311 = vst.msk [vmem:[#allocation2 + $0x118] sm:$0xff] %vm274, 0.0
          %312 = vst.msk [vmem:[#allocation2 + $0x120] sm:$0xff] %vm274, 0.0
          %313 = vst.msk [vmem:[#allocation2 + $0x128] sm:$0xff] %vm274, 0.0
          %314 = vst.msk [vmem:[#allocation2 + $0x130] sm:$0xff] %vm274, 0.0
          %315 = vst.msk [vmem:[#allocation2 + $0x138] sm:$0xff] %vm274, 0.0
          %316 = vst.msk [vmem:[#allocation2 + $0x140] sm:$0xff] %vm274, 0.0
          %317 = vst.msk [vmem:[#allocation2 + $0x148] sm:$0xf] %vm281, 0.0
          %318 = vst.msk [vmem:[#allocation2 + $0x150] sm:$0xff] %vm274, 0.0
          %319 = vst.msk [vmem:[#allocation2 + $0x158] sm:$0xff] %vm274, 0.0
          %320 = vst.msk [vmem:[#allocation2 + $0x160] sm:$0xff] %vm274, 0.0
          %321 = vst.msk [vmem:[#allocation2 + $0x168] sm:$0xff] %vm274, 0.0
          %322 = vst.msk [vmem:[#allocation2 + $0x170] sm:$0xff] %vm274, 0.0
          %323 = vst.msk [vmem:[#allocation2 + $0x178] sm:$0xff] %vm274, 0.0
          %324 = vst.msk [vmem:[#allocation2 + $0x180] sm:$0xf] %vm281, 0.0
          %325 = vst.msk [vmem:[#allocation2 + $0x188] sm:$0xff] %vm274, 0.0
          %326 = vst.msk [vmem:[#allocation2 + $0x190] sm:$0xff] %vm274, 0.0
          %327 = vst.msk [vmem:[#allocation2 + $0x198] sm:$0xff] %vm274, 0.0
          %328 = vst.msk [vmem:[#allocation2 + $0x1a0] sm:$0xff] %vm274, 0.0
          %329 = vst.msk [vmem:[#allocation2 + $0x1a8] sm:$0xff] %vm274, 0.0
          %330 = vst.msk [vmem:[#allocation2 + $0x1b0] sm:$0xff] %vm274, 0.0
          %331 = vst.msk [vmem:[#allocation2 + $0x1b8] sm:$0xf] %vm281, 0.0
          %332 = vst.msk [vmem:[#allocation2 + $0x1c0] sm:$0xff] %vm274, 0.0
          %333 = vst.msk [vmem:[#allocation2 + $0x1c8] sm:$0xff] %vm274, 0.0
          %334 = vst.msk [vmem:[#allocation2 + $0x1d0] sm:$0xff] %vm274, 0.0
          %335 = vst.msk [vmem:[#allocation2 + $0x1d8] sm:$0xff] %vm274, 0.0
          %336 = vst.msk [vmem:[#allocation2 + $0x1e0] sm:$0xff] %vm274, 0.0
          %337 = vst.msk [vmem:[#allocation2 + $0x1e8] sm:$0xff] %vm274, 0.0
          %338 = vst.msk [vmem:[#allocation2 + $0x1f0] sm:$0xf] %vm281, 0.0
          %339 = vst.msk [vmem:[#allocation2 + $0x1f8] sm:$0xff] %vm274, 0.0
          %340 = vst.msk [vmem:[#allocation2 + $0x200] sm:$0xff] %vm274, 0.0
          %341 = vst.msk [vmem:[#allocation2 + $0x208] sm:$0xff] %vm274, 0.0
          %342 = vst.msk [vmem:[#allocation2 + $0x210] sm:$0xff] %vm274, 0.0
          %343 = vst.msk [vmem:[#allocation2 + $0x218] sm:$0xff] %vm274, 0.0
          %344 = vst.msk [vmem:[#allocation2 + $0x220] sm:$0xff] %vm274, 0.0
          %345 = vst.msk [vmem:[#allocation2 + $0x228] sm:$0xf] %vm281, 0.0
          %346 = vst.msk [vmem:[#allocation2 + $0x230] sm:$0xff] %vm274, 0.0
          %347 = vst.msk [vmem:[#allocation2 + $0x238] sm:$0xff] %vm274, 0.0
          %348 = vst.msk [vmem:[#allocation2 + $0x240] sm:$0xff] %vm274, 0.0
          %349 = vst.msk [vmem:[#allocation2 + $0x248] sm:$0xff] %vm274, 0.0
          %350 = vst.msk [vmem:[#allocation2 + $0x250] sm:$0xff] %vm274, 0.0
          %351 = vst.msk [vmem:[#allocation2 + $0x258] sm:$0xff] %vm274, 0.0
          %352 = vst.msk [vmem:[#allocation2 + $0x260] sm:$0xf] %vm281, 0.0
          %353 = vst.msk [vmem:[#allocation2 + $0x268] sm:$0xff] %vm274, 0.0
          %354 = vst.msk [vmem:[#allocation2 + $0x270] sm:$0xff] %vm274, 0.0
          %355 = vst.msk [vmem:[#allocation2 + $0x278] sm:$0xff] %vm274, 0.0
          %356 = vst.msk [vmem:[#allocation2 + $0x280] sm:$0xff] %vm274, 0.0
          %357 = vst.msk [vmem:[#allocation2 + $0x288] sm:$0xff] %vm274, 0.0
          %358 = vst.msk [vmem:[#allocation2 + $0x290] sm:$0xff] %vm274, 0.0
          %359 = vst.msk [vmem:[#allocation2 + $0x298] sm:$0xf] %vm281, 0.0
          %360 = vst.msk [vmem:[#allocation2 + $0x2a0] sm:$0xff] %vm274, 0.0
          %361 = vst.msk [vmem:[#allocation2 + $0x2a8] sm:$0xff] %vm274, 0.0
          %362 = vst.msk [vmem:[#allocation2 + $0x2b0] sm:$0xff] %vm274, 0.0
          %363 = vst.msk [vmem:[#allocation2 + $0x2b8] sm:$0xff] %vm274, 0.0
          %364 = vst.msk [vmem:[#allocation2 + $0x2c0] sm:$0xff] %vm274, 0.0
          %365 = vst.msk [vmem:[#allocation2 + $0x2c8] sm:$0xff] %vm274, 0.0
          %366 = vst.msk [vmem:[#allocation2 + $0x2d0] sm:$0xf] %vm281, 0.0
          %367 = vst.msk [vmem:[#allocation2 + $0x2d8] sm:$0xff] %vm274, 0.0
          %368 = vst.msk [vmem:[#allocation2 + $0x2e0] sm:$0xff] %vm274, 0.0
          %369 = vst.msk [vmem:[#allocation2 + $0x2e8] sm:$0xff] %vm274, 0.0
          %370 = vst.msk [vmem:[#allocation2 + $0x2f0] sm:$0xff] %vm274, 0.0
          %371 = vst.msk [vmem:[#allocation2 + $0x2f8] sm:$0xff] %vm274, 0.0
          %372 = vst.msk [vmem:[#allocation2 + $0x300] sm:$0xff] %vm274, 0.0
          %373 = vst.msk [vmem:[#allocation2 + $0x308] sm:$0xf] %vm281, 0.0
          %374 = vst.msk [vmem:[#allocation2 + $0x310] sm:$0xff] %vm274, 0.0
          %375 = vst.msk [vmem:[#allocation2 + $0x318] sm:$0xff] %vm274, 0.0
          %376 = vst.msk [vmem:[#allocation2 + $0x320] sm:$0xff] %vm274, 0.0
          %377 = vst.msk [vmem:[#allocation2 + $0x328] sm:$0xff] %vm274, 0.0
          %378 = vst.msk [vmem:[#allocation2 + $0x330] sm:$0xff] %vm274, 0.0
          %379 = vst.msk [vmem:[#allocation2 + $0x338] sm:$0xff] %vm274, 0.0
          %380 = vst.msk [vmem:[#allocation2 + $0x340] sm:$0xf] %vm281, 0.0
          %381 = vst.msk [vmem:[#allocation2 + $0x348] sm:$0xff] %vm274, 0.0
          %382 = vst.msk [vmem:[#allocation2 + $0x350] sm:$0xff] %vm274, 0.0
          %383 = vst.msk [vmem:[#allocation2 + $0x358] sm:$0xff] %vm274, 0.0
          %384 = vst.msk [vmem:[#allocation2 + $0x360] sm:$0xff] %vm274, 0.0
          %385 = vst.msk [vmem:[#allocation2 + $0x368] sm:$0xff] %vm274, 0.0
          %386 = vst.msk [vmem:[#allocation2 + $0x370] sm:$0xff] %vm274, 0.0
          %387 = vst.msk [vmem:[#allocation2 + $0x378] sm:$0xf] %vm281, 0.0
          %388 = vst.msk [vmem:[#allocation2 + $0x380] sm:$0xff] %vm274, 0.0
          %389 = vst.msk [vmem:[#allocation2 + $0x388] sm:$0xff] %vm274, 0.0
          %390 = vst.msk [vmem:[#allocation2 + $0x390] sm:$0xff] %vm274, 0.0
          %391 = vst.msk [vmem:[#allocation2 + $0x398] sm:$0xff] %vm274, 0.0
          %392 = vst.msk [vmem:[#allocation2 + $0x3a0] sm:$0xff] %vm274, 0.0
          %393 = vst.msk [vmem:[#allocation2 + $0x3a8] sm:$0xff] %vm274, 0.0
          %394 = vst.msk [vmem:[#allocation2 + $0x3b0] sm:$0xf] %vm281, 0.0
          %395 = vst.msk [vmem:[#allocation2 + $0x3b8] sm:$0xff] %vm274, 0.0
          %396 = vst.msk [vmem:[#allocation2 + $0x3c0] sm:$0xff] %vm274, 0.0
          %397 = vst.msk [vmem:[#allocation2 + $0x3c8] sm:$0xff] %vm274, 0.0
          %398 = vst.msk [vmem:[#allocation2 + $0x3d0] sm:$0xff] %vm274, 0.0
          %399 = vst.msk [vmem:[#allocation2 + $0x3d8] sm:$0xff] %vm274, 0.0
          %400 = vst.msk [vmem:[#allocation2 + $0x3e0] sm:$0xff] %vm274, 0.0
          %401 = vst.msk [vmem:[#allocation2 + $0x3e8] sm:$0xf] %vm281, 0.0
          %s402 = scalar_lea.vmem [#allocation2], 1904
          %403 = vst.msk [vmem:[%s402] sm:$0xff] %vm274, 0.0
          %404 = vst.msk [vmem:[%s402 + $0x8] sm:$0xff] %vm274, 0.0
          %405 = vst.msk [vmem:[%s402 + $0x10] sm:$0xff] %vm274, 0.0
          %406 = vst.msk [vmem:[%s402 + $0x18] sm:$0xff] %vm274, 0.0
          %407 = vst.msk [vmem:[%s402 + $0x20] sm:$0xff] %vm274, 0.0
          %408 = vst.msk [vmem:[%s402 + $0x28] sm:$0xff] %vm274, 0.0
          %409 = vst.msk [vmem:[%s402 + $0x30] sm:$0xf] %vm281, 0.0
          %410 = vst.msk [vmem:[%s402 + $0x38] sm:$0xff] %vm274, 0.0
          %411 = vst.msk [vmem:[%s402 + $0x40] sm:$0xff] %vm274, 0.0
          %412 = vst.msk [vmem:[%s402 + $0x48] sm:$0xff] %vm274, 0.0
          %413 = vst.msk [vmem:[%s402 + $0x50] sm:$0xff] %vm274, 0.0
          %414 = vst.msk [vmem:[%s402 + $0x58] sm:$0xff] %vm274, 0.0
          %415 = vst.msk [vmem:[%s402 + $0x60] sm:$0xff] %vm274, 0.0
          %416 = vst.msk [vmem:[%s402 + $0x68] sm:$0xf] %vm281, 0.0
          %417 = vst.msk [vmem:[%s402 + $0x70] sm:$0xff] %vm274, 0.0
          %418 = vst.msk [vmem:[%s402 + $0x78] sm:$0xff] %vm274, 0.0
          %419 = vst.msk [vmem:[%s402 + $0x80] sm:$0xff] %vm274, 0.0
          %420 = vst.msk [vmem:[%s402 + $0x88] sm:$0xff] %vm274, 0.0
          %421 = vst.msk [vmem:[%s402 + $0x90] sm:$0xff] %vm274, 0.0
          %422 = vst.msk [vmem:[%s402 + $0x98] sm:$0xff] %vm274, 0.0
          %423 = vst.msk [vmem:[%s402 + $0xa0] sm:$0xf] %vm281, 0.0
          %424 = vst.msk [vmem:[%s402 + $0xa8] sm:$0xff] %vm274, 0.0
          %425 = vst.msk [vmem:[%s402 + $0xb0] sm:$0xff] %vm274, 0.0
          %426 = vst.msk [vmem:[%s402 + $0xb8] sm:$0xff] %vm274, 0.0
          %427 = vst.msk [vmem:[%s402 + $0xc0] sm:$0xff] %vm274, 0.0
          %428 = vst.msk [vmem:[%s402 + $0xc8] sm:$0xff] %vm274, 0.0
          %429 = vst.msk [vmem:[%s402 + $0xd0] sm:$0xff] %vm274, 0.0
          %430 = vst.msk [vmem:[%s402 + $0xd8] sm:$0xf] %vm281, 0.0
          %431 = vst.msk [vmem:[%s402 + $0xe0] sm:$0xff] %vm274, 0.0
          %432 = vst.msk [vmem:[%s402 + $0xe8] sm:$0xff] %vm274, 0.0
          %433 = vst.msk [vmem:[%s402 + $0xf0] sm:$0xff] %vm274, 0.0
          %434 = vst.msk [vmem:[%s402 + $0xf8] sm:$0xff] %vm274, 0.0
          %435 = vst.msk [vmem:[%s402 + $0x100] sm:$0xff] %vm274, 0.0
          %436 = vst.msk [vmem:[%s402 + $0x108] sm:$0xff] %vm274, 0.0
          %437 = vst.msk [vmem:[%s402 + $0x110] sm:$0xf] %vm281, 0.0
          %438 = vst.msk [vmem:[%s402 + $0x118] sm:$0xff] %vm274, 0.0
          %439 = vst.msk [vmem:[%s402 + $0x120] sm:$0xff] %vm274, 0.0
          %440 = vst.msk [vmem:[%s402 + $0x128] sm:$0xff] %vm274, 0.0
          %441 = vst.msk [vmem:[%s402 + $0x130] sm:$0xff] %vm274, 0.0
          %442 = vst.msk [vmem:[%s402 + $0x138] sm:$0xff] %vm274, 0.0
          %443 = vst.msk [vmem:[%s402 + $0x140] sm:$0xff] %vm274, 0.0
          %444 = vst.msk [vmem:[%s402 + $0x148] sm:$0xf] %vm281, 0.0
          %445 = vst.msk [vmem:[%s402 + $0x150] sm:$0xff] %vm274, 0.0
          %446 = vst.msk [vmem:[%s402 + $0x158] sm:$0xff] %vm274, 0.0
          %447 = vst.msk [vmem:[%s402 + $0x160] sm:$0xff] %vm274, 0.0
          %448 = vst.msk [vmem:[%s402 + $0x168] sm:$0xff] %vm274, 0.0
          %449 = vst.msk [vmem:[%s402 + $0x170] sm:$0xff] %vm274, 0.0
          %450 = vst.msk [vmem:[%s402 + $0x178] sm:$0xff] %vm274, 0.0
          %451 = vst.msk [vmem:[%s402 + $0x180] sm:$0xf] %vm281, 0.0
          %452 = vst.msk [vmem:[%s402 + $0x188] sm:$0xff] %vm274, 0.0
          %453 = vst.msk [vmem:[%s402 + $0x190] sm:$0xff] %vm274, 0.0
          %454 = vst.msk [vmem:[%s402 + $0x198] sm:$0xff] %vm274, 0.0
          %455 = vst.msk [vmem:[%s402 + $0x1a0] sm:$0xff] %vm274, 0.0
          %456 = vst.msk [vmem:[%s402 + $0x1a8] sm:$0xff] %vm274, 0.0
          %457 = vst.msk [vmem:[%s402 + $0x1b0] sm:$0xff] %vm274, 0.0
          %458 = vst.msk [vmem:[%s402 + $0x1b8] sm:$0xf] %vm281, 0.0
          %459 = vst.msk [vmem:[%s402 + $0x1c0] sm:$0xff] %vm274, 0.0
          %460 = vst.msk [vmem:[%s402 + $0x1c8] sm:$0xff] %vm274, 0.0
          %461 = vst.msk [vmem:[%s402 + $0x1d0] sm:$0xff] %vm274, 0.0
          %462 = vst.msk [vmem:[%s402 + $0x1d8] sm:$0xff] %vm274, 0.0
          %463 = vst.msk [vmem:[%s402 + $0x1e0] sm:$0xff] %vm274, 0.0
          %464 = vst.msk [vmem:[%s402 + $0x1e8] sm:$0xff] %vm274, 0.0
          %465 = vst.msk [vmem:[%s402 + $0x1f0] sm:$0xf] %vm281, 0.0
          %466 = vst.msk [vmem:[%s402 + $0x1f8] sm:$0xff] %vm274, 0.0
          %467 = vst.msk [vmem:[%s402 + $0x200] sm:$0xff] %vm274, 0.0
          %468 = vst.msk [vmem:[%s402 + $0x208] sm:$0xff] %vm274, 0.0
          %469 = vst.msk [vmem:[%s402 + $0x210] sm:$0xff] %vm274, 0.0
          %470 = vst.msk [vmem:[%s402 + $0x218] sm:$0xff] %vm274, 0.0
          %471 = vst.msk [vmem:[%s402 + $0x220] sm:$0xff] %vm274, 0.0
          %472 = vst.msk [vmem:[%s402 + $0x228] sm:$0xf] %vm281, 0.0
          %473 = vst.msk [vmem:[%s402 + $0x230] sm:$0xff] %vm274, 0.0
          %474 = vst.msk [vmem:[%s402 + $0x238] sm:$0xff] %vm274, 0.0
          %475 = vst.msk [vmem:[%s402 + $0x240] sm:$0xff] %vm274, 0.0
          %476 = vst.msk [vmem:[%s402 + $0x248] sm:$0xff] %vm274, 0.0
          %477 = vst.msk [vmem:[%s402 + $0x250] sm:$0xff] %vm274, 0.0
          %478 = vst.msk [vmem:[%s402 + $0x258] sm:$0xff] %vm274, 0.0
          %479 = vst.msk [vmem:[%s402 + $0x260] sm:$0xf] %vm281, 0.0
          %480 = vst.msk [vmem:[%s402 + $0x268] sm:$0xff] %vm274, 0.0
          %481 = vst.msk [vmem:[%s402 + $0x270] sm:$0xff] %vm274, 0.0
          %482 = vst.msk [vmem:[%s402 + $0x278] sm:$0xff] %vm274, 0.0
          %483 = vst.msk [vmem:[%s402 + $0x280] sm:$0xff] %vm274, 0.0
          %484 = vst.msk [vmem:[%s402 + $0x288] sm:$0xff] %vm274, 0.0
          %485 = vst.msk [vmem:[%s402 + $0x290] sm:$0xff] %vm274, 0.0
          %486 = vst.msk [vmem:[%s402 + $0x298] sm:$0xf] %vm281, 0.0
          %487 = vst.msk [vmem:[%s402 + $0x2a0] sm:$0xff] %vm274, 0.0
          %488 = vst.msk [vmem:[%s402 + $0x2a8] sm:$0xff] %vm274, 0.0
          %489 = vst.msk [vmem:[%s402 + $0x2b0] sm:$0xff] %vm274, 0.0
          %490 = vst.msk [vmem:[%s402 + $0x2b8] sm:$0xff] %vm274, 0.0
          %491 = vst.msk [vmem:[%s402 + $0x2c0] sm:$0xff] %vm274, 0.0
          %492 = vst.msk [vmem:[%s402 + $0x2c8] sm:$0xff] %vm274, 0.0
          %493 = vst.msk [vmem:[%s402 + $0x2d0] sm:$0xf] %vm281, 0.0
          %494 = vst.msk [vmem:[%s402 + $0x2d8] sm:$0xff] %vm274, 0.0
          %495 = vst.msk [vmem:[%s402 + $0x2e0] sm:$0xff] %vm274, 0.0
          %496 = vst.msk [vmem:[%s402 + $0x2e8] sm:$0xff] %vm274, 0.0
          %497 = vst.msk [vmem:[%s402 + $0x2f0] sm:$0xff] %vm274, 0.0
          %498 = vst.msk [vmem:[%s402 + $0x2f8] sm:$0xff] %vm274, 0.0
          %499 = vst.msk [vmem:[%s402 + $0x300] sm:$0xff] %vm274, 0.0
          %500 = vst.msk [vmem:[%s402 + $0x308] sm:$0xf] %vm281, 0.0
          %501 = vst.msk [vmem:[%s402 + $0x310] sm:$0xff] %vm274, 0.0
          %502 = vst.msk [vmem:[%s402 + $0x318] sm:$0xff] %vm274, 0.0
          %503 = vst.msk [vmem:[%s402 + $0x320] sm:$0xff] %vm274, 0.0
          %504 = vst.msk [vmem:[%s402 + $0x328] sm:$0xff] %vm274, 0.0
          %505 = vst.msk [vmem:[%s402 + $0x330] sm:$0xff] %vm274, 0.0
          %506 = vst.msk [vmem:[%s402 + $0x338] sm:$0xff] %vm274, 0.0
          %507 = vst.msk [vmem:[%s402 + $0x340] sm:$0xf] %vm281, 0.0
          %508 = vst.msk [vmem:[%s402 + $0x348] sm:$0xff] %vm274, 0.0
          %509 = vst.msk [vmem:[%s402 + $0x350] sm:$0xff] %vm274, 0.0
          %510 = vst.msk [vmem:[%s402 + $0x358] sm:$0xff] %vm274, 0.0
          %511 = vst.msk [vmem:[%s402 + $0x360] sm:$0xff] %vm274, 0.0
          %512 = vst.msk [vmem:[%s402 + $0x368] sm:$0xff] %vm274, 0.0
          %513 = vst.msk [vmem:[%s402 + $0x370] sm:$0xff] %vm274, 0.0
          %514 = vst.msk [vmem:[%s402 + $0x378] sm:$0xf] %vm281, 0.0
          %515 = vst.msk [vmem:[%s402 + $0x380] sm:$0xff] %vm274, 0.0
          %516 = vst.msk [vmem:[%s402 + $0x388] sm:$0xff] %vm274, 0.0
          %517 = vst.msk [vmem:[%s402 + $0x390] sm:$0xff] %vm274, 0.0
          %518 = vst.msk [vmem:[%s402 + $0x398] sm:$0xff] %vm274, 0.0
          %519 = vst.msk [vmem:[%s402 + $0x3a0] sm:$0xff] %vm274, 0.0
          %520 = vst.msk [vmem:[%s402 + $0x3a8] sm:$0xff] %vm274, 0.0
          %521 = vst.msk [vmem:[%s402 + $0x3b0] sm:$0xf] %vm281, 0.0
          %522 = vst.msk [vmem:[%s402 + $0x3b8] sm:$0xff] %vm274, 0.0
          %523 = vst.msk [vmem:[%s402 + $0x3c0] sm:$0xff] %vm274, 0.0
          %524 = vst.msk [vmem:[%s402 + $0x3c8] sm:$0xff] %vm274, 0.0
          %525 = vst.msk [vmem:[%s402 + $0x3d0] sm:$0xff] %vm274, 0.0
          %526 = vst.msk [vmem:[%s402 + $0x3d8] sm:$0xff] %vm274, 0.0
          %527 = vst.msk [vmem:[%s402 + $0x3e0] sm:$0xff] %vm274, 0.0
          %528 = vst.msk [vmem:[%s402 + $0x3e8] sm:$0xf] %vm281, 0.0
          %s529 = scalar_lea.vmem [#allocation2], 1008
          %530 = vst.msk [vmem:[%s529] sm:$0xff] %vm274, 0.0
          %531 = vst.msk [vmem:[%s529 + $0x8] sm:$0xff] %vm274, 0.0
          %vm532 = vcmask 58368
          %533 = vst.msk [vmem:[%s529 + $0x10] sm:$0x3] %vm532, 0.0
          %534 = vst.msk [vmem:[%s529 + $0x38] sm:$0xff] %vm274, 0.0
          %535 = vst.msk [vmem:[%s529 + $0x40] sm:$0xff] %vm274, 0.0
          %536 = vst.msk [vmem:[%s529 + $0x48] sm:$0x3] %vm532, 0.0
          %537 = vst.msk [vmem:[%s529 + $0x70] sm:$0xff] %vm274, 0.0
          %538 = vst.msk [vmem:[%s529 + $0x78] sm:$0xff] %vm274, 0.0
          %539 = vst.msk [vmem:[%s529 + $0x80] sm:$0x3] %vm532, 0.0
          %540 = vst.msk [vmem:[%s529 + $0xa8] sm:$0xff] %vm274, 0.0
          %541 = vst.msk [vmem:[%s529 + $0xb0] sm:$0xff] %vm274, 0.0
          %542 = vst.msk [vmem:[%s529 + $0xb8] sm:$0x3] %vm532, 0.0
          %543 = vst.msk [vmem:[%s529 + $0xe0] sm:$0xff] %vm274, 0.0
          %544 = vst.msk [vmem:[%s529 + $0xe8] sm:$0xff] %vm274, 0.0
          %545 = vst.msk [vmem:[%s529 + $0xf0] sm:$0x3] %vm532, 0.0
          %546 = vst.msk [vmem:[%s529 + $0x118] sm:$0xff] %vm274, 0.0
          %547 = vst.msk [vmem:[%s529 + $0x120] sm:$0xff] %vm274, 0.0
          %548 = vst.msk [vmem:[%s529 + $0x128] sm:$0x3] %vm532, 0.0
          %549 = vst.msk [vmem:[%s529 + $0x150] sm:$0xff] %vm274, 0.0
          %550 = vst.msk [vmem:[%s529 + $0x158] sm:$0xff] %vm274, 0.0
          %551 = vst.msk [vmem:[%s529 + $0x160] sm:$0x3] %vm532, 0.0
          %552 = vst.msk [vmem:[%s529 + $0x188] sm:$0xff] %vm274, 0.0
          %553 = vst.msk [vmem:[%s529 + $0x190] sm:$0xff] %vm274, 0.0
          %554 = vst.msk [vmem:[%s529 + $0x198] sm:$0x3] %vm532, 0.0
          %555 = vst.msk [vmem:[%s529 + $0x1c0] sm:$0xff] %vm274, 0.0
          %556 = vst.msk [vmem:[%s529 + $0x1c8] sm:$0xff] %vm274, 0.0
          %557 = vst.msk [vmem:[%s529 + $0x1d0] sm:$0x3] %vm532, 0.0
          %558 = vst.msk [vmem:[%s529 + $0x1f8] sm:$0xff] %vm274, 0.0
          %559 = vst.msk [vmem:[%s529 + $0x200] sm:$0xff] %vm274, 0.0
          %560 = vst.msk [vmem:[%s529 + $0x208] sm:$0x3] %vm532, 0.0
          %561 = vst.msk [vmem:[%s529 + $0x230] sm:$0xff] %vm274, 0.0
          %562 = vst.msk [vmem:[%s529 + $0x238] sm:$0xff] %vm274, 0.0
          %563 = vst.msk [vmem:[%s529 + $0x240] sm:$0x3] %vm532, 0.0
          %564 = vst.msk [vmem:[%s529 + $0x268] sm:$0xff] %vm274, 0.0
          %565 = vst.msk [vmem:[%s529 + $0x270] sm:$0xff] %vm274, 0.0
          %566 = vst.msk [vmem:[%s529 + $0x278] sm:$0x3] %vm532, 0.0
          %567 = vst.msk [vmem:[%s529 + $0x2a0] sm:$0xff] %vm274, 0.0
          %568 = vst.msk [vmem:[%s529 + $0x2a8] sm:$0xff] %vm274, 0.0
          %569 = vst.msk [vmem:[%s529 + $0x2b0] sm:$0x3] %vm532, 0.0
          %570 = vst.msk [vmem:[%s529 + $0x2d8] sm:$0xff] %vm274, 0.0
          %571 = vst.msk [vmem:[%s529 + $0x2e0] sm:$0xff] %vm274, 0.0
          %572 = vst.msk [vmem:[%s529 + $0x2e8] sm:$0x3] %vm532, 0.0
          %573 = vst.msk [vmem:[%s529 + $0x310] sm:$0xff] %vm274, 0.0
          %574 = vst.msk [vmem:[%s529 + $0x318] sm:$0xff] %vm274, 0.0
          %575 = vst.msk [vmem:[%s529 + $0x320] sm:$0x3] %vm532, 0.0
          %576 = vst.msk [vmem:[%s529 + $0x348] sm:$0xff] %vm274, 0.0
          %577 = vst.msk [vmem:[%s529 + $0x350] sm:$0xff] %vm274, 0.0
          %578 = vst.msk [vmem:[%s529 + $0x358] sm:$0x3] %vm532, 0.0
          %579 = vst.msk [vmem:[%s529 + $0x22] sm:$0xff] %vm274, 0.0
          %580 = vst.msk [vmem:[%s529 + $0x2a] sm:$0xff] %vm274, 0.0
          %581 = vst.msk [vmem:[%s529 + $0x32] sm:$0x3] %vm532, 0.0
          %582 = vst.msk [vmem:[%s529 + $0x5a] sm:$0xff] %vm274, 0.0
          %583 = vst.msk [vmem:[%s529 + $0x62] sm:$0xff] %vm274, 0.0
          %584 = vst.msk [vmem:[%s529 + $0x6a] sm:$0x3] %vm532, 0.0
          %585 = vst.msk [vmem:[%s529 + $0x92] sm:$0xff] %vm274, 0.0
          %586 = vst.msk [vmem:[%s529 + $0x9a] sm:$0xff] %vm274, 0.0
          %587 = vst.msk [vmem:[%s529 + $0xa2] sm:$0x3] %vm532, 0.0
          %588 = vst.msk [vmem:[%s529 + $0xca] sm:$0xff] %vm274, 0.0
          %589 = vst.msk [vmem:[%s529 + $0xd2] sm:$0xff] %vm274, 0.0
          %590 = vst.msk [vmem:[%s529 + $0xda] sm:$0x3] %vm532, 0.0
          %591 = vst.msk [vmem:[%s529 + $0x102] sm:$0xff] %vm274, 0.0
          %592 = vst.msk [vmem:[%s529 + $0x10a] sm:$0xff] %vm274, 0.0
          %593 = vst.msk [vmem:[%s529 + $0x112] sm:$0x3] %vm532, 0.0
          %594 = vst.msk [vmem:[%s529 + $0x13a] sm:$0xff] %vm274, 0.0
          %595 = vst.msk [vmem:[%s529 + $0x142] sm:$0xff] %vm274, 0.0
          %596 = vst.msk [vmem:[%s529 + $0x14a] sm:$0x3] %vm532, 0.0
          %597 = vst.msk [vmem:[%s529 + $0x172] sm:$0xff] %vm274, 0.0
          %598 = vst.msk [vmem:[%s529 + $0x17a] sm:$0xff] %vm274, 0.0
          %599 = vst.msk [vmem:[%s529 + $0x182] sm:$0x3] %vm532, 0.0
          %600 = vst.msk [vmem:[%s529 + $0x1aa] sm:$0xff] %vm274, 0.0
          %601 = vst.msk [vmem:[%s529 + $0x1b2] sm:$0xff] %vm274, 0.0
          %602 = vst.msk [vmem:[%s529 + $0x1ba] sm:$0x3] %vm532, 0.0
          %603 = vst.msk [vmem:[%s529 + $0x1e2] sm:$0xff] %vm274, 0.0
          %604 = vst.msk [vmem:[%s529 + $0x1ea] sm:$0xff] %vm274, 0.0
          %605 = vst.msk [vmem:[%s529 + $0x1f2] sm:$0x3] %vm532, 0.0
          %606 = vst.msk [vmem:[%s529 + $0x21a] sm:$0xff] %vm274, 0.0
          %607 = vst.msk [vmem:[%s529 + $0x222] sm:$0xff] %vm274, 0.0
          %608 = vst.msk [vmem:[%s529 + $0x22a] sm:$0x3] %vm532, 0.0
          %609 = vst.msk [vmem:[%s529 + $0x252] sm:$0xff] %vm274, 0.0
          %610 = vst.msk [vmem:[%s529 + $0x25a] sm:$0xff] %vm274, 0.0
          %611 = vst.msk [vmem:[%s529 + $0x262] sm:$0x3] %vm532, 0.0
          %612 = vst.msk [vmem:[%s529 + $0x28a] sm:$0xff] %vm274, 0.0
          %613 = vst.msk [vmem:[%s529 + $0x292] sm:$0xff] %vm274, 0.0
          %614 = vst.msk [vmem:[%s529 + $0x29a] sm:$0x3] %vm532, 0.0
          %615 = vst.msk [vmem:[%s529 + $0x2c2] sm:$0xff] %vm274, 0.0
          %616 = vst.msk [vmem:[%s529 + $0x2ca] sm:$0xff] %vm274, 0.0
          %617 = vst.msk [vmem:[%s529 + $0x2d2] sm:$0x3] %vm532, 0.0
          %618 = vst.msk [vmem:[%s529 + $0x2fa] sm:$0xff] %vm274, 0.0
          %619 = vst.msk [vmem:[%s529 + $0x302] sm:$0xff] %vm274, 0.0
          %620 = vst.msk [vmem:[%s529 + $0x30a] sm:$0x3] %vm532, 0.0
          %621 = vst.msk [vmem:[%s529 + $0x332] sm:$0xff] %vm274, 0.0
          %622 = vst.msk [vmem:[%s529 + $0x33a] sm:$0xff] %vm274, 0.0
          %623 = vst.msk [vmem:[%s529 + $0x342] sm:$0x3] %vm532, 0.0
          %624 = vst.msk [vmem:[%s529 + $0x36a] sm:$0xff] %vm274, 0.0
          %625 = vst.msk [vmem:[%s529 + $0x372] sm:$0xff] %vm274, 0.0
          %626 = vst.msk [vmem:[%s529 + $0x37a] sm:$0x3] %vm532, 0.0
          %v627 = vld [vmem:[%s264] sm:$0xf]
          %v628 = vld [vmem:[%s264 + $0x4] sm:$0xf]
          %v629 = vld [vmem:[%s264 + $0x8] sm:$0xf]
          %v630 = vld [vmem:[%s264 + $0xc] sm:$0xf]
          %v631 = vld [vmem:[%s264 + $0x10] sm:$0xf]
          %v632 = vld [vmem:[%s264 + $0x14] sm:$0xf]
          %v633 = vld [vmem:[%s264 + $0x18] sm:$0xf]
          %v634 = vld [vmem:[%s264 + $0x1c] sm:$0xf]
          %v635 = vld [vmem:[%s264 + $0x20] sm:$0xf]
          %v636 = vld [vmem:[%s264 + $0x24] sm:$0xf]
          %v637 = vld [vmem:[%s264 + $0x28] sm:$0xf]
          %v638 = vld [vmem:[%s264 + $0x2c] sm:$0xf]
          %v639 = vld [vmem:[%s264 + $0x30] sm:$0xf]
          %v640 = vld [vmem:[%s264 + $0x34] sm:$0xf]
          %v641 = vld [vmem:[%s264 + $0x38] sm:$0xf]
          %v642 = vld [vmem:[%s264 + $0x3c] sm:$0xf]
          %v643 = vld [vmem:[%s264 + $0x40] sm:$0xf]
          %v644 = vld [vmem:[%s264 + $0x44] sm:$0xf]
          %v645 = vld [vmem:[%s264 + $0x48] sm:$0xf]
          %v646 = vld [vmem:[%s264 + $0x4c] sm:$0xf]
          %v647 = vld [vmem:[%s264 + $0x50] sm:$0xf]
          %v648 = vld [vmem:[%s264 + $0x54] sm:$0xf]
          %v649 = vld [vmem:[%s264 + $0x58] sm:$0xf]
          %v650 = vld [vmem:[%s264 + $0x5c] sm:$0xf]
          %v651 = vld [vmem:[%s264 + $0x60] sm:$0xf]
          %v652 = vld [vmem:[%s264 + $0x64] sm:$0xf]
          %v653 = vld [vmem:[%s264 + $0x68] sm:$0xf]
          %v654 = vld [vmem:[%s264 + $0x6c] sm:$0xf]
          %v655 = vld [vmem:[%s264 + $0x70] sm:$0xf]
          %v656 = vld [vmem:[%s264 + $0x74] sm:$0xf]
          %v657 = vld [vmem:[%s264 + $0x78] sm:$0xf]
          %v658 = vld [vmem:[%s264 + $0x7c] sm:$0xf]
          %v659 = vunpack.c.l.bf16 %v627
          %v660 = vunpack.c.l.bf16 %v628
          %v661 = vunpack.c.l.bf16 %v629
          %v662 = vunpack.c.l.bf16 %v630
          %v663 = vunpack.c.l.bf16 %v631
          %v664 = vunpack.c.l.bf16 %v632
          %v665 = vunpack.c.l.bf16 %v633
          %v666 = vunpack.c.l.bf16 %v634
          %v667 = vunpack.c.l.bf16 %v635
          %v668 = vunpack.c.l.bf16 %v636
          %v669 = vunpack.c.l.bf16 %v637
          %v670 = vunpack.c.l.bf16 %v638
          %v671 = vunpack.c.l.bf16 %v639
          %v672 = vunpack.c.l.bf16 %v640
          %v673 = vunpack.c.l.bf16 %v641
          %v674 = vunpack.c.l.bf16 %v642
          %v675 = vunpack.c.l.bf16 %v643
          %v676 = vunpack.c.l.bf16 %v644
          %v677 = vunpack.c.l.bf16 %v645
          %v678 = vunpack.c.l.bf16 %v646
          %v679 = vunpack.c.l.bf16 %v647
          %v680 = vunpack.c.l.bf16 %v648
          %v681 = vunpack.c.l.bf16 %v649
          %v682 = vunpack.c.l.bf16 %v650
          %v683 = vunpack.c.l.bf16 %v651
          %v684 = vunpack.c.l.bf16 %v652
          %v685 = vunpack.c.l.bf16 %v653
          %v686 = vunpack.c.l.bf16 %v654
          %v687 = vunpack.c.l.bf16 %v655
          %v688 = vunpack.c.l.bf16 %v656
          %v689 = vunpack.c.l.bf16 %v657
          %v690 = vunpack.c.l.bf16 %v658
          %691 = vst.msk [vmem:[%s529 + $0x12] sm:$0xff] %vm274, %v659
          %692 = vst.msk [vmem:[%s529 + $0x1a] sm:$0xff] %vm274, %v660
          %693 = vst.msk [vmem:[%s529 + $0x4a] sm:$0xff] %vm274, %v661
          %694 = vst.msk [vmem:[%s529 + $0x52] sm:$0xff] %vm274, %v662
          %695 = vst.msk [vmem:[%s529 + $0x82] sm:$0xff] %vm274, %v663
          %696 = vst.msk [vmem:[%s529 + $0x8a] sm:$0xff] %vm274, %v664
          %697 = vst.msk [vmem:[%s529 + $0xba] sm:$0xff] %vm274, %v665
          %698 = vst.msk [vmem:[%s529 + $0xc2] sm:$0xff] %vm274, %v666
          %699 = vst.msk [vmem:[%s529 + $0xf2] sm:$0xff] %vm274, %v667
          %700 = vst.msk [vmem:[%s529 + $0xfa] sm:$0xff] %vm274, %v668
          %701 = vst.msk [vmem:[%s529 + $0x12a] sm:$0xff] %vm274, %v669
          %702 = vst.msk [vmem:[%s529 + $0x132] sm:$0xff] %vm274, %v670
          %703 = vst.msk [vmem:[%s529 + $0x162] sm:$0xff] %vm274, %v671
          %704 = vst.msk [vmem:[%s529 + $0x16a] sm:$0xff] %vm274, %v672
          %705 = vst.msk [vmem:[%s529 + $0x19a] sm:$0xff] %vm274, %v673
          %706 = vst.msk [vmem:[%s529 + $0x1a2] sm:$0xff] %vm274, %v674
          %707 = vst.msk [vmem:[%s529 + $0x1d2] sm:$0xff] %vm274, %v675
          %708 = vst.msk [vmem:[%s529 + $0x1da] sm:$0xff] %vm274, %v676
          %709 = vst.msk [vmem:[%s529 + $0x20a] sm:$0xff] %vm274, %v677
          %710 = vst.msk [vmem:[%s529 + $0x212] sm:$0xff] %vm274, %v678
          %711 = vst.msk [vmem:[%s529 + $0x242] sm:$0xff] %vm274, %v679
          %712 = vst.msk [vmem:[%s529 + $0x24a] sm:$0xff] %vm274, %v680
          %713 = vst.msk [vmem:[%s529 + $0x27a] sm:$0xff] %vm274, %v681
          %714 = vst.msk [vmem:[%s529 + $0x282] sm:$0xff] %vm274, %v682
          %715 = vst.msk [vmem:[%s529 + $0x2b2] sm:$0xff] %vm274, %v683
          %716 = vst.msk [vmem:[%s529 + $0x2ba] sm:$0xff] %vm274, %v684
          %717 = vst.msk [vmem:[%s529 + $0x2ea] sm:$0xff] %vm274, %v685
          %718 = vst.msk [vmem:[%s529 + $0x2f2] sm:$0xff] %vm274, %v686
          %719 = vst.msk [vmem:[%s529 + $0x322] sm:$0xff] %vm274, %v687
          %720 = vst.msk [vmem:[%s529 + $0x32a] sm:$0xff] %vm274, %v688
          %721 = vst.msk [vmem:[%s529 + $0x35a] sm:$0xff] %vm274, %v689
          %722 = vst.msk [vmem:[%s529 + $0x362] sm:$0xff] %vm274, %v690
        $region48: #{tpu_custom_call.1} parent=39 // pred_fallthru
          _
        %s723 = smul.u32 %s25, 8
        %s724 = sadd.s32 %s723, 17
        %s725 = smul.u32 %s724, 56
        %s726 = scalar_lea.vmem [#allocation2], %s725
        %v727 = vld [vmem:[%s726 + $0x11] sm:$0xff]
        %v728 = vld [vmem:[%s726 + $0x19] sm:$0xff]
        %v729 = vld [vmem:[%s726 + $0x49] sm:$0xff]
        %v730 = vld [vmem:[%s726 + $0x51] sm:$0xff]
        %v731 = vld [vmem:[%s726 + $0x81] sm:$0xff]
        %v732 = vld [vmem:[%s726 + $0x89] sm:$0xff]
        %v733 = vld [vmem:[%s726 + $0xb9] sm:$0xff]
        %v734 = vld [vmem:[%s726 + $0xc1] sm:$0xff]
        %v735 = vld [vmem:[%s726 + $0xf1] sm:$0xff]
        %v736 = vld [vmem:[%s726 + $0xf9] sm:$0xff]
        %v737 = vld [vmem:[%s726 + $0x129] sm:$0xff]
        %v738 = vld [vmem:[%s726 + $0x131] sm:$0xff]
        %v739 = vld [vmem:[%s726 + $0x161] sm:$0xff]
        %v740 = vld [vmem:[%s726 + $0x169] sm:$0xff]
        %v741 = vld [vmem:[%s726 + $0x199] sm:$0xff]
        %v742 = vld [vmem:[%s726 + $0x1a1] sm:$0xff]
        %v743 = vld [vmem:[%s726 + $0x12] sm:$0xff]
        %v744 = vld [vmem:[%s726 + $0x1a] sm:$0xff]
        %v745 = vld [vmem:[%s726 + $0x4a] sm:$0xff]
        %v746 = vld [vmem:[%s726 + $0x52] sm:$0xff]
        %v747 = vld [vmem:[%s726 + $0x82] sm:$0xff]
        %v748 = vld [vmem:[%s726 + $0x8a] sm:$0xff]
        %v749 = vld [vmem:[%s726 + $0xba] sm:$0xff]
        %v750 = vld [vmem:[%s726 + $0xc2] sm:$0xff]
        %v751 = vld [vmem:[%s726 + $0xf2] sm:$0xff]
        %v752 = vld [vmem:[%s726 + $0xfa] sm:$0xff]
        %v753 = vld [vmem:[%s726 + $0x12a] sm:$0xff]
        %v754 = vld [vmem:[%s726 + $0x132] sm:$0xff]
        %v755 = vld [vmem:[%s726 + $0x162] sm:$0xff]
        %v756 = vld [vmem:[%s726 + $0x16a] sm:$0xff]
        %v757 = vld [vmem:[%s726 + $0x19a] sm:$0xff]
        %v758 = vld [vmem:[%s726 + $0x1a2] sm:$0xff]
        %v759 = vld [vmem:[%s726 + $0x13] sm:$0xff]
        %v760 = vld [vmem:[%s726 + $0x1b] sm:$0xff]
        %v761 = vld [vmem:[%s726 + $0x4b] sm:$0xff]
        %v762 = vld [vmem:[%s726 + $0x53] sm:$0xff]
        %v763 = vld [vmem:[%s726 + $0x83] sm:$0xff]
        %v764 = vld [vmem:[%s726 + $0x8b] sm:$0xff]
        %v765 = vld [vmem:[%s726 + $0xbb] sm:$0xff]
        %v766 = vld [vmem:[%s726 + $0xc3] sm:$0xff]
        %v767 = vld [vmem:[%s726 + $0xf3] sm:$0xff]
        %v768 = vld [vmem:[%s726 + $0xfb] sm:$0xff]
        %v769 = vld [vmem:[%s726 + $0x12b] sm:$0xff]
        %v770 = vld [vmem:[%s726 + $0x133] sm:$0xff]
        %v771 = vld [vmem:[%s726 + $0x163] sm:$0xff]
        %v772 = vld [vmem:[%s726 + $0x16b] sm:$0xff]
        %v773 = vld [vmem:[%s726 + $0x19b] sm:$0xff]
        %v774 = vld [vmem:[%s726 + $0x1a3] sm:$0xff]
        %791 = vrot.lane.b32.xlu0 %v743, 8
        %v792 = vpop.permute.xlu0 %791
        %793 = vrot.lane.b32.xlu0 %v744, 8
        %v794 = vpop.permute.xlu0 %793
        %795 = vrot.lane.b32.xlu0 %v745, 8
        %v796 = vpop.permute.xlu0 %795
        %797 = vrot.lane.b32.xlu0 %v746, 8
        %v798 = vpop.permute.xlu0 %797
        %799 = vrot.lane.b32.xlu0 %v747, 8
        %v800 = vpop.permute.xlu0 %799
        %801 = vrot.lane.b32.xlu0 %v748, 8
        %v802 = vpop.permute.xlu0 %801
        %803 = vrot.lane.b32.xlu0 %v749, 8
        %v804 = vpop.permute.xlu0 %803
        %805 = vrot.lane.b32.xlu0 %v750, 8
        %v806 = vpop.permute.xlu0 %805
        %807 = vrot.lane.b32.xlu0 %v751, 8
        %v808 = vpop.permute.xlu0 %807
        %809 = vrot.lane.b32.xlu0 %v752, 8
        %v810 = vpop.permute.xlu0 %809
        %811 = vrot.lane.b32.xlu0 %v753, 8
        %v812 = vpop.permute.xlu0 %811
        %813 = vrot.lane.b32.xlu0 %v754, 8
        %v814 = vpop.permute.xlu0 %813
        %815 = vrot.lane.b32.xlu0 %v755, 8
        %v816 = vpop.permute.xlu0 %815
        %817 = vrot.lane.b32.xlu0 %v756, 8
        %v818 = vpop.permute.xlu0 %817
        %819 = vrot.lane.b32.xlu0 %v757, 8
        %v820 = vpop.permute.xlu0 %819
        %821 = vrot.lane.b32.xlu0 %v758, 8
        %v822 = vpop.permute.xlu0 %821
        %855 = vrot.lane.b32.xlu0 %v759, 16
        %v856 = vpop.permute.xlu0 %855
        %857 = vrot.lane.b32.xlu0 %v760, 16
        %v858 = vpop.permute.xlu0 %857
        %859 = vrot.lane.b32.xlu0 %v761, 16
        %v860 = vpop.permute.xlu0 %859
        %861 = vrot.lane.b32.xlu0 %v762, 16
        %v862 = vpop.permute.xlu0 %861
        %863 = vrot.lane.b32.xlu0 %v763, 16
        %v864 = vpop.permute.xlu0 %863
        %865 = vrot.lane.b32.xlu0 %v764, 16
        %v866 = vpop.permute.xlu0 %865
        %867 = vrot.lane.b32.xlu0 %v765, 16
        %v868 = vpop.permute.xlu0 %867
        %869 = vrot.lane.b32.xlu0 %v766, 16
        %v870 = vpop.permute.xlu0 %869
        %871 = vrot.lane.b32.xlu0 %v767, 16
        %v872 = vpop.permute.xlu0 %871
        %873 = vrot.lane.b32.xlu0 %v768, 16
        %v874 = vpop.permute.xlu0 %873
        %875 = vrot.lane.b32.xlu0 %v769, 16
        %v876 = vpop.permute.xlu0 %875
        %877 = vrot.lane.b32.xlu0 %v770, 16
        %v878 = vpop.permute.xlu0 %877
        %879 = vrot.lane.b32.xlu0 %v771, 16
        %v880 = vpop.permute.xlu0 %879
        %881 = vrot.lane.b32.xlu0 %v772, 16
        %v882 = vpop.permute.xlu0 %881
        %883 = vrot.lane.b32.xlu0 %v773, 16
        %v884 = vpop.permute.xlu0 %883
        %885 = vrot.lane.b32.xlu0 %v774, 16
        %v886 = vpop.permute.xlu0 %885
        %vm903 = vcmask 64512
        %v904 = vsel %vm903, %v727, %v792
        %v905 = vsel %vm903, %v728, %v794
        %v906 = vsel %vm903, %v729, %v796
        %v907 = vsel %vm903, %v730, %v798
        %v908 = vsel %vm903, %v731, %v800
        %v909 = vsel %vm903, %v732, %v802
        %v910 = vsel %vm903, %v733, %v804
        %v911 = vsel %vm903, %v734, %v806
        %v912 = vsel %vm903, %v735, %v808
        %v913 = vsel %vm903, %v736, %v810
        %v914 = vsel %vm903, %v737, %v812
        %v915 = vsel %vm903, %v738, %v814
        %v916 = vsel %vm903, %v739, %v816
        %v917 = vsel %vm903, %v740, %v818
        %v918 = vsel %vm903, %v741, %v820
        %v919 = vsel %vm903, %v742, %v822
        %vm920 = vcmask 130048
        %v921 = vsel %vm920, %v904, %v856
        %v922 = vsel %vm920, %v905, %v858
        %v923 = vsel %vm920, %v906, %v860
        %v924 = vsel %vm920, %v907, %v862
        %v925 = vsel %vm920, %v908, %v864
        %v926 = vsel %vm920, %v909, %v866
        %v927 = vsel %vm920, %v910, %v868
        %v928 = vsel %vm920, %v911, %v870
        %v929 = vsel %vm920, %v912, %v872
        %v930 = vsel %vm920, %v913, %v874
        %v931 = vsel %vm920, %v914, %v876
        %v932 = vsel %vm920, %v915, %v878
        %v933 = vsel %vm920, %v916, %v880
        %v934 = vsel %vm920, %v917, %v882
        %v935 = vsel %vm920, %v918, %v884
        %v936 = vsel %vm920, %v919, %v886
        %v937 = vpack.c.bf16 %v922, %v921
        %v938 = vpack.c.bf16 %v924, %v923
        %v939 = vpack.c.bf16 %v926, %v925
        %v940 = vpack.c.bf16 %v928, %v927
        %v941 = vpack.c.bf16 %v930, %v929
        %v942 = vpack.c.bf16 %v932, %v931
        %v943 = vpack.c.bf16 %v934, %v933
        %v944 = vpack.c.bf16 %v936, %v935
        %v945 = vld [vmem:[#allocation3] sm:$0xf]
        %v946 = vld [vmem:[#allocation3 + $0x4] sm:$0xf]
        %v947 = vld [vmem:[#allocation3 + $0x8] sm:$0xf]
        %s948 = sadd.s32 %s723, 18
        %s949 = smul.u32 %s948, 56
        %s950 = scalar_lea.vmem [#allocation2], %s949
        %v951 = vld [vmem:[%s950 + $0x11] sm:$0xff]
        %v952 = vld [vmem:[%s950 + $0x19] sm:$0xff]
        %v953 = vld [vmem:[%s950 + $0x49] sm:$0xff]
        %v954 = vld [vmem:[%s950 + $0x51] sm:$0xff]
        %v955 = vld [vmem:[%s950 + $0x81] sm:$0xff]
        %v956 = vld [vmem:[%s950 + $0x89] sm:$0xff]
        %v957 = vld [vmem:[%s950 + $0xb9] sm:$0xff]
        %v958 = vld [vmem:[%s950 + $0xc1] sm:$0xff]
        %v959 = vld [vmem:[%s950 + $0xf1] sm:$0xff]
        %v960 = vld [vmem:[%s950 + $0xf9] sm:$0xff]
        %v961 = vld [vmem:[%s950 + $0x129] sm:$0xff]
        %v962 = vld [vmem:[%s950 + $0x131] sm:$0xff]
        %v963 = vld [vmem:[%s950 + $0x161] sm:$0xff]
        %v964 = vld [vmem:[%s950 + $0x169] sm:$0xff]
        %v965 = vld [vmem:[%s950 + $0x199] sm:$0xff]
        %v966 = vld [vmem:[%s950 + $0x1a1] sm:$0xff]
        %v967 = vld [vmem:[%s950 + $0x12] sm:$0xff]
        %v968 = vld [vmem:[%s950 + $0x1a] sm:$0xff]
        %v969 = vld [vmem:[%s950 + $0x4a] sm:$0xff]
        %v970 = vld [vmem:[%s950 + $0x52] sm:$0xff]
        %v971 = vld [vmem:[%s950 + $0x82] sm:$0xff]
        %v972 = vld [vmem:[%s950 + $0x8a] sm:$0xff]
        %v973 = vld [vmem:[%s950 + $0xba] sm:$0xff]
        %v974 = vld [vmem:[%s950 + $0xc2] sm:$0xff]
        %v975 = vld [vmem:[%s950 + $0xf2] sm:$0xff]
        %v976 = vld [vmem:[%s950 + $0xfa] sm:$0xff]
        %v977 = vld [vmem:[%s950 + $0x12a] sm:$0xff]
        %v978 = vld [vmem:[%s950 + $0x132] sm:$0xff]
        %v979 = vld [vmem:[%s950 + $0x162] sm:$0xff]
        %v980 = vld [vmem:[%s950 + $0x16a] sm:$0xff]
        %v981 = vld [vmem:[%s950 + $0x19a] sm:$0xff]
        %v982 = vld [vmem:[%s950 + $0x1a2] sm:$0xff]
        %v983 = vld [vmem:[%s950 + $0x13] sm:$0xff]
        %v984 = vld [vmem:[%s950 + $0x1b] sm:$0xff]
        %v985 = vld [vmem:[%s950 + $0x4b] sm:$0xff]
        %v986 = vld [vmem:[%s950 + $0x53] sm:$0xff]
        %v987 = vld [vmem:[%s950 + $0x83] sm:$0xff]
        %v988 = vld [vmem:[%s950 + $0x8b] sm:$0xff]
        %v989 = vld [vmem:[%s950 + $0xbb] sm:$0xff]
        %v990 = vld [vmem:[%s950 + $0xc3] sm:$0xff]
        %v991 = vld [vmem:[%s950 + $0xf3] sm:$0xff]
        %v992 = vld [vmem:[%s950 + $0xfb] sm:$0xff]
        %v993 = vld [vmem:[%s950 + $0x12b] sm:$0xff]
        %v994 = vld [vmem:[%s950 + $0x133] sm:$0xff]
        %v995 = vld [vmem:[%s950 + $0x163] sm:$0xff]
        %v996 = vld [vmem:[%s950 + $0x16b] sm:$0xff]
        %v997 = vld [vmem:[%s950 + $0x19b] sm:$0xff]
        %v998 = vld [vmem:[%s950 + $0x1a3] sm:$0xff]
        %1015 = vrot.lane.b32.xlu0 %v967, 8
        %v1016 = vpop.permute.xlu0 %1015
        %1017 = vrot.lane.b32.xlu0 %v968, 8
        %v1018 = vpop.permute.xlu0 %1017
        %1019 = vrot.lane.b32.xlu0 %v969, 8
        %v1020 = vpop.permute.xlu0 %1019
        %1021 = vrot.lane.b32.xlu0 %v970, 8
        %v1022 = vpop.permute.xlu0 %1021
        %1023 = vrot.lane.b32.xlu0 %v971, 8
        %v1024 = vpop.permute.xlu0 %1023
        %1025 = vrot.lane.b32.xlu0 %v972, 8
        %v1026 = vpop.permute.xlu0 %1025
        %1027 = vrot.lane.b32.xlu0 %v973, 8
        %v1028 = vpop.permute.xlu0 %1027
        %1029 = vrot.lane.b32.xlu0 %v974, 8
        %v1030 = vpop.permute.xlu0 %1029
        %1031 = vrot.lane.b32.xlu0 %v975, 8
        %v1032 = vpop.permute.xlu0 %1031
        %1033 = vrot.lane.b32.xlu0 %v976, 8
        %v1034 = vpop.permute.xlu0 %1033
        %1035 = vrot.lane.b32.xlu0 %v977, 8
        %v1036 = vpop.permute.xlu0 %1035
        %1037 = vrot.lane.b32.xlu0 %v978, 8
        %v1038 = vpop.permute.xlu0 %1037
        %1039 = vrot.lane.b32.xlu0 %v979, 8
        %v1040 = vpop.permute.xlu0 %1039
        %1041 = vrot.lane.b32.xlu0 %v980, 8
        %v1042 = vpop.permute.xlu0 %1041
        %1043 = vrot.lane.b32.xlu0 %v981, 8
        %v1044 = vpop.permute.xlu0 %1043
        %1045 = vrot.lane.b32.xlu0 %v982, 8
        %v1046 = vpop.permute.xlu0 %1045
        %1079 = vrot.lane.b32.xlu0 %v983, 16
        %v1080 = vpop.permute.xlu0 %1079
        %1081 = vrot.lane.b32.xlu0 %v984, 16
        %v1082 = vpop.permute.xlu0 %1081
        %1083 = vrot.lane.b32.xlu0 %v985, 16
        %v1084 = vpop.permute.xlu0 %1083
        %1085 = vrot.lane.b32.xlu0 %v986, 16
        %v1086 = vpop.permute.xlu0 %1085
        %1087 = vrot.lane.b32.xlu0 %v987, 16
        %v1088 = vpop.permute.xlu0 %1087
        %1089 = vrot.lane.b32.xlu0 %v988, 16
        %v1090 = vpop.permute.xlu0 %1089
        %1091 = vrot.lane.b32.xlu0 %v989, 16
        %v1092 = vpop.permute.xlu0 %1091
        %1093 = vrot.lane.b32.xlu0 %v990, 16
        %v1094 = vpop.permute.xlu0 %1093
        %1095 = vrot.lane.b32.xlu0 %v991, 16
        %v1096 = vpop.permute.xlu0 %1095
        %1097 = vrot.lane.b32.xlu0 %v992, 16
        %v1098 = vpop.permute.xlu0 %1097
        %1099 = vrot.lane.b32.xlu0 %v993, 16
        %v1100 = vpop.permute.xlu0 %1099
        %1101 = vrot.lane.b32.xlu0 %v994, 16
        %v1102 = vpop.permute.xlu0 %1101
        %1103 = vrot.lane.b32.xlu0 %v995, 16
        %v1104 = vpop.permute.xlu0 %1103
        %1105 = vrot.lane.b32.xlu0 %v996, 16
        %v1106 = vpop.permute.xlu0 %1105
        %1107 = vrot.lane.b32.xlu0 %v997, 16
        %v1108 = vpop.permute.xlu0 %1107
        %1109 = vrot.lane.b32.xlu0 %v998, 16
        %v1110 = vpop.permute.xlu0 %1109
        %v1127 = vsel %vm903, %v951, %v1016
        %v1128 = vsel %vm903, %v952, %v1018
        %v1129 = vsel %vm903, %v953, %v1020
        %v1130 = vsel %vm903, %v954, %v1022
        %v1131 = vsel %vm903, %v955, %v1024
        %v1132 = vsel %vm903, %v956, %v1026
        %v1133 = vsel %vm903, %v957, %v1028
        %v1134 = vsel %vm903, %v958, %v1030
        %v1135 = vsel %vm903, %v959, %v1032
        %v1136 = vsel %vm903, %v960, %v1034
        %v1137 = vsel %vm903, %v961, %v1036
        %v1138 = vsel %vm903, %v962, %v1038
        %v1139 = vsel %vm903, %v963, %v1040
        %v1140 = vsel %vm903, %v964, %v1042
        %v1141 = vsel %vm903, %v965, %v1044
        %v1142 = vsel %vm903, %v966, %v1046
        %v1143 = vsel %vm920, %v1127, %v1080
        %v1144 = vsel %vm920, %v1128, %v1082
        %v1145 = vsel %vm920, %v1129, %v1084
        %v1146 = vsel %vm920, %v1130, %v1086
        %v1147 = vsel %vm920, %v1131, %v1088
        %v1148 = vsel %vm920, %v1132, %v1090
        %v1149 = vsel %vm920, %v1133, %v1092
        %v1150 = vsel %vm920, %v1134, %v1094
        %v1151 = vsel %vm920, %v1135, %v1096
        %v1152 = vsel %vm920, %v1136, %v1098
        %v1153 = vsel %vm920, %v1137, %v1100
        %v1154 = vsel %vm920, %v1138, %v1102
        %v1155 = vsel %vm920, %v1139, %v1104
        %v1156 = vsel %vm920, %v1140, %v1106
        %v1157 = vsel %vm920, %v1141, %v1108
        %v1158 = vsel %vm920, %v1142, %v1110
        %v1159 = vpack.c.bf16 %v1144, %v1143
        %v1160 = vpack.c.bf16 %v1146, %v1145
        %v1161 = vpack.c.bf16 %v1148, %v1147
        %v1162 = vpack.c.bf16 %v1150, %v1149
        %v1163 = vpack.c.bf16 %v1152, %v1151
        %v1164 = vpack.c.bf16 %v1154, %v1153
        %v1165 = vpack.c.bf16 %v1156, %v1155
        %v1166 = vpack.c.bf16 %v1158, %v1157
        %s1167 = scalar_lea.vmem [#allocation3], 12
        %v1168 = vld [vmem:[%s1167] sm:$0xf]
        %v1169 = vld [vmem:[%s1167 + $0x4] sm:$0xf]
        %v1170 = vld [vmem:[%s1167 + $0x8] sm:$0xf]
        %v1174 = vunpack.c.l.b16 %v1168
        %v1175 = vunpack.c.l.b16 %v1169
        %v1176 = vunpack.c.l.b16 %v1170
        %v1177 = vpack.c.b16 %v1175, %v1174
        %v1178 = vpack.c.b16 %v1176, %v1176
        %vm1180 = vcmask 195584
        %v1182 = vsel %vm1180, %v1159, 0
        %v1185 = vsel %vm1180, %v1160, 0
        %v1188 = vsel %vm1180, %v1161, 0
        %v1191 = vsel %vm1180, %v1162, 0
        %v1194 = vsel %vm1180, %v1163, 0
        %v1197 = vsel %vm1180, %v1164, 0
        %v1200 = vsel %vm1180, %v1165, 0
        %v1203 = vsel %vm1180, %v1166, 0
        %vm1205 = vcmask 1043456
        %v1207 = vsel %vm1205, %v1178, 0
        %1209 = vmatpush.bf16.msra.mxu0 0
        %1210 = vmatpush.bf16.msra.mxu0 0
        %1211 = vmatpush.bf16.msra.mxu0 0
        %1212 = vmatpush.bf16.msra.mxu0 0
        %1213 = vmatpush.bf16.msra.mxu0 0
        %1214 = vmatpush.bf16.msra.mxu0 0
        %1215 = vmatpush.bf16.msra.mxu0 %v1207
        %1216 = vmatpush.bf16.msra.mxu0 %v1177
        %1217 = vmatmul.bf16.gmra.mxu0 %v1182
        %v1218 = vpop.f32.mrf.mxu0
        %v1219 = vadd.f32 0.0, %v1218
        %v1220 = vpop.f32.mrf.mxu0
        %v1221 = vadd.f32 0.0, %v1220
        %1222 = vmatmul.bf16.gmra.mxu0 %v1185
        %v1223 = vpop.f32.mrf.mxu0
        %v1224 = vadd.f32 0.0, %v1223
        %v1225 = vpop.f32.mrf.mxu0
        %v1226 = vadd.f32 0.0, %v1225
        %1227 = vmatmul.bf16.gmra.mxu0 %v1188
        %v1228 = vpop.f32.mrf.mxu0
        %v1229 = vadd.f32 0.0, %v1228
        %v1230 = vpop.f32.mrf.mxu0
        %v1231 = vadd.f32 0.0, %v1230
        %1232 = vmatmul.bf16.gmra.mxu0 %v1191
        %v1233 = vpop.f32.mrf.mxu0
        %v1234 = vadd.f32 0.0, %v1233
        %v1235 = vpop.f32.mrf.mxu0
        %v1236 = vadd.f32 0.0, %v1235
        %1237 = vmatmul.bf16.gmra.mxu0 %v1194
        %v1238 = vpop.f32.mrf.mxu0
        %v1239 = vadd.f32 0.0, %v1238
        %v1240 = vpop.f32.mrf.mxu0
        %v1241 = vadd.f32 0.0, %v1240
        %1242 = vmatmul.bf16.gmra.mxu0 %v1197
        %v1243 = vpop.f32.mrf.mxu0
        %v1244 = vadd.f32 0.0, %v1243
        %v1245 = vpop.f32.mrf.mxu0
        %v1246 = vadd.f32 0.0, %v1245
        %1247 = vmatmul.bf16.gmra.mxu0 %v1200
        %v1248 = vpop.f32.mrf.mxu0
        %v1249 = vadd.f32 0.0, %v1248
        %v1250 = vpop.f32.mrf.mxu0
        %v1251 = vadd.f32 0.0, %v1250
        %1252 = vmatmul.bf16.gmra.mxu0 %v1203
        %v1253 = vpop.f32.mrf.mxu0
        %v1254 = vadd.f32 0.0, %v1253
        %v1255 = vpop.f32.mrf.mxu0
        %v1256 = vadd.f32 0.0, %v1255
        %1257 = vdwg.mxu0
        %v1261 = vunpack.c.l.b16 %v945
        %v1262 = vunpack.c.l.b16 %v946
        %v1263 = vunpack.c.l.b16 %v947
        %v1264 = vpack.c.b16 %v1262, %v1261
        %v1265 = vpack.c.b16 %v1263, %v1263
        %v1268 = vsel %vm1180, %v937, 0
        %v1271 = vsel %vm1180, %v938, 0
        %v1274 = vsel %vm1180, %v939, 0
        %v1277 = vsel %vm1180, %v940, 0
        %v1280 = vsel %vm1180, %v941, 0
        %v1283 = vsel %vm1180, %v942, 0
        %v1286 = vsel %vm1180, %v943, 0
        %v1289 = vsel %vm1180, %v944, 0
        %v1292 = vsel %vm1205, %v1265, 0
        %1294 = vmatpush.bf16.msra.mxu0 0
        %1295 = vmatpush.bf16.msra.mxu0 0
        %1296 = vmatpush.bf16.msra.mxu0 0
        %1297 = vmatpush.bf16.msra.mxu0 0
        %1298 = vmatpush.bf16.msra.mxu0 0
        %1299 = vmatpush.bf16.msra.mxu0 0
        %1300 = vmatpush.bf16.msra.mxu0 %v1292
        %1301 = vmatpush.bf16.msra.mxu0 %v1264
        %1302 = vmatmul.bf16.gmra.mxu0 %v1268
        %v1303 = vpop.f32.mrf.mxu0
        %v1304 = vadd.f32 %v1219, %v1303
        %v1305 = vpop.f32.mrf.mxu0
        %v1306 = vadd.f32 %v1221, %v1305
        %1307 = vmatmul.bf16.gmra.mxu0 %v1271
        %v1308 = vpop.f32.mrf.mxu0
        %v1309 = vadd.f32 %v1224, %v1308
        %v1310 = vpop.f32.mrf.mxu0
        %v1311 = vadd.f32 %v1226, %v1310
        %1312 = vmatmul.bf16.gmra.mxu0 %v1274
        %v1313 = vpop.f32.mrf.mxu0
        %v1314 = vadd.f32 %v1229, %v1313
        %v1315 = vpop.f32.mrf.mxu0
        %v1316 = vadd.f32 %v1231, %v1315
        %1317 = vmatmul.bf16.gmra.mxu0 %v1277
        %v1318 = vpop.f32.mrf.mxu0
        %v1319 = vadd.f32 %v1234, %v1318
        %v1320 = vpop.f32.mrf.mxu0
        %v1321 = vadd.f32 %v1236, %v1320
        %1322 = vmatmul.bf16.gmra.mxu0 %v1280
        %v1323 = vpop.f32.mrf.mxu0
        %v1324 = vadd.f32 %v1239, %v1323
        %v1325 = vpop.f32.mrf.mxu0
        %v1326 = vadd.f32 %v1241, %v1325
        %1327 = vmatmul.bf16.gmra.mxu0 %v1283
        %v1328 = vpop.f32.mrf.mxu0
        %v1329 = vadd.f32 %v1244, %v1328
        %v1330 = vpop.f32.mrf.mxu0
        %v1331 = vadd.f32 %v1246, %v1330
        %1332 = vmatmul.bf16.gmra.mxu0 %v1286
        %v1333 = vpop.f32.mrf.mxu0
        %v1334 = vadd.f32 %v1249, %v1333
        %v1335 = vpop.f32.mrf.mxu0
        %v1336 = vadd.f32 %v1251, %v1335
        %1337 = vmatmul.bf16.gmra.mxu0 %v1289
        %v1338 = vpop.f32.mrf.mxu0
        %v1339 = vadd.f32 %v1254, %v1338
        %v1340 = vpop.f32.mrf.mxu0
        %v1341 = vadd.f32 %v1256, %v1340
        %1342 = vdwg.mxu0
        %s1343 = sadd.s32 %s723, 19
        %s1344 = smul.u32 %s1343, 56
        %s1345 = scalar_lea.vmem [#allocation2], %s1344
        %v1346 = vld [vmem:[%s1345 + $0x11] sm:$0xff]
        %v1347 = vld [vmem:[%s1345 + $0x19] sm:$0xff]
        %v1348 = vld [vmem:[%s1345 + $0x49] sm:$0xff]
        %v1349 = vld [vmem:[%s1345 + $0x51] sm:$0xff]
        %v1350 = vld [vmem:[%s1345 + $0x81] sm:$0xff]
        %v1351 = vld [vmem:[%s1345 + $0x89] sm:$0xff]
        %v1352 = vld [vmem:[%s1345 + $0xb9] sm:$0xff]
        %v1353 = vld [vmem:[%s1345 + $0xc1] sm:$0xff]
        %v1354 = vld [vmem:[%s1345 + $0xf1] sm:$0xff]
        %v1355 = vld [vmem:[%s1345 + $0xf9] sm:$0xff]
        %v1356 = vld [vmem:[%s1345 + $0x129] sm:$0xff]
        %v1357 = vld [vmem:[%s1345 + $0x131] sm:$0xff]
        %v1358 = vld [vmem:[%s1345 + $0x161] sm:$0xff]
        %v1359 = vld [vmem:[%s1345 + $0x169] sm:$0xff]
        %v1360 = vld [vmem:[%s1345 + $0x199] sm:$0xff]
        %v1361 = vld [vmem:[%s1345 + $0x1a1] sm:$0xff]
        %v1362 = vld [vmem:[%s1345 + $0x12] sm:$0xff]
        %v1363 = vld [vmem:[%s1345 + $0x1a] sm:$0xff]
        %v1364 = vld [vmem:[%s1345 + $0x4a] sm:$0xff]
        %v1365 = vld [vmem:[%s1345 + $0x52] sm:$0xff]
        %v1366 = vld [vmem:[%s1345 + $0x82] sm:$0xff]
        %v1367 = vld [vmem:[%s1345 + $0x8a] sm:$0xff]
        %v1368 = vld [vmem:[%s1345 + $0xba] sm:$0xff]
        %v1369 = vld [vmem:[%s1345 + $0xc2] sm:$0xff]
        %v1370 = vld [vmem:[%s1345 + $0xf2] sm:$0xff]
        %v1371 = vld [vmem:[%s1345 + $0xfa] sm:$0xff]
        %v1372 = vld [vmem:[%s1345 + $0x12a] sm:$0xff]
        %v1373 = vld [vmem:[%s1345 + $0x132] sm:$0xff]
        %v1374 = vld [vmem:[%s1345 + $0x162] sm:$0xff]
        %v1375 = vld [vmem:[%s1345 + $0x16a] sm:$0xff]
        %v1376 = vld [vmem:[%s1345 + $0x19a] sm:$0xff]
        %v1377 = vld [vmem:[%s1345 + $0x1a2] sm:$0xff]
        %v1378 = vld [vmem:[%s1345 + $0x13] sm:$0xff]
        %v1379 = vld [vmem:[%s1345 + $0x1b] sm:$0xff]
        %v1380 = vld [vmem:[%s1345 + $0x4b] sm:$0xff]
        %v1381 = vld [vmem:[%s1345 + $0x53] sm:$0xff]
        %v1382 = vld [vmem:[%s1345 + $0x83] sm:$0xff]
        %v1383 = vld [vmem:[%s1345 + $0x8b] sm:$0xff]
        %v1384 = vld [vmem:[%s1345 + $0xbb] sm:$0xff]
        %v1385 = vld [vmem:[%s1345 + $0xc3] sm:$0xff]
        %v1386 = vld [vmem:[%s1345 + $0xf3] sm:$0xff]
        %v1387 = vld [vmem:[%s1345 + $0xfb] sm:$0xff]
        %v1388 = vld [vmem:[%s1345 + $0x12b] sm:$0xff]
        %v1389 = vld [vmem:[%s1345 + $0x133] sm:$0xff]
        %v1390 = vld [vmem:[%s1345 + $0x163] sm:$0xff]
        %v1391 = vld [vmem:[%s1345 + $0x16b] sm:$0xff]
        %v1392 = vld [vmem:[%s1345 + $0x19b] sm:$0xff]
        %v1393 = vld [vmem:[%s1345 + $0x1a3] sm:$0xff]
        %1410 = vrot.lane.b32.xlu0 %v1362, 8
        %v1411 = vpop.permute.xlu0 %1410
        %1412 = vrot.lane.b32.xlu0 %v1363, 8
        %v1413 = vpop.permute.xlu0 %1412
        %1414 = vrot.lane.b32.xlu0 %v1364, 8
        %v1415 = vpop.permute.xlu0 %1414
        %1416 = vrot.lane.b32.xlu0 %v1365, 8
        %v1417 = vpop.permute.xlu0 %1416
        %1418 = vrot.lane.b32.xlu0 %v1366, 8
        %v1419 = vpop.permute.xlu0 %1418
        %1420 = vrot.lane.b32.xlu0 %v1367, 8
        %v1421 = vpop.permute.xlu0 %1420
        %1422 = vrot.lane.b32.xlu0 %v1368, 8
        %v1423 = vpop.permute.xlu0 %1422
        %1424 = vrot.lane.b32.xlu0 %v1369, 8
        %v1425 = vpop.permute.xlu0 %1424
        %1426 = vrot.lane.b32.xlu0 %v1370, 8
        %v1427 = vpop.permute.xlu0 %1426
        %1428 = vrot.lane.b32.xlu0 %v1371, 8
        %v1429 = vpop.permute.xlu0 %1428
        %1430 = vrot.lane.b32.xlu0 %v1372, 8
        %v1431 = vpop.permute.xlu0 %1430
        %1432 = vrot.lane.b32.xlu0 %v1373, 8
        %v1433 = vpop.permute.xlu0 %1432
        %1434 = vrot.lane.b32.xlu0 %v1374, 8
        %v1435 = vpop.permute.xlu0 %1434
        %1436 = vrot.lane.b32.xlu0 %v1375, 8
        %v1437 = vpop.permute.xlu0 %1436
        %1438 = vrot.lane.b32.xlu0 %v1376, 8
        %v1439 = vpop.permute.xlu0 %1438
        %1440 = vrot.lane.b32.xlu0 %v1377, 8
        %v1441 = vpop.permute.xlu0 %1440
        %1474 = vrot.lane.b32.xlu0 %v1378, 16
        %v1475 = vpop.permute.xlu0 %1474
        %1476 = vrot.lane.b32.xlu0 %v1379, 16
        %v1477 = vpop.permute.xlu0 %1476
        %1478 = vrot.lane.b32.xlu0 %v1380, 16
        %v1479 = vpop.permute.xlu0 %1478
        %1480 = vrot.lane.b32.xlu0 %v1381, 16
        %v1481 = vpop.permute.xlu0 %1480
        %1482 = vrot.lane.b32.xlu0 %v1382, 16
        %v1483 = vpop.permute.xlu0 %1482
        %1484 = vrot.lane.b32.xlu0 %v1383, 16
        %v1485 = vpop.permute.xlu0 %1484
        %1486 = vrot.lane.b32.xlu0 %v1384, 16
        %v1487 = vpop.permute.xlu0 %1486
        %1488 = vrot.lane.b32.xlu0 %v1385, 16
        %v1489 = vpop.permute.xlu0 %1488
        %1490 = vrot.lane.b32.xlu0 %v1386, 16
        %v1491 = vpop.permute.xlu0 %1490
        %1492 = vrot.lane.b32.xlu0 %v1387, 16
        %v1493 = vpop.permute.xlu0 %1492
        %1494 = vrot.lane.b32.xlu0 %v1388, 16
        %v1495 = vpop.permute.xlu0 %1494
        %1496 = vrot.lane.b32.xlu0 %v1389, 16
        %v1497 = vpop.permute.xlu0 %1496
        %1498 = vrot.lane.b32.xlu0 %v1390, 16
        %v1499 = vpop.permute.xlu0 %1498
        %1500 = vrot.lane.b32.xlu0 %v1391, 16
        %v1501 = vpop.permute.xlu0 %1500
        %1502 = vrot.lane.b32.xlu0 %v1392, 16
        %v1503 = vpop.permute.xlu0 %1502
        %1504 = vrot.lane.b32.xlu0 %v1393, 16
        %v1505 = vpop.permute.xlu0 %1504
        %v1522 = vsel %vm903, %v1346, %v1411
        %v1523 = vsel %vm903, %v1347, %v1413
        %v1524 = vsel %vm903, %v1348, %v1415
        %v1525 = vsel %vm903, %v1349, %v1417
        %v1526 = vsel %vm903, %v1350, %v1419
        %v1527 = vsel %vm903, %v1351, %v1421
        %v1528 = vsel %vm903, %v1352, %v1423
        %v1529 = vsel %vm903, %v1353, %v1425
        %v1530 = vsel %vm903, %v1354, %v1427
        %v1531 = vsel %vm903, %v1355, %v1429
        %v1532 = vsel %vm903, %v1356, %v1431
        %v1533 = vsel %vm903, %v1357, %v1433
        %v1534 = vsel %vm903, %v1358, %v1435
        %v1535 = vsel %vm903, %v1359, %v1437
        %v1536 = vsel %vm903, %v1360, %v1439
        %v1537 = vsel %vm903, %v1361, %v1441
        %v1538 = vsel %vm920, %v1522, %v1475
        %v1539 = vsel %vm920, %v1523, %v1477
        %v1540 = vsel %vm920, %v1524, %v1479
        %v1541 = vsel %vm920, %v1525, %v1481
        %v1542 = vsel %vm920, %v1526, %v1483
        %v1543 = vsel %vm920, %v1527, %v1485
        %v1544 = vsel %vm920, %v1528, %v1487
        %v1545 = vsel %vm920, %v1529, %v1489
        %v1546 = vsel %vm920, %v1530, %v1491
        %v1547 = vsel %vm920, %v1531, %v1493
        %v1548 = vsel %vm920, %v1532, %v1495
        %v1549 = vsel %vm920, %v1533, %v1497
        %v1550 = vsel %vm920, %v1534, %v1499
        %v1551 = vsel %vm920, %v1535, %v1501
        %v1552 = vsel %vm920, %v1536, %v1503
        %v1553 = vsel %vm920, %v1537, %v1505
        %v1554 = vpack.c.bf16 %v1539, %v1538
        %v1555 = vpack.c.bf16 %v1541, %v1540
        %v1556 = vpack.c.bf16 %v1543, %v1542
        %v1557 = vpack.c.bf16 %v1545, %v1544
        %v1558 = vpack.c.bf16 %v1547, %v1546
        %v1559 = vpack.c.bf16 %v1549, %v1548
        %v1560 = vpack.c.bf16 %v1551, %v1550
        %v1561 = vpack.c.bf16 %v1553, %v1552
        %s1562 = scalar_lea.vmem [#allocation3], 24
        %v1563 = vld [vmem:[%s1562] sm:$0xf]
        %v1564 = vld [vmem:[%s1562 + $0x4] sm:$0xf]
        %v1565 = vld [vmem:[%s1562 + $0x8] sm:$0xf]
        %v1569 = vunpack.c.l.b16 %v1563
        %v1570 = vunpack.c.l.b16 %v1564
        %v1571 = vunpack.c.l.b16 %v1565
        %v1572 = vpack.c.b16 %v1570, %v1569
        %v1573 = vpack.c.b16 %v1571, %v1571
        %v1576 = vsel %vm1180, %v1554, 0
        %v1579 = vsel %vm1180, %v1555, 0
        %v1582 = vsel %vm1180, %v1556, 0
        %v1585 = vsel %vm1180, %v1557, 0
        %v1588 = vsel %vm1180, %v1558, 0
        %v1591 = vsel %vm1180, %v1559, 0
        %v1594 = vsel %vm1180, %v1560, 0
        %v1597 = vsel %vm1180, %v1561, 0
        %v1600 = vsel %vm1205, %v1573, 0
        %1602 = vmatpush.bf16.msra.mxu0 0
        %1603 = vmatpush.bf16.msra.mxu0 0
        %1604 = vmatpush.bf16.msra.mxu0 0
        %1605 = vmatpush.bf16.msra.mxu0 0
        %1606 = vmatpush.bf16.msra.mxu0 0
        %1607 = vmatpush.bf16.msra.mxu0 0
        %1608 = vmatpush.bf16.msra.mxu0 %v1600
        %1609 = vmatpush.bf16.msra.mxu0 %v1572
        %1610 = vmatmul.bf16.gmra.mxu0 %v1576
        %v1611 = vpop.f32.mrf.mxu0
        %v1612 = vadd.f32 0.0, %v1611
        %v1613 = vpop.f32.mrf.mxu0
        %v1614 = vadd.f32 0.0, %v1613
        %1615 = vmatmul.bf16.gmra.mxu0 %v1579
        %v1616 = vpop.f32.mrf.mxu0
        %v1617 = vadd.f32 0.0, %v1616
        %v1618 = vpop.f32.mrf.mxu0
        %v1619 = vadd.f32 0.0, %v1618
        %1620 = vmatmul.bf16.gmra.mxu0 %v1582
        %v1621 = vpop.f32.mrf.mxu0
        %v1622 = vadd.f32 0.0, %v1621
        %v1623 = vpop.f32.mrf.mxu0
        %v1624 = vadd.f32 0.0, %v1623
        %1625 = vmatmul.bf16.gmra.mxu0 %v1585
        %v1626 = vpop.f32.mrf.mxu0
        %v1627 = vadd.f32 0.0, %v1626
        %v1628 = vpop.f32.mrf.mxu0
        %v1629 = vadd.f32 0.0, %v1628
        %1630 = vmatmul.bf16.gmra.mxu0 %v1588
        %v1631 = vpop.f32.mrf.mxu0
        %v1632 = vadd.f32 0.0, %v1631
        %v1633 = vpop.f32.mrf.mxu0
        %v1634 = vadd.f32 0.0, %v1633
        %1635 = vmatmul.bf16.gmra.mxu0 %v1591
        %v1636 = vpop.f32.mrf.mxu0
        %v1637 = vadd.f32 0.0, %v1636
        %v1638 = vpop.f32.mrf.mxu0
        %v1639 = vadd.f32 0.0, %v1638
        %1640 = vmatmul.bf16.gmra.mxu0 %v1594
        %v1641 = vpop.f32.mrf.mxu0
        %v1642 = vadd.f32 0.0, %v1641
        %v1643 = vpop.f32.mrf.mxu0
        %v1644 = vadd.f32 0.0, %v1643
        %1645 = vmatmul.bf16.gmra.mxu0 %v1597
        %v1646 = vpop.f32.mrf.mxu0
        %v1647 = vadd.f32 0.0, %v1646
        %v1648 = vpop.f32.mrf.mxu0
        %v1649 = vadd.f32 0.0, %v1648
        %1650 = vdwg.mxu0
        %v1651 = vadd.f32 %v1304, %v1612
        %v1652 = vadd.f32 %v1306, %v1614
        %v1653 = vadd.f32 %v1309, %v1617
        %v1654 = vadd.f32 %v1311, %v1619
        %v1655 = vadd.f32 %v1314, %v1622
        %v1656 = vadd.f32 %v1316, %v1624
        %v1657 = vadd.f32 %v1319, %v1627
        %v1658 = vadd.f32 %v1321, %v1629
        %v1659 = vadd.f32 %v1324, %v1632
        %v1660 = vadd.f32 %v1326, %v1634
        %v1661 = vadd.f32 %v1329, %v1637
        %v1662 = vadd.f32 %v1331, %v1639
        %v1663 = vadd.f32 %v1334, %v1642
        %v1664 = vadd.f32 %v1336, %v1644
        %v1665 = vadd.f32 %v1339, %v1647
        %v1666 = vadd.f32 %v1341, %v1649
        %v1667 = vld [vmem:[%s2] sm:$0x1]
        %v1669 = vperm.slane %v1667, 0
        %v1671 = vadd.f32 %v1651, %v1669
        %v1672 = vadd.f32 %v1652, %v1669
        %v1673 = vadd.f32 %v1653, %v1669
        %v1674 = vadd.f32 %v1654, %v1669
        %v1675 = vadd.f32 %v1655, %v1669
        %v1676 = vadd.f32 %v1656, %v1669
        %v1677 = vadd.f32 %v1657, %v1669
        %v1678 = vadd.f32 %v1658, %v1669
        %v1679 = vadd.f32 %v1659, %v1669
        %v1680 = vadd.f32 %v1660, %v1669
        %v1681 = vadd.f32 %v1661, %v1669
        %v1682 = vadd.f32 %v1662, %v1669
        %v1683 = vadd.f32 %v1663, %v1669
        %v1684 = vadd.f32 %v1664, %v1669
        %v1685 = vadd.f32 %v1665, %v1669
        %v1686 = vadd.f32 %v1666, %v1669
        %v1687 = vmax.f32 %v1671, 0.0
        %v1688 = vmax.f32 %v1672, 0.0
        %v1689 = vmax.f32 %v1673, 0.0
        %v1690 = vmax.f32 %v1674, 0.0
        %v1691 = vmax.f32 %v1675, 0.0
        %v1692 = vmax.f32 %v1676, 0.0
        %v1693 = vmax.f32 %v1677, 0.0
        %v1694 = vmax.f32 %v1678, 0.0
        %v1695 = vmax.f32 %v1679, 0.0
        %v1696 = vmax.f32 %v1680, 0.0
        %v1697 = vmax.f32 %v1681, 0.0
        %v1698 = vmax.f32 %v1682, 0.0
        %v1699 = vmax.f32 %v1683, 0.0
        %v1700 = vmax.f32 %v1684, 0.0
        %v1701 = vmax.f32 %v1685, 0.0
        %v1702 = vmax.f32 %v1686, 0.0
        %v1703 = vpack.c.bf16 %v1688, %v1687
        %v1704 = vpack.c.bf16 %v1690, %v1689
        %v1705 = vpack.c.bf16 %v1692, %v1691
        %v1706 = vpack.c.bf16 %v1694, %v1693
        %v1707 = vpack.c.bf16 %v1696, %v1695
        %v1708 = vpack.c.bf16 %v1698, %v1697
        %v1709 = vpack.c.bf16 %v1700, %v1699
        %v1710 = vpack.c.bf16 %v1702, %v1701
        %v1711 = vld [vmem:[%s3] sm:$0xf]
        %v1712 = vld [vmem:[%s3 + $0x4] sm:$0xf]
        %v1713 = vld [vmem:[%s3 + $0x8] sm:$0xf]
        %v1714 = vld [vmem:[%s3 + $0xc] sm:$0xf]
        %v1715 = vld [vmem:[%s3 + $0x10] sm:$0xf]
        %v1716 = vld [vmem:[%s3 + $0x14] sm:$0xf]
        %v1717 = vld [vmem:[%s3 + $0x18] sm:$0xf]
        %v1718 = vld [vmem:[%s3 + $0x1c] sm:$0xf]
        %v1719 = vld [vmem:[%s3 + $0x20] sm:$0xf]
        %v1720 = vld [vmem:[%s3 + $0x24] sm:$0xf]
        %v1721 = vld [vmem:[%s3 + $0x28] sm:$0xf]
        %v1722 = vld [vmem:[%s3 + $0x2c] sm:$0xf]
        %v1723 = vld [vmem:[%s3 + $0x30] sm:$0xf]
        %v1724 = vld [vmem:[%s3 + $0x34] sm:$0xf]
        %v1725 = vld [vmem:[%s3 + $0x38] sm:$0xf]
        %v1726 = vld [vmem:[%s3 + $0x3c] sm:$0xf]
        %s1727 = sadd.s32 %s723, 12
        %s1728 = smul.u32 %s1727, 56
        %s1729 = scalar_lea.vmem [#allocation2], %s1728
        %v1730 = vld [vmem:[%s1729 + $0xc] sm:$0xff]
        %v1731 = vld [vmem:[%s1729 + $0x14] sm:$0xff]
        %v1732 = vld [vmem:[%s1729 + $0x44] sm:$0xff]
        %v1733 = vld [vmem:[%s1729 + $0x4c] sm:$0xff]
        %v1734 = vld [vmem:[%s1729 + $0x7c] sm:$0xff]
        %v1735 = vld [vmem:[%s1729 + $0x84] sm:$0xff]
        %v1736 = vld [vmem:[%s1729 + $0xb4] sm:$0xff]
        %v1737 = vld [vmem:[%s1729 + $0xbc] sm:$0xff]
        %v1738 = vld [vmem:[%s1729 + $0xec] sm:$0xff]
        %v1739 = vld [vmem:[%s1729 + $0xf4] sm:$0xff]
        %v1740 = vld [vmem:[%s1729 + $0x124] sm:$0xff]
        %v1741 = vld [vmem:[%s1729 + $0x12c] sm:$0xff]
        %v1742 = vld [vmem:[%s1729 + $0x15c] sm:$0xff]
        %v1743 = vld [vmem:[%s1729 + $0x164] sm:$0xff]
        %v1744 = vld [vmem:[%s1729 + $0x194] sm:$0xff]
        %v1745 = vld [vmem:[%s1729 + $0x19c] sm:$0xff]
        %v1746 = vld [vmem:[%s1729 + $0x12] sm:$0xff]
        %v1747 = vld [vmem:[%s1729 + $0x1a] sm:$0xff]
        %v1748 = vld [vmem:[%s1729 + $0x4a] sm:$0xff]
        %v1749 = vld [vmem:[%s1729 + $0x52] sm:$0xff]
        %v1750 = vld [vmem:[%s1729 + $0x82] sm:$0xff]
        %v1751 = vld [vmem:[%s1729 + $0x8a] sm:$0xff]
        %v1752 = vld [vmem:[%s1729 + $0xba] sm:$0xff]
        %v1753 = vld [vmem:[%s1729 + $0xc2] sm:$0xff]
        %v1754 = vld [vmem:[%s1729 + $0xf2] sm:$0xff]
        %v1755 = vld [vmem:[%s1729 + $0xfa] sm:$0xff]
        %v1756 = vld [vmem:[%s1729 + $0x12a] sm:$0xff]
        %v1757 = vld [vmem:[%s1729 + $0x132] sm:$0xff]
        %v1758 = vld [vmem:[%s1729 + $0x162] sm:$0xff]
        %v1759 = vld [vmem:[%s1729 + $0x16a] sm:$0xff]
        %v1760 = vld [vmem:[%s1729 + $0x19a] sm:$0xff]
        %v1761 = vld [vmem:[%s1729 + $0x1a2] sm:$0xff]
        %v1762 = vld [vmem:[%s1729 + $0x18] sm:$0xff]
        %v1763 = vld [vmem:[%s1729 + $0x20] sm:$0xff]
        %v1764 = vld [vmem:[%s1729 + $0x50] sm:$0xff]
        %v1765 = vld [vmem:[%s1729 + $0x58] sm:$0xff]
        %v1766 = vld [vmem:[%s1729 + $0x88] sm:$0xff]
        %v1767 = vld [vmem:[%s1729 + $0x90] sm:$0xff]
        %v1768 = vld [vmem:[%s1729 + $0xc0] sm:$0xff]
        %v1769 = vld [vmem:[%s1729 + $0xc8] sm:$0xff]
        %v1770 = vld [vmem:[%s1729 + $0xf8] sm:$0xff]
        %v1771 = vld [vmem:[%s1729 + $0x100] sm:$0xff]
        %v1772 = vld [vmem:[%s1729 + $0x130] sm:$0xff]
        %v1773 = vld [vmem:[%s1729 + $0x138] sm:$0xff]
        %v1774 = vld [vmem:[%s1729 + $0x168] sm:$0xff]
        %v1775 = vld [vmem:[%s1729 + $0x170] sm:$0xff]
        %v1776 = vld [vmem:[%s1729 + $0x1a0] sm:$0xff]
        %v1777 = vld [vmem:[%s1729 + $0x1a8] sm:$0xff]
        %1794 = vrot.lane.b32.xlu0 %v1746, 8
        %v1795 = vpop.permute.xlu0 %1794
        %1796 = vrot.lane.b32.xlu0 %v1747, 8
        %v1797 = vpop.permute.xlu0 %1796
        %1798 = vrot.lane.b32.xlu0 %v1748, 8
        %v1799 = vpop.permute.xlu0 %1798
        %1800 = vrot.lane.b32.xlu0 %v1749, 8
        %v1801 = vpop.permute.xlu0 %1800
        %1802 = vrot.lane.b32.xlu0 %v1750, 8
        %v1803 = vpop.permute.xlu0 %1802
        %1804 = vrot.lane.b32.xlu0 %v1751, 8
        %v1805 = vpop.permute.xlu0 %1804
        %1806 = vrot.lane.b32.xlu0 %v1752, 8
        %v1807 = vpop.permute.xlu0 %1806
        %1808 = vrot.lane.b32.xlu0 %v1753, 8
        %v1809 = vpop.permute.xlu0 %1808
        %1810 = vrot.lane.b32.xlu0 %v1754, 8
        %v1811 = vpop.permute.xlu0 %1810
        %1812 = vrot.lane.b32.xlu0 %v1755, 8
        %v1813 = vpop.permute.xlu0 %1812
        %1814 = vrot.lane.b32.xlu0 %v1756, 8
        %v1815 = vpop.permute.xlu0 %1814
        %1816 = vrot.lane.b32.xlu0 %v1757, 8
        %v1817 = vpop.permute.xlu0 %1816
        %1818 = vrot.lane.b32.xlu0 %v1758, 8
        %v1819 = vpop.permute.xlu0 %1818
        %1820 = vrot.lane.b32.xlu0 %v1759, 8
        %v1821 = vpop.permute.xlu0 %1820
        %1822 = vrot.lane.b32.xlu0 %v1760, 8
        %v1823 = vpop.permute.xlu0 %1822
        %1824 = vrot.lane.b32.xlu0 %v1761, 8
        %v1825 = vpop.permute.xlu0 %1824
        %1858 = vrot.lane.b32.xlu0 %v1762, 16
        %v1859 = vpop.permute.xlu0 %1858
        %1860 = vrot.lane.b32.xlu0 %v1763, 16
        %v1861 = vpop.permute.xlu0 %1860
        %1862 = vrot.lane.b32.xlu0 %v1764, 16
        %v1863 = vpop.permute.xlu0 %1862
        %1864 = vrot.lane.b32.xlu0 %v1765, 16
        %v1865 = vpop.permute.xlu0 %1864
        %1866 = vrot.lane.b32.xlu0 %v1766, 16
        %v1867 = vpop.permute.xlu0 %1866
        %1868 = vrot.lane.b32.xlu0 %v1767, 16
        %v1869 = vpop.permute.xlu0 %1868
        %1870 = vrot.lane.b32.xlu0 %v1768, 16
        %v1871 = vpop.permute.xlu0 %1870
        %1872 = vrot.lane.b32.xlu0 %v1769, 16
        %v1873 = vpop.permute.xlu0 %1872
        %1874 = vrot.lane.b32.xlu0 %v1770, 16
        %v1875 = vpop.permute.xlu0 %1874
        %1876 = vrot.lane.b32.xlu0 %v1771, 16
        %v1877 = vpop.permute.xlu0 %1876
        %1878 = vrot.lane.b32.xlu0 %v1772, 16
        %v1879 = vpop.permute.xlu0 %1878
        %1880 = vrot.lane.b32.xlu0 %v1773, 16
        %v1881 = vpop.permute.xlu0 %1880
        %1882 = vrot.lane.b32.xlu0 %v1774, 16
        %v1883 = vpop.permute.xlu0 %1882
        %1884 = vrot.lane.b32.xlu0 %v1775, 16
        %v1885 = vpop.permute.xlu0 %1884
        %1886 = vrot.lane.b32.xlu0 %v1776, 16
        %v1887 = vpop.permute.xlu0 %1886
        %1888 = vrot.lane.b32.xlu0 %v1777, 16
        %v1889 = vpop.permute.xlu0 %1888
        %v1906 = vsel %vm903, %v1730, %v1795
        %v1907 = vsel %vm903, %v1731, %v1797
        %v1908 = vsel %vm903, %v1732, %v1799
        %v1909 = vsel %vm903, %v1733, %v1801
        %v1910 = vsel %vm903, %v1734, %v1803
        %v1911 = vsel %vm903, %v1735, %v1805
        %v1912 = vsel %vm903, %v1736, %v1807
        %v1913 = vsel %vm903, %v1737, %v1809
        %v1914 = vsel %vm903, %v1738, %v1811
        %v1915 = vsel %vm903, %v1739, %v1813
        %v1916 = vsel %vm903, %v1740, %v1815
        %v1917 = vsel %vm903, %v1741, %v1817
        %v1918 = vsel %vm903, %v1742, %v1819
        %v1919 = vsel %vm903, %v1743, %v1821
        %v1920 = vsel %vm903, %v1744, %v1823
        %v1921 = vsel %vm903, %v1745, %v1825
        %v1922 = vsel %vm920, %v1906, %v1859
        %v1923 = vsel %vm920, %v1907, %v1861
        %v1924 = vsel %vm920, %v1908, %v1863
        %v1925 = vsel %vm920, %v1909, %v1865
        %v1926 = vsel %vm920, %v1910, %v1867
        %v1927 = vsel %vm920, %v1911, %v1869
        %v1928 = vsel %vm920, %v1912, %v1871
        %v1929 = vsel %vm920, %v1913, %v1873
        %v1930 = vsel %vm920, %v1914, %v1875
        %v1931 = vsel %vm920, %v1915, %v1877
        %v1932 = vsel %vm920, %v1916, %v1879
        %v1933 = vsel %vm920, %v1917, %v1881
        %v1934 = vsel %vm920, %v1918, %v1883
        %v1935 = vsel %vm920, %v1919, %v1885
        %v1936 = vsel %vm920, %v1920, %v1887
        %v1937 = vsel %vm920, %v1921, %v1889
        %v1938 = vpack.c.bf16 %v1923, %v1922
        %v1939 = vpack.c.bf16 %v1925, %v1924
        %v1940 = vpack.c.bf16 %v1927, %v1926
        %v1941 = vpack.c.bf16 %v1929, %v1928
        %v1942 = vpack.c.bf16 %v1931, %v1930
        %v1943 = vpack.c.bf16 %v1933, %v1932
        %v1944 = vpack.c.bf16 %v1935, %v1934
        %v1945 = vpack.c.bf16 %v1937, %v1936
        %s1946 = scalar_lea.vmem [#allocation3], 36
        %v1947 = vld [vmem:[%s1946] sm:$0xf]
        %v1948 = vld [vmem:[%s1946 + $0x4] sm:$0xf]
        %v1949 = vld [vmem:[%s1946 + $0x8] sm:$0xf]
        %v1950 = vld [vmem:[%s950 + $0xc] sm:$0xff]
        %v1951 = vld [vmem:[%s950 + $0x14] sm:$0xff]
        %v1952 = vld [vmem:[%s950 + $0x44] sm:$0xff]
        %v1953 = vld [vmem:[%s950 + $0x4c] sm:$0xff]
        %v1954 = vld [vmem:[%s950 + $0x7c] sm:$0xff]
        %v1955 = vld [vmem:[%s950 + $0x84] sm:$0xff]
        %v1956 = vld [vmem:[%s950 + $0xb4] sm:$0xff]
        %v1957 = vld [vmem:[%s950 + $0xbc] sm:$0xff]
        %v1958 = vld [vmem:[%s950 + $0xec] sm:$0xff]
        %v1959 = vld [vmem:[%s950 + $0xf4] sm:$0xff]
        %v1960 = vld [vmem:[%s950 + $0x124] sm:$0xff]
        %v1961 = vld [vmem:[%s950 + $0x12c] sm:$0xff]
        %v1962 = vld [vmem:[%s950 + $0x15c] sm:$0xff]
        %v1963 = vld [vmem:[%s950 + $0x164] sm:$0xff]
        %v1964 = vld [vmem:[%s950 + $0x194] sm:$0xff]
        %v1965 = vld [vmem:[%s950 + $0x19c] sm:$0xff]
        %v1966 = vld [vmem:[%s950 + $0x18] sm:$0xff]
        %v1967 = vld [vmem:[%s950 + $0x20] sm:$0xff]
        %v1968 = vld [vmem:[%s950 + $0x50] sm:$0xff]
        %v1969 = vld [vmem:[%s950 + $0x58] sm:$0xff]
        %v1970 = vld [vmem:[%s950 + $0x88] sm:$0xff]
        %v1971 = vld [vmem:[%s950 + $0x90] sm:$0xff]
        %v1972 = vld [vmem:[%s950 + $0xc0] sm:$0xff]
        %v1973 = vld [vmem:[%s950 + $0xc8] sm:$0xff]
        %v1974 = vld [vmem:[%s950 + $0xf8] sm:$0xff]
        %v1975 = vld [vmem:[%s950 + $0x100] sm:$0xff]
        %v1976 = vld [vmem:[%s950 + $0x130] sm:$0xff]
        %v1977 = vld [vmem:[%s950 + $0x138] sm:$0xff]
        %v1978 = vld [vmem:[%s950 + $0x168] sm:$0xff]
        %v1979 = vld [vmem:[%s950 + $0x170] sm:$0xff]
        %v1980 = vld [vmem:[%s950 + $0x1a0] sm:$0xff]
        %v1981 = vld [vmem:[%s950 + $0x1a8] sm:$0xff]
        %1998 = vrot.lane.b32.xlu0 %v1966, 16
        %v1999 = vpop.permute.xlu0 %1998
        %2000 = vrot.lane.b32.xlu0 %v1967, 16
        %v2001 = vpop.permute.xlu0 %2000
        %2002 = vrot.lane.b32.xlu0 %v1968, 16
        %v2003 = vpop.permute.xlu0 %2002
        %2004 = vrot.lane.b32.xlu0 %v1969, 16
        %v2005 = vpop.permute.xlu0 %2004
        %2006 = vrot.lane.b32.xlu0 %v1970, 16
        %v2007 = vpop.permute.xlu0 %2006
        %2008 = vrot.lane.b32.xlu0 %v1971, 16
        %v2009 = vpop.permute.xlu0 %2008
        %2010 = vrot.lane.b32.xlu0 %v1972, 16
        %v2011 = vpop.permute.xlu0 %2010
        %2012 = vrot.lane.b32.xlu0 %v1973, 16
        %v2013 = vpop.permute.xlu0 %2012
        %2014 = vrot.lane.b32.xlu0 %v1974, 16
        %v2015 = vpop.permute.xlu0 %2014
        %2016 = vrot.lane.b32.xlu0 %v1975, 16
        %v2017 = vpop.permute.xlu0 %2016
        %2018 = vrot.lane.b32.xlu0 %v1976, 16
        %v2019 = vpop.permute.xlu0 %2018
        %2020 = vrot.lane.b32.xlu0 %v1977, 16
        %v2021 = vpop.permute.xlu0 %2020
        %2022 = vrot.lane.b32.xlu0 %v1978, 16
        %v2023 = vpop.permute.xlu0 %2022
        %2024 = vrot.lane.b32.xlu0 %v1979, 16
        %v2025 = vpop.permute.xlu0 %2024
        %2026 = vrot.lane.b32.xlu0 %v1980, 16
        %v2027 = vpop.permute.xlu0 %2026
        %2028 = vrot.lane.b32.xlu0 %v1981, 16
        %v2029 = vpop.permute.xlu0 %2028
        %v2046 = vsel %vm903, %v1950, %v1016
        %v2047 = vsel %vm903, %v1951, %v1018
        %v2048 = vsel %vm903, %v1952, %v1020
        %v2049 = vsel %vm903, %v1953, %v1022
        %v2050 = vsel %vm903, %v1954, %v1024
        %v2051 = vsel %vm903, %v1955, %v1026
        %v2052 = vsel %vm903, %v1956, %v1028
        %v2053 = vsel %vm903, %v1957, %v1030
        %v2054 = vsel %vm903, %v1958, %v1032
        %v2055 = vsel %vm903, %v1959, %v1034
        %v2056 = vsel %vm903, %v1960, %v1036
        %v2057 = vsel %vm903, %v1961, %v1038
        %v2058 = vsel %vm903, %v1962, %v1040
        %v2059 = vsel %vm903, %v1963, %v1042
        %v2060 = vsel %vm903, %v1964, %v1044
        %v2061 = vsel %vm903, %v1965, %v1046
        %v2062 = vsel %vm920, %v2046, %v1999
        %v2063 = vsel %vm920, %v2047, %v2001
        %v2064 = vsel %vm920, %v2048, %v2003
        %v2065 = vsel %vm920, %v2049, %v2005
        %v2066 = vsel %vm920, %v2050, %v2007
        %v2067 = vsel %vm920, %v2051, %v2009
        %v2068 = vsel %vm920, %v2052, %v2011
        %v2069 = vsel %vm920, %v2053, %v2013
        %v2070 = vsel %vm920, %v2054, %v2015
        %v2071 = vsel %vm920, %v2055, %v2017
        %v2072 = vsel %vm920, %v2056, %v2019
        %v2073 = vsel %vm920, %v2057, %v2021
        %v2074 = vsel %vm920, %v2058, %v2023
        %v2075 = vsel %vm920, %v2059, %v2025
        %v2076 = vsel %vm920, %v2060, %v2027
        %v2077 = vsel %vm920, %v2061, %v2029
        %v2078 = vpack.c.bf16 %v2063, %v2062
        %v2079 = vpack.c.bf16 %v2065, %v2064
        %v2080 = vpack.c.bf16 %v2067, %v2066
        %v2081 = vpack.c.bf16 %v2069, %v2068
        %v2082 = vpack.c.bf16 %v2071, %v2070
        %v2083 = vpack.c.bf16 %v2073, %v2072
        %v2084 = vpack.c.bf16 %v2075, %v2074
        %v2085 = vpack.c.bf16 %v2077, %v2076
        %s2086 = scalar_lea.vmem [#allocation3], 48
        %v2087 = vld [vmem:[%s2086] sm:$0xf]
        %v2088 = vld [vmem:[%s2086 + $0x4] sm:$0xf]
        %v2089 = vld [vmem:[%s2086 + $0x8] sm:$0xf]
        %v2093 = vunpack.c.l.b16 %v2087
        %v2094 = vunpack.c.l.b16 %v2088
        %v2095 = vunpack.c.l.b16 %v2089
        %v2096 = vpack.c.b16 %v2094, %v2093
        %v2097 = vpack.c.b16 %v2095, %v2095
        %v2100 = vsel %vm1180, %v2078, 0
        %v2103 = vsel %vm1180, %v2079, 0
        %v2106 = vsel %vm1180, %v2080, 0
        %v2109 = vsel %vm1180, %v2081, 0
        %v2112 = vsel %vm1180, %v2082, 0
        %v2115 = vsel %vm1180, %v2083, 0
        %v2118 = vsel %vm1180, %v2084, 0
        %v2121 = vsel %vm1180, %v2085, 0
        %v2124 = vsel %vm1205, %v2097, 0
        %2126 = vmatpush.bf16.msra.mxu0 0
        %2127 = vmatpush.bf16.msra.mxu0 0
        %2128 = vmatpush.bf16.msra.mxu0 0
        %2129 = vmatpush.bf16.msra.mxu0 0
        %2130 = vmatpush.bf16.msra.mxu0 0
        %2131 = vmatpush.bf16.msra.mxu0 0
        %2132 = vmatpush.bf16.msra.mxu0 %v2124
        %2133 = vmatpush.bf16.msra.mxu0 %v2096
        %2134 = vmatmul.bf16.gmra.mxu0 %v2100
        %v2135 = vpop.f32.mrf.mxu0
        %v2136 = vadd.f32 0.0, %v2135
        %v2137 = vpop.f32.mrf.mxu0
        %v2138 = vadd.f32 0.0, %v2137
        %2139 = vmatmul.bf16.gmra.mxu0 %v2103
        %v2140 = vpop.f32.mrf.mxu0
        %v2141 = vadd.f32 0.0, %v2140
        %v2142 = vpop.f32.mrf.mxu0
        %v2143 = vadd.f32 0.0, %v2142
        %2144 = vmatmul.bf16.gmra.mxu0 %v2106
        %v2145 = vpop.f32.mrf.mxu0
        %v2146 = vadd.f32 0.0, %v2145
        %v2147 = vpop.f32.mrf.mxu0
        %v2148 = vadd.f32 0.0, %v2147
        %2149 = vmatmul.bf16.gmra.mxu0 %v2109
        %v2150 = vpop.f32.mrf.mxu0
        %v2151 = vadd.f32 0.0, %v2150
        %v2152 = vpop.f32.mrf.mxu0
        %v2153 = vadd.f32 0.0, %v2152
        %2154 = vmatmul.bf16.gmra.mxu0 %v2112
        %v2155 = vpop.f32.mrf.mxu0
        %v2156 = vadd.f32 0.0, %v2155
        %v2157 = vpop.f32.mrf.mxu0
        %v2158 = vadd.f32 0.0, %v2157
        %2159 = vmatmul.bf16.gmra.mxu0 %v2115
        %v2160 = vpop.f32.mrf.mxu0
        %v2161 = vadd.f32 0.0, %v2160
        %v2162 = vpop.f32.mrf.mxu0
        %v2163 = vadd.f32 0.0, %v2162
        %2164 = vmatmul.bf16.gmra.mxu0 %v2118
        %v2165 = vpop.f32.mrf.mxu0
        %v2166 = vadd.f32 0.0, %v2165
        %v2167 = vpop.f32.mrf.mxu0
        %v2168 = vadd.f32 0.0, %v2167
        %2169 = vmatmul.bf16.gmra.mxu0 %v2121
        %v2170 = vpop.f32.mrf.mxu0
        %v2171 = vadd.f32 0.0, %v2170
        %v2172 = vpop.f32.mrf.mxu0
        %v2173 = vadd.f32 0.0, %v2172
        %2174 = vdwg.mxu0
        %v2178 = vunpack.c.l.b16 %v1947
        %v2179 = vunpack.c.l.b16 %v1948
        %v2180 = vunpack.c.l.b16 %v1949
        %v2181 = vpack.c.b16 %v2179, %v2178
        %v2182 = vpack.c.b16 %v2180, %v2180
        %v2185 = vsel %vm1180, %v1938, 0
        %v2188 = vsel %vm1180, %v1939, 0
        %v2191 = vsel %vm1180, %v1940, 0
        %v2194 = vsel %vm1180, %v1941, 0
        %v2197 = vsel %vm1180, %v1942, 0
        %v2200 = vsel %vm1180, %v1943, 0
        %v2203 = vsel %vm1180, %v1944, 0
        %v2206 = vsel %vm1180, %v1945, 0
        %v2209 = vsel %vm1205, %v2182, 0
        %2211 = vmatpush.bf16.msra.mxu0 0
        %2212 = vmatpush.bf16.msra.mxu0 0
        %2213 = vmatpush.bf16.msra.mxu0 0
        %2214 = vmatpush.bf16.msra.mxu0 0
        %2215 = vmatpush.bf16.msra.mxu0 0
        %2216 = vmatpush.bf16.msra.mxu0 0
        %2217 = vmatpush.bf16.msra.mxu0 %v2209
        %2218 = vmatpush.bf16.msra.mxu0 %v2181
        %2219 = vmatmul.bf16.gmra.mxu0 %v2185
        %v2220 = vpop.f32.mrf.mxu0
        %v2221 = vadd.f32 %v2136, %v2220
        %v2222 = vpop.f32.mrf.mxu0
        %v2223 = vadd.f32 %v2138, %v2222
        %2224 = vmatmul.bf16.gmra.mxu0 %v2188
        %v2225 = vpop.f32.mrf.mxu0
        %v2226 = vadd.f32 %v2141, %v2225
        %v2227 = vpop.f32.mrf.mxu0
        %v2228 = vadd.f32 %v2143, %v2227
        %2229 = vmatmul.bf16.gmra.mxu0 %v2191
        %v2230 = vpop.f32.mrf.mxu0
        %v2231 = vadd.f32 %v2146, %v2230
        %v2232 = vpop.f32.mrf.mxu0
        %v2233 = vadd.f32 %v2148, %v2232
        %2234 = vmatmul.bf16.gmra.mxu0 %v2194
        %v2235 = vpop.f32.mrf.mxu0
        %v2236 = vadd.f32 %v2151, %v2235
        %v2237 = vpop.f32.mrf.mxu0
        %v2238 = vadd.f32 %v2153, %v2237
        %2239 = vmatmul.bf16.gmra.mxu0 %v2197
        %v2240 = vpop.f32.mrf.mxu0
        %v2241 = vadd.f32 %v2156, %v2240
        %v2242 = vpop.f32.mrf.mxu0
        %v2243 = vadd.f32 %v2158, %v2242
        %2244 = vmatmul.bf16.gmra.mxu0 %v2200
        %v2245 = vpop.f32.mrf.mxu0
        %v2246 = vadd.f32 %v2161, %v2245
        %v2247 = vpop.f32.mrf.mxu0
        %v2248 = vadd.f32 %v2163, %v2247
        %2249 = vmatmul.bf16.gmra.mxu0 %v2203
        %v2250 = vpop.f32.mrf.mxu0
        %v2251 = vadd.f32 %v2166, %v2250
        %v2252 = vpop.f32.mrf.mxu0
        %v2253 = vadd.f32 %v2168, %v2252
        %2254 = vmatmul.bf16.gmra.mxu0 %v2206
        %v2255 = vpop.f32.mrf.mxu0
        %v2256 = vadd.f32 %v2171, %v2255
        %v2257 = vpop.f32.mrf.mxu0
        %v2258 = vadd.f32 %v2173, %v2257
        %2259 = vdwg.mxu0
        %s2260 = sadd.s32 %s723, 24
        %s2261 = smul.u32 %s2260, 56
        %s2262 = scalar_lea.vmem [#allocation2], %s2261
        %v2263 = vld [vmem:[%s2262 + $0xc] sm:$0xff]
        %v2264 = vld [vmem:[%s2262 + $0x14] sm:$0xff]
        %v2265 = vld [vmem:[%s2262 + $0x44] sm:$0xff]
        %v2266 = vld [vmem:[%s2262 + $0x4c] sm:$0xff]
        %v2267 = vld [vmem:[%s2262 + $0x7c] sm:$0xff]
        %v2268 = vld [vmem:[%s2262 + $0x84] sm:$0xff]
        %v2269 = vld [vmem:[%s2262 + $0xb4] sm:$0xff]
        %v2270 = vld [vmem:[%s2262 + $0xbc] sm:$0xff]
        %v2271 = vld [vmem:[%s2262 + $0xec] sm:$0xff]
        %v2272 = vld [vmem:[%s2262 + $0xf4] sm:$0xff]
        %v2273 = vld [vmem:[%s2262 + $0x124] sm:$0xff]
        %v2274 = vld [vmem:[%s2262 + $0x12c] sm:$0xff]
        %v2275 = vld [vmem:[%s2262 + $0x15c] sm:$0xff]
        %v2276 = vld [vmem:[%s2262 + $0x164] sm:$0xff]
        %v2277 = vld [vmem:[%s2262 + $0x194] sm:$0xff]
        %v2278 = vld [vmem:[%s2262 + $0x19c] sm:$0xff]
        %v2279 = vld [vmem:[%s2262 + $0x12] sm:$0xff]
        %v2280 = vld [vmem:[%s2262 + $0x1a] sm:$0xff]
        %v2281 = vld [vmem:[%s2262 + $0x4a] sm:$0xff]
        %v2282 = vld [vmem:[%s2262 + $0x52] sm:$0xff]
        %v2283 = vld [vmem:[%s2262 + $0x82] sm:$0xff]
        %v2284 = vld [vmem:[%s2262 + $0x8a] sm:$0xff]
        %v2285 = vld [vmem:[%s2262 + $0xba] sm:$0xff]
        %v2286 = vld [vmem:[%s2262 + $0xc2] sm:$0xff]
        %v2287 = vld [vmem:[%s2262 + $0xf2] sm:$0xff]
        %v2288 = vld [vmem:[%s2262 + $0xfa] sm:$0xff]
        %v2289 = vld [vmem:[%s2262 + $0x12a] sm:$0xff]
        %v2290 = vld [vmem:[%s2262 + $0x132] sm:$0xff]
        %v2291 = vld [vmem:[%s2262 + $0x162] sm:$0xff]
        %v2292 = vld [vmem:[%s2262 + $0x16a] sm:$0xff]
        %v2293 = vld [vmem:[%s2262 + $0x19a] sm:$0xff]
        %v2294 = vld [vmem:[%s2262 + $0x1a2] sm:$0xff]
        %v2295 = vld [vmem:[%s2262 + $0x18] sm:$0xff]
        %v2296 = vld [vmem:[%s2262 + $0x20] sm:$0xff]
        %v2297 = vld [vmem:[%s2262 + $0x50] sm:$0xff]
        %v2298 = vld [vmem:[%s2262 + $0x58] sm:$0xff]
        %v2299 = vld [vmem:[%s2262 + $0x88] sm:$0xff]
        %v2300 = vld [vmem:[%s2262 + $0x90] sm:$0xff]
        %v2301 = vld [vmem:[%s2262 + $0xc0] sm:$0xff]
        %v2302 = vld [vmem:[%s2262 + $0xc8] sm:$0xff]
        %v2303 = vld [vmem:[%s2262 + $0xf8] sm:$0xff]
        %v2304 = vld [vmem:[%s2262 + $0x100] sm:$0xff]
        %v2305 = vld [vmem:[%s2262 + $0x130] sm:$0xff]
        %v2306 = vld [vmem:[%s2262 + $0x138] sm:$0xff]
        %v2307 = vld [vmem:[%s2262 + $0x168] sm:$0xff]
        %v2308 = vld [vmem:[%s2262 + $0x170] sm:$0xff]
        %v2309 = vld [vmem:[%s2262 + $0x1a0] sm:$0xff]
        %v2310 = vld [vmem:[%s2262 + $0x1a8] sm:$0xff]
        %2327 = vrot.lane.b32.xlu0 %v2279, 8
        %v2328 = vpop.permute.xlu0 %2327
        %2329 = vrot.lane.b32.xlu0 %v2280, 8
        %v2330 = vpop.permute.xlu0 %2329
        %2331 = vrot.lane.b32.xlu0 %v2281, 8
        %v2332 = vpop.permute.xlu0 %2331
        %2333 = vrot.lane.b32.xlu0 %v2282, 8
        %v2334 = vpop.permute.xlu0 %2333
        %2335 = vrot.lane.b32.xlu0 %v2283, 8
        %v2336 = vpop.permute.xlu0 %2335
        %2337 = vrot.lane.b32.xlu0 %v2284, 8
        %v2338 = vpop.permute.xlu0 %2337
        %2339 = vrot.lane.b32.xlu0 %v2285, 8
        %v2340 = vpop.permute.xlu0 %2339
        %2341 = vrot.lane.b32.xlu0 %v2286, 8
        %v2342 = vpop.permute.xlu0 %2341
        %2343 = vrot.lane.b32.xlu0 %v2287, 8
        %v2344 = vpop.permute.xlu0 %2343
        %2345 = vrot.lane.b32.xlu0 %v2288, 8
        %v2346 = vpop.permute.xlu0 %2345
        %2347 = vrot.lane.b32.xlu0 %v2289, 8
        %v2348 = vpop.permute.xlu0 %2347
        %2349 = vrot.lane.b32.xlu0 %v2290, 8
        %v2350 = vpop.permute.xlu0 %2349
        %2351 = vrot.lane.b32.xlu0 %v2291, 8
        %v2352 = vpop.permute.xlu0 %2351
        %2353 = vrot.lane.b32.xlu0 %v2292, 8
        %v2354 = vpop.permute.xlu0 %2353
        %2355 = vrot.lane.b32.xlu0 %v2293, 8
        %v2356 = vpop.permute.xlu0 %2355
        %2357 = vrot.lane.b32.xlu0 %v2294, 8
        %v2358 = vpop.permute.xlu0 %2357
        %2391 = vrot.lane.b32.xlu0 %v2295, 16
        %v2392 = vpop.permute.xlu0 %2391
        %2393 = vrot.lane.b32.xlu0 %v2296, 16
        %v2394 = vpop.permute.xlu0 %2393
        %2395 = vrot.lane.b32.xlu0 %v2297, 16
        %v2396 = vpop.permute.xlu0 %2395
        %2397 = vrot.lane.b32.xlu0 %v2298, 16
        %v2398 = vpop.permute.xlu0 %2397
        %2399 = vrot.lane.b32.xlu0 %v2299, 16
        %v2400 = vpop.permute.xlu0 %2399
        %2401 = vrot.lane.b32.xlu0 %v2300, 16
        %v2402 = vpop.permute.xlu0 %2401
        %2403 = vrot.lane.b32.xlu0 %v2301, 16
        %v2404 = vpop.permute.xlu0 %2403
        %2405 = vrot.lane.b32.xlu0 %v2302, 16
        %v2406 = vpop.permute.xlu0 %2405
        %2407 = vrot.lane.b32.xlu0 %v2303, 16
        %v2408 = vpop.permute.xlu0 %2407
        %2409 = vrot.lane.b32.xlu0 %v2304, 16
        %v2410 = vpop.permute.xlu0 %2409
        %2411 = vrot.lane.b32.xlu0 %v2305, 16
        %v2412 = vpop.permute.xlu0 %2411
        %2413 = vrot.lane.b32.xlu0 %v2306, 16
        %v2414 = vpop.permute.xlu0 %2413
        %2415 = vrot.lane.b32.xlu0 %v2307, 16
        %v2416 = vpop.permute.xlu0 %2415
        %2417 = vrot.lane.b32.xlu0 %v2308, 16
        %v2418 = vpop.permute.xlu0 %2417
        %2419 = vrot.lane.b32.xlu0 %v2309, 16
        %v2420 = vpop.permute.xlu0 %2419
        %2421 = vrot.lane.b32.xlu0 %v2310, 16
        %v2422 = vpop.permute.xlu0 %2421
        %v2439 = vsel %vm903, %v2263, %v2328
        %v2440 = vsel %vm903, %v2264, %v2330
        %v2441 = vsel %vm903, %v2265, %v2332
        %v2442 = vsel %vm903, %v2266, %v2334
        %v2443 = vsel %vm903, %v2267, %v2336
        %v2444 = vsel %vm903, %v2268, %v2338
        %v2445 = vsel %vm903, %v2269, %v2340
        %v2446 = vsel %vm903, %v2270, %v2342
        %v2447 = vsel %vm903, %v2271, %v2344
        %v2448 = vsel %vm903, %v2272, %v2346
        %v2449 = vsel %vm903, %v2273, %v2348
        %v2450 = vsel %vm903, %v2274, %v2350
        %v2451 = vsel %vm903, %v2275, %v2352
        %v2452 = vsel %vm903, %v2276, %v2354
        %v2453 = vsel %vm903, %v2277, %v2356
        %v2454 = vsel %vm903, %v2278, %v2358
        %v2455 = vsel %vm920, %v2439, %v2392
        %v2456 = vsel %vm920, %v2440, %v2394
        %v2457 = vsel %vm920, %v2441, %v2396
        %v2458 = vsel %vm920, %v2442, %v2398
        %v2459 = vsel %vm920, %v2443, %v2400
        %v2460 = vsel %vm920, %v2444, %v2402
        %v2461 = vsel %vm920, %v2445, %v2404
        %v2462 = vsel %vm920, %v2446, %v2406
        %v2463 = vsel %vm920, %v2447, %v2408
        %v2464 = vsel %vm920, %v2448, %v2410
        %v2465 = vsel %vm920, %v2449, %v2412
        %v2466 = vsel %vm920, %v2450, %v2414
        %v2467 = vsel %vm920, %v2451, %v2416
        %v2468 = vsel %vm920, %v2452, %v2418
        %v2469 = vsel %vm920, %v2453, %v2420
        %v2470 = vsel %vm920, %v2454, %v2422
        %v2471 = vpack.c.bf16 %v2456, %v2455
        %v2472 = vpack.c.bf16 %v2458, %v2457
        %v2473 = vpack.c.bf16 %v2460, %v2459
        %v2474 = vpack.c.bf16 %v2462, %v2461
        %v2475 = vpack.c.bf16 %v2464, %v2463
        %v2476 = vpack.c.bf16 %v2466, %v2465
        %v2477 = vpack.c.bf16 %v2468, %v2467
        %v2478 = vpack.c.bf16 %v2470, %v2469
        %s2479 = scalar_lea.vmem [#allocation3], 60
        %v2480 = vld [vmem:[%s2479] sm:$0xf]
        %v2481 = vld [vmem:[%s2479 + $0x4] sm:$0xf]
        %v2482 = vld [vmem:[%s2479 + $0x8] sm:$0xf]
        %v2486 = vunpack.c.l.b16 %v2480
        %v2487 = vunpack.c.l.b16 %v2481
        %v2488 = vunpack.c.l.b16 %v2482
        %v2489 = vpack.c.b16 %v2487, %v2486
        %v2490 = vpack.c.b16 %v2488, %v2488
        %v2493 = vsel %vm1180, %v2471, 0
        %v2496 = vsel %vm1180, %v2472, 0
        %v2499 = vsel %vm1180, %v2473, 0
        %v2502 = vsel %vm1180, %v2474, 0
        %v2505 = vsel %vm1180, %v2475, 0
        %v2508 = vsel %vm1180, %v2476, 0
        %v2511 = vsel %vm1180, %v2477, 0
        %v2514 = vsel %vm1180, %v2478, 0
        %v2517 = vsel %vm1205, %v2490, 0
        %2519 = vmatpush.bf16.msra.mxu0 0
        %2520 = vmatpush.bf16.msra.mxu0 0
        %2521 = vmatpush.bf16.msra.mxu0 0
        %2522 = vmatpush.bf16.msra.mxu0 0
        %2523 = vmatpush.bf16.msra.mxu0 0
        %2524 = vmatpush.bf16.msra.mxu0 0
        %2525 = vmatpush.bf16.msra.mxu0 %v2517
        %2526 = vmatpush.bf16.msra.mxu0 %v2489
        %2527 = vmatmul.bf16.gmra.mxu0 %v2493
        %v2528 = vpop.f32.mrf.mxu0
        %v2529 = vadd.f32 0.0, %v2528
        %v2530 = vpop.f32.mrf.mxu0
        %v2531 = vadd.f32 0.0, %v2530
        %2532 = vmatmul.bf16.gmra.mxu0 %v2496
        %v2533 = vpop.f32.mrf.mxu0
        %v2534 = vadd.f32 0.0, %v2533
        %v2535 = vpop.f32.mrf.mxu0
        %v2536 = vadd.f32 0.0, %v2535
        %2537 = vmatmul.bf16.gmra.mxu0 %v2499
        %v2538 = vpop.f32.mrf.mxu0
        %v2539 = vadd.f32 0.0, %v2538
        %v2540 = vpop.f32.mrf.mxu0
        %v2541 = vadd.f32 0.0, %v2540
        %2542 = vmatmul.bf16.gmra.mxu0 %v2502
        %v2543 = vpop.f32.mrf.mxu0
        %v2544 = vadd.f32 0.0, %v2543
        %v2545 = vpop.f32.mrf.mxu0
        %v2546 = vadd.f32 0.0, %v2545
        %2547 = vmatmul.bf16.gmra.mxu0 %v2505
        %v2548 = vpop.f32.mrf.mxu0
        %v2549 = vadd.f32 0.0, %v2548
        %v2550 = vpop.f32.mrf.mxu0
        %v2551 = vadd.f32 0.0, %v2550
        %2552 = vmatmul.bf16.gmra.mxu0 %v2508
        %v2553 = vpop.f32.mrf.mxu0
        %v2554 = vadd.f32 0.0, %v2553
        %v2555 = vpop.f32.mrf.mxu0
        %v2556 = vadd.f32 0.0, %v2555
        %2557 = vmatmul.bf16.gmra.mxu0 %v2511
        %v2558 = vpop.f32.mrf.mxu0
        %v2559 = vadd.f32 0.0, %v2558
        %v2560 = vpop.f32.mrf.mxu0
        %v2561 = vadd.f32 0.0, %v2560
        %2562 = vmatmul.bf16.gmra.mxu0 %v2514
        %v2563 = vpop.f32.mrf.mxu0
        %v2564 = vadd.f32 0.0, %v2563
        %v2565 = vpop.f32.mrf.mxu0
        %v2566 = vadd.f32 0.0, %v2565
        %2567 = vdwg.mxu0
        %v2568 = vadd.f32 %v2221, %v2529
        %v2569 = vadd.f32 %v2223, %v2531
        %v2570 = vadd.f32 %v2226, %v2534
        %v2571 = vadd.f32 %v2228, %v2536
        %v2572 = vadd.f32 %v2231, %v2539
        %v2573 = vadd.f32 %v2233, %v2541
        %v2574 = vadd.f32 %v2236, %v2544
        %v2575 = vadd.f32 %v2238, %v2546
        %v2576 = vadd.f32 %v2241, %v2549
        %v2577 = vadd.f32 %v2243, %v2551
        %v2578 = vadd.f32 %v2246, %v2554
        %v2579 = vadd.f32 %v2248, %v2556
        %v2580 = vadd.f32 %v2251, %v2559
        %v2581 = vadd.f32 %v2253, %v2561
        %v2582 = vadd.f32 %v2256, %v2564
        %v2583 = vadd.f32 %v2258, %v2566
        %s2584 = scalar_lea.vmem %s2, 1
        %v2585 = vld [vmem:[%s2584] sm:$0x1]
        %v2587 = vperm.slane %v2585, 0
        %v2589 = vadd.f32 %v2568, %v2587
        %v2590 = vadd.f32 %v2569, %v2587
        %v2591 = vadd.f32 %v2570, %v2587
        %v2592 = vadd.f32 %v2571, %v2587
        %v2593 = vadd.f32 %v2572, %v2587
        %v2594 = vadd.f32 %v2573, %v2587
        %v2595 = vadd.f32 %v2574, %v2587
        %v2596 = vadd.f32 %v2575, %v2587
        %v2597 = vadd.f32 %v2576, %v2587
        %v2598 = vadd.f32 %v2577, %v2587
        %v2599 = vadd.f32 %v2578, %v2587
        %v2600 = vadd.f32 %v2579, %v2587
        %v2601 = vadd.f32 %v2580, %v2587
        %v2602 = vadd.f32 %v2581, %v2587
        %v2603 = vadd.f32 %v2582, %v2587
        %v2604 = vadd.f32 %v2583, %v2587
        %v2605 = vmax.f32 %v2589, 0.0
        %v2606 = vmax.f32 %v2590, 0.0
        %v2607 = vmax.f32 %v2591, 0.0
        %v2608 = vmax.f32 %v2592, 0.0
        %v2609 = vmax.f32 %v2593, 0.0
        %v2610 = vmax.f32 %v2594, 0.0
        %v2611 = vmax.f32 %v2595, 0.0
        %v2612 = vmax.f32 %v2596, 0.0
        %v2613 = vmax.f32 %v2597, 0.0
        %v2614 = vmax.f32 %v2598, 0.0
        %v2615 = vmax.f32 %v2599, 0.0
        %v2616 = vmax.f32 %v2600, 0.0
        %v2617 = vmax.f32 %v2601, 0.0
        %v2618 = vmax.f32 %v2602, 0.0
        %v2619 = vmax.f32 %v2603, 0.0
        %v2620 = vmax.f32 %v2604, 0.0
        %v2621 = vpack.c.bf16 %v2606, %v2605
        %v2622 = vpack.c.bf16 %v2608, %v2607
        %v2623 = vpack.c.bf16 %v2610, %v2609
        %v2624 = vpack.c.bf16 %v2612, %v2611
        %v2625 = vpack.c.bf16 %v2614, %v2613
        %v2626 = vpack.c.bf16 %v2616, %v2615
        %v2627 = vpack.c.bf16 %v2618, %v2617
        %v2628 = vpack.c.bf16 %v2620, %v2619
        %s2629 = scalar_lea.vmem %s3, 64
        %v2630 = vld [vmem:[%s2629] sm:$0xf]
        %v2631 = vld [vmem:[%s2629 + $0x4] sm:$0xf]
        %v2632 = vld [vmem:[%s2629 + $0x8] sm:$0xf]
        %v2633 = vld [vmem:[%s2629 + $0xc] sm:$0xf]
        %v2634 = vld [vmem:[%s2629 + $0x10] sm:$0xf]
        %v2635 = vld [vmem:[%s2629 + $0x14] sm:$0xf]
        %v2636 = vld [vmem:[%s2629 + $0x18] sm:$0xf]
        %v2637 = vld [vmem:[%s2629 + $0x1c] sm:$0xf]
        %v2638 = vld [vmem:[%s2629 + $0x20] sm:$0xf]
        %v2639 = vld [vmem:[%s2629 + $0x24] sm:$0xf]
        %v2640 = vld [vmem:[%s2629 + $0x28] sm:$0xf]
        %v2641 = vld [vmem:[%s2629 + $0x2c] sm:$0xf]
        %v2642 = vld [vmem:[%s2629 + $0x30] sm:$0xf]
        %v2643 = vld [vmem:[%s2629 + $0x34] sm:$0xf]
        %v2644 = vld [vmem:[%s2629 + $0x38] sm:$0xf]
        %v2645 = vld [vmem:[%s2629 + $0x3c] sm:$0xf]
        %v2662 = vunpack.c.l.b16 %v2630
        %v2663 = vunpack.c.l.b16 %v2631
        %v2664 = vunpack.c.l.b16 %v2632
        %v2665 = vunpack.c.l.b16 %v2633
        %v2666 = vunpack.c.l.b16 %v2634
        %v2667 = vunpack.c.l.b16 %v2635
        %v2668 = vunpack.c.l.b16 %v2636
        %v2669 = vunpack.c.l.b16 %v2637
        %v2670 = vunpack.c.l.b16 %v2638
        %v2671 = vunpack.c.l.b16 %v2639
        %v2672 = vunpack.c.l.b16 %v2640
        %v2673 = vunpack.c.l.b16 %v2641
        %v2674 = vunpack.c.l.b16 %v2642
        %v2675 = vunpack.c.l.b16 %v2643
        %v2676 = vunpack.c.l.b16 %v2644
        %v2677 = vunpack.c.l.b16 %v2645
        %v2678 = vpack.c.b16 %v2663, %v2662
        %v2679 = vpack.c.b16 %v2665, %v2664
        %v2680 = vpack.c.b16 %v2667, %v2666
        %v2681 = vpack.c.b16 %v2669, %v2668
        %v2682 = vpack.c.b16 %v2671, %v2670
        %v2683 = vpack.c.b16 %v2673, %v2672
        %v2684 = vpack.c.b16 %v2675, %v2674
        %v2685 = vpack.c.b16 %v2677, %v2676
        %2694 = vmatpush.bf16.msra.mxu0 %v2685
        %2695 = vmatpush.bf16.msra.mxu0 %v2684
        %2696 = vmatpush.bf16.msra.mxu0 %v2683
        %2697 = vmatpush.bf16.msra.mxu0 %v2682
        %2698 = vmatpush.bf16.msra.mxu0 %v2681
        %2699 = vmatpush.bf16.msra.mxu0 %v2680
        %2700 = vmatpush.bf16.msra.mxu0 %v2679
        %2701 = vmatpush.bf16.msra.mxu0 %v2678
        %2702 = vmatmul.bf16.gmra.mxu0 %v2621
        %v2703 = vpop.f32.mrf.mxu0
        %v2704 = vadd.f32 0.0, %v2703
        %v2705 = vpop.f32.mrf.mxu0
        %v2706 = vadd.f32 0.0, %v2705
        %2707 = vmatmul.bf16.gmra.mxu0 %v2622
        %v2708 = vpop.f32.mrf.mxu0
        %v2709 = vadd.f32 0.0, %v2708
        %v2710 = vpop.f32.mrf.mxu0
        %v2711 = vadd.f32 0.0, %v2710
        %2712 = vmatmul.bf16.gmra.mxu0 %v2623
        %v2713 = vpop.f32.mrf.mxu0
        %v2714 = vadd.f32 0.0, %v2713
        %v2715 = vpop.f32.mrf.mxu0
        %v2716 = vadd.f32 0.0, %v2715
        %2717 = vmatmul.bf16.gmra.mxu0 %v2624
        %v2718 = vpop.f32.mrf.mxu0
        %v2719 = vadd.f32 0.0, %v2718
        %v2720 = vpop.f32.mrf.mxu0
        %v2721 = vadd.f32 0.0, %v2720
        %2722 = vmatmul.bf16.gmra.mxu0 %v2625
        %v2723 = vpop.f32.mrf.mxu0
        %v2724 = vadd.f32 0.0, %v2723
        %v2725 = vpop.f32.mrf.mxu0
        %v2726 = vadd.f32 0.0, %v2725
        %2727 = vmatmul.bf16.gmra.mxu0 %v2626
        %v2728 = vpop.f32.mrf.mxu0
        %v2729 = vadd.f32 0.0, %v2728
        %v2730 = vpop.f32.mrf.mxu0
        %v2731 = vadd.f32 0.0, %v2730
        %2732 = vmatmul.bf16.gmra.mxu0 %v2627
        %v2733 = vpop.f32.mrf.mxu0
        %v2734 = vadd.f32 0.0, %v2733
        %v2735 = vpop.f32.mrf.mxu0
        %v2736 = vadd.f32 0.0, %v2735
        %2737 = vmatmul.bf16.gmra.mxu0 %v2628
        %v2738 = vpop.f32.mrf.mxu0
        %v2739 = vadd.f32 0.0, %v2738
        %v2740 = vpop.f32.mrf.mxu0
        %v2741 = vadd.f32 0.0, %v2740
        %2742 = vdwg.mxu0
        %v2759 = vunpack.c.l.b16 %v1711
        %v2760 = vunpack.c.l.b16 %v1712
        %v2761 = vunpack.c.l.b16 %v1713
        %v2762 = vunpack.c.l.b16 %v1714
        %v2763 = vunpack.c.l.b16 %v1715
        %v2764 = vunpack.c.l.b16 %v1716
        %v2765 = vunpack.c.l.b16 %v1717
        %v2766 = vunpack.c.l.b16 %v1718
        %v2767 = vunpack.c.l.b16 %v1719
        %v2768 = vunpack.c.l.b16 %v1720
        %v2769 = vunpack.c.l.b16 %v1721
        %v2770 = vunpack.c.l.b16 %v1722
        %v2771 = vunpack.c.l.b16 %v1723
        %v2772 = vunpack.c.l.b16 %v1724
        %v2773 = vunpack.c.l.b16 %v1725
        %v2774 = vunpack.c.l.b16 %v1726
        %v2775 = vpack.c.b16 %v2760, %v2759
        %v2776 = vpack.c.b16 %v2762, %v2761
        %v2777 = vpack.c.b16 %v2764, %v2763
        %v2778 = vpack.c.b16 %v2766, %v2765
        %v2779 = vpack.c.b16 %v2768, %v2767
        %v2780 = vpack.c.b16 %v2770, %v2769
        %v2781 = vpack.c.b16 %v2772, %v2771
        %v2782 = vpack.c.b16 %v2774, %v2773
        %2791 = vmatpush.bf16.msra.mxu0 %v2782
        %2792 = vmatpush.bf16.msra.mxu0 %v2781
        %2793 = vmatpush.bf16.msra.mxu0 %v2780
        %2794 = vmatpush.bf16.msra.mxu0 %v2779
        %2795 = vmatpush.bf16.msra.mxu0 %v2778
        %2796 = vmatpush.bf16.msra.mxu0 %v2777
        %2797 = vmatpush.bf16.msra.mxu0 %v2776
        %2798 = vmatpush.bf16.msra.mxu0 %v2775
        %2799 = vmatmul.bf16.gmra.mxu0 %v1703
        %v2800 = vpop.f32.mrf.mxu0
        %v2801 = vadd.f32 %v2704, %v2800
        %v2802 = vpop.f32.mrf.mxu0
        %v2803 = vadd.f32 %v2706, %v2802
        %2804 = vmatmul.bf16.gmra.mxu0 %v1704
        %v2805 = vpop.f32.mrf.mxu0
        %v2806 = vadd.f32 %v2709, %v2805
        %v2807 = vpop.f32.mrf.mxu0
        %v2808 = vadd.f32 %v2711, %v2807
        %2809 = vmatmul.bf16.gmra.mxu0 %v1705
        %v2810 = vpop.f32.mrf.mxu0
        %v2811 = vadd.f32 %v2714, %v2810
        %v2812 = vpop.f32.mrf.mxu0
        %v2813 = vadd.f32 %v2716, %v2812
        %2814 = vmatmul.bf16.gmra.mxu0 %v1706
        %v2815 = vpop.f32.mrf.mxu0
        %v2816 = vadd.f32 %v2719, %v2815
        %v2817 = vpop.f32.mrf.mxu0
        %v2818 = vadd.f32 %v2721, %v2817
        %2819 = vmatmul.bf16.gmra.mxu0 %v1707
        %v2820 = vpop.f32.mrf.mxu0
        %v2821 = vadd.f32 %v2724, %v2820
        %v2822 = vpop.f32.mrf.mxu0
        %v2823 = vadd.f32 %v2726, %v2822
        %2824 = vmatmul.bf16.gmra.mxu0 %v1708
        %v2825 = vpop.f32.mrf.mxu0
        %v2826 = vadd.f32 %v2729, %v2825
        %v2827 = vpop.f32.mrf.mxu0
        %v2828 = vadd.f32 %v2731, %v2827
        %2829 = vmatmul.bf16.gmra.mxu0 %v1709
        %v2830 = vpop.f32.mrf.mxu0
        %v2831 = vadd.f32 %v2734, %v2830
        %v2832 = vpop.f32.mrf.mxu0
        %v2833 = vadd.f32 %v2736, %v2832
        %2834 = vmatmul.bf16.gmra.mxu0 %v1710
        %v2835 = vpop.f32.mrf.mxu0
        %v2836 = vadd.f32 %v2739, %v2835
        %v2837 = vpop.f32.mrf.mxu0
        %v2838 = vadd.f32 %v2741, %v2837
        %2839 = vdwg.mxu0
        %s2840 = sadd.s32 %s723, 6
        %s2841 = smul.u32 %s2840, 56
        %s2842 = scalar_lea.vmem [#allocation2], %s2841
        %v2843 = vld [vmem:[%s2842 + $0x6] sm:$0xff]
        %v2844 = vld [vmem:[%s2842 + $0xe] sm:$0xff]
        %v2845 = vld [vmem:[%s2842 + $0x3e] sm:$0xff]
        %v2846 = vld [vmem:[%s2842 + $0x46] sm:$0xff]
        %v2847 = vld [vmem:[%s2842 + $0x76] sm:$0xff]
        %v2848 = vld [vmem:[%s2842 + $0x7e] sm:$0xff]
        %v2849 = vld [vmem:[%s2842 + $0xae] sm:$0xff]
        %v2850 = vld [vmem:[%s2842 + $0xb6] sm:$0xff]
        %v2851 = vld [vmem:[%s2842 + $0xe6] sm:$0xff]
        %v2852 = vld [vmem:[%s2842 + $0xee] sm:$0xff]
        %v2853 = vld [vmem:[%s2842 + $0x11e] sm:$0xff]
        %v2854 = vld [vmem:[%s2842 + $0x126] sm:$0xff]
        %v2855 = vld [vmem:[%s2842 + $0x156] sm:$0xff]
        %v2856 = vld [vmem:[%s2842 + $0x15e] sm:$0xff]
        %v2857 = vld [vmem:[%s2842 + $0x18e] sm:$0xff]
        %v2858 = vld [vmem:[%s2842 + $0x196] sm:$0xff]
        %v2859 = vld [vmem:[%s2842 + $0x12] sm:$0xff]
        %v2860 = vld [vmem:[%s2842 + $0x1a] sm:$0xff]
        %v2861 = vld [vmem:[%s2842 + $0x4a] sm:$0xff]
        %v2862 = vld [vmem:[%s2842 + $0x52] sm:$0xff]
        %v2863 = vld [vmem:[%s2842 + $0x82] sm:$0xff]
        %v2864 = vld [vmem:[%s2842 + $0x8a] sm:$0xff]
        %v2865 = vld [vmem:[%s2842 + $0xba] sm:$0xff]
        %v2866 = vld [vmem:[%s2842 + $0xc2] sm:$0xff]
        %v2867 = vld [vmem:[%s2842 + $0xf2] sm:$0xff]
        %v2868 = vld [vmem:[%s2842 + $0xfa] sm:$0xff]
        %v2869 = vld [vmem:[%s2842 + $0x12a] sm:$0xff]
        %v2870 = vld [vmem:[%s2842 + $0x132] sm:$0xff]
        %v2871 = vld [vmem:[%s2842 + $0x162] sm:$0xff]
        %v2872 = vld [vmem:[%s2842 + $0x16a] sm:$0xff]
        %v2873 = vld [vmem:[%s2842 + $0x19a] sm:$0xff]
        %v2874 = vld [vmem:[%s2842 + $0x1a2] sm:$0xff]
        %v2875 = vld [vmem:[%s2842 + $0x1e] sm:$0xff]
        %v2876 = vld [vmem:[%s2842 + $0x26] sm:$0xff]
        %v2877 = vld [vmem:[%s2842 + $0x56] sm:$0xff]
        %v2878 = vld [vmem:[%s2842 + $0x5e] sm:$0xff]
        %v2879 = vld [vmem:[%s2842 + $0x8e] sm:$0xff]
        %v2880 = vld [vmem:[%s2842 + $0x96] sm:$0xff]
        %v2881 = vld [vmem:[%s2842 + $0xc6] sm:$0xff]
        %v2882 = vld [vmem:[%s2842 + $0xce] sm:$0xff]
        %v2883 = vld [vmem:[%s2842 + $0xfe] sm:$0xff]
        %v2884 = vld [vmem:[%s2842 + $0x106] sm:$0xff]
        %v2885 = vld [vmem:[%s2842 + $0x136] sm:$0xff]
        %v2886 = vld [vmem:[%s2842 + $0x13e] sm:$0xff]
        %v2887 = vld [vmem:[%s2842 + $0x16e] sm:$0xff]
        %v2888 = vld [vmem:[%s2842 + $0x176] sm:$0xff]
        %v2889 = vld [vmem:[%s2842 + $0x1a6] sm:$0xff]
        %v2890 = vld [vmem:[%s2842 + $0x1ae] sm:$0xff]
        %2907 = vrot.lane.b32.xlu0 %v2859, 8
        %v2908 = vpop.permute.xlu0 %2907
        %2909 = vrot.lane.b32.xlu0 %v2860, 8
        %v2910 = vpop.permute.xlu0 %2909
        %2911 = vrot.lane.b32.xlu0 %v2861, 8
        %v2912 = vpop.permute.xlu0 %2911
        %2913 = vrot.lane.b32.xlu0 %v2862, 8
        %v2914 = vpop.permute.xlu0 %2913
        %2915 = vrot.lane.b32.xlu0 %v2863, 8
        %v2916 = vpop.permute.xlu0 %2915
        %2917 = vrot.lane.b32.xlu0 %v2864, 8
        %v2918 = vpop.permute.xlu0 %2917
        %2919 = vrot.lane.b32.xlu0 %v2865, 8
        %v2920 = vpop.permute.xlu0 %2919
        %2921 = vrot.lane.b32.xlu0 %v2866, 8
        %v2922 = vpop.permute.xlu0 %2921
        %2923 = vrot.lane.b32.xlu0 %v2867, 8
        %v2924 = vpop.permute.xlu0 %2923
        %2925 = vrot.lane.b32.xlu0 %v2868, 8
        %v2926 = vpop.permute.xlu0 %2925
        %2927 = vrot.lane.b32.xlu0 %v2869, 8
        %v2928 = vpop.permute.xlu0 %2927
        %2929 = vrot.lane.b32.xlu0 %v2870, 8
        %v2930 = vpop.permute.xlu0 %2929
        %2931 = vrot.lane.b32.xlu0 %v2871, 8
        %v2932 = vpop.permute.xlu0 %2931
        %2933 = vrot.lane.b32.xlu0 %v2872, 8
        %v2934 = vpop.permute.xlu0 %2933
        %2935 = vrot.lane.b32.xlu0 %v2873, 8
        %v2936 = vpop.permute.xlu0 %2935
        %2937 = vrot.lane.b32.xlu0 %v2874, 8
        %v2938 = vpop.permute.xlu0 %2937
        %2971 = vrot.lane.b32.xlu0 %v2875, 16
        %v2972 = vpop.permute.xlu0 %2971
        %2973 = vrot.lane.b32.xlu0 %v2876, 16
        %v2974 = vpop.permute.xlu0 %2973
        %2975 = vrot.lane.b32.xlu0 %v2877, 16
        %v2976 = vpop.permute.xlu0 %2975
        %2977 = vrot.lane.b32.xlu0 %v2878, 16
        %v2978 = vpop.permute.xlu0 %2977
        %2979 = vrot.lane.b32.xlu0 %v2879, 16
        %v2980 = vpop.permute.xlu0 %2979
        %2981 = vrot.lane.b32.xlu0 %v2880, 16
        %v2982 = vpop.permute.xlu0 %2981
        %2983 = vrot.lane.b32.xlu0 %v2881, 16
        %v2984 = vpop.permute.xlu0 %2983
        %2985 = vrot.lane.b32.xlu0 %v2882, 16
        %v2986 = vpop.permute.xlu0 %2985
        %2987 = vrot.lane.b32.xlu0 %v2883, 16
        %v2988 = vpop.permute.xlu0 %2987
        %2989 = vrot.lane.b32.xlu0 %v2884, 16
        %v2990 = vpop.permute.xlu0 %2989
        %2991 = vrot.lane.b32.xlu0 %v2885, 16
        %v2992 = vpop.permute.xlu0 %2991
        %2993 = vrot.lane.b32.xlu0 %v2886, 16
        %v2994 = vpop.permute.xlu0 %2993
        %2995 = vrot.lane.b32.xlu0 %v2887, 16
        %v2996 = vpop.permute.xlu0 %2995
        %2997 = vrot.lane.b32.xlu0 %v2888, 16
        %v2998 = vpop.permute.xlu0 %2997
        %2999 = vrot.lane.b32.xlu0 %v2889, 16
        %v3000 = vpop.permute.xlu0 %2999
        %3001 = vrot.lane.b32.xlu0 %v2890, 16
        %v3002 = vpop.permute.xlu0 %3001
        %v3019 = vsel %vm903, %v2843, %v2908
        %v3020 = vsel %vm903, %v2844, %v2910
        %v3021 = vsel %vm903, %v2845, %v2912
        %v3022 = vsel %vm903, %v2846, %v2914
        %v3023 = vsel %vm903, %v2847, %v2916
        %v3024 = vsel %vm903, %v2848, %v2918
        %v3025 = vsel %vm903, %v2849, %v2920
        %v3026 = vsel %vm903, %v2850, %v2922
        %v3027 = vsel %vm903, %v2851, %v2924
        %v3028 = vsel %vm903, %v2852, %v2926
        %v3029 = vsel %vm903, %v2853, %v2928
        %v3030 = vsel %vm903, %v2854, %v2930
        %v3031 = vsel %vm903, %v2855, %v2932
        %v3032 = vsel %vm903, %v2856, %v2934
        %v3033 = vsel %vm903, %v2857, %v2936
        %v3034 = vsel %vm903, %v2858, %v2938
        %v3035 = vsel %vm920, %v3019, %v2972
        %v3036 = vsel %vm920, %v3020, %v2974
        %v3037 = vsel %vm920, %v3021, %v2976
        %v3038 = vsel %vm920, %v3022, %v2978
        %v3039 = vsel %vm920, %v3023, %v2980
        %v3040 = vsel %vm920, %v3024, %v2982
        %v3041 = vsel %vm920, %v3025, %v2984
        %v3042 = vsel %vm920, %v3026, %v2986
        %v3043 = vsel %vm920, %v3027, %v2988
        %v3044 = vsel %vm920, %v3028, %v2990
        %v3045 = vsel %vm920, %v3029, %v2992
        %v3046 = vsel %vm920, %v3030, %v2994
        %v3047 = vsel %vm920, %v3031, %v2996
        %v3048 = vsel %vm920, %v3032, %v2998
        %v3049 = vsel %vm920, %v3033, %v3000
        %v3050 = vsel %vm920, %v3034, %v3002
        %v3051 = vpack.c.bf16 %v3036, %v3035
        %v3052 = vpack.c.bf16 %v3038, %v3037
        %v3053 = vpack.c.bf16 %v3040, %v3039
        %v3054 = vpack.c.bf16 %v3042, %v3041
        %v3055 = vpack.c.bf16 %v3044, %v3043
        %v3056 = vpack.c.bf16 %v3046, %v3045
        %v3057 = vpack.c.bf16 %v3048, %v3047
        %v3058 = vpack.c.bf16 %v3050, %v3049
        %s3059 = scalar_lea.vmem [#allocation3], 72
        %v3060 = vld [vmem:[%s3059] sm:$0xf]
        %v3061 = vld [vmem:[%s3059 + $0x4] sm:$0xf]
        %v3062 = vld [vmem:[%s3059 + $0x8] sm:$0xf]
        %v3063 = vld [vmem:[%s950 + $0x6] sm:$0xff]
        %v3064 = vld [vmem:[%s950 + $0xe] sm:$0xff]
        %v3065 = vld [vmem:[%s950 + $0x3e] sm:$0xff]
        %v3066 = vld [vmem:[%s950 + $0x46] sm:$0xff]
        %v3067 = vld [vmem:[%s950 + $0x76] sm:$0xff]
        %v3068 = vld [vmem:[%s950 + $0x7e] sm:$0xff]
        %v3069 = vld [vmem:[%s950 + $0xae] sm:$0xff]
        %v3070 = vld [vmem:[%s950 + $0xb6] sm:$0xff]
        %v3071 = vld [vmem:[%s950 + $0xe6] sm:$0xff]
        %v3072 = vld [vmem:[%s950 + $0xee] sm:$0xff]
        %v3073 = vld [vmem:[%s950 + $0x11e] sm:$0xff]
        %v3074 = vld [vmem:[%s950 + $0x126] sm:$0xff]
        %v3075 = vld [vmem:[%s950 + $0x156] sm:$0xff]
        %v3076 = vld [vmem:[%s950 + $0x15e] sm:$0xff]
        %v3077 = vld [vmem:[%s950 + $0x18e] sm:$0xff]
        %v3078 = vld [vmem:[%s950 + $0x196] sm:$0xff]
        %v3079 = vld [vmem:[%s950 + $0x1e] sm:$0xff]
        %v3080 = vld [vmem:[%s950 + $0x26] sm:$0xff]
        %v3081 = vld [vmem:[%s950 + $0x56] sm:$0xff]
        %v3082 = vld [vmem:[%s950 + $0x5e] sm:$0xff]
        %v3083 = vld [vmem:[%s950 + $0x8e] sm:$0xff]
        %v3084 = vld [vmem:[%s950 + $0x96] sm:$0xff]
        %v3085 = vld [vmem:[%s950 + $0xc6] sm:$0xff]
        %v3086 = vld [vmem:[%s950 + $0xce] sm:$0xff]
        %v3087 = vld [vmem:[%s950 + $0xfe] sm:$0xff]
        %v3088 = vld [vmem:[%s950 + $0x106] sm:$0xff]
        %v3089 = vld [vmem:[%s950 + $0x136] sm:$0xff]
        %v3090 = vld [vmem:[%s950 + $0x13e] sm:$0xff]
        %v3091 = vld [vmem:[%s950 + $0x16e] sm:$0xff]
        %v3092 = vld [vmem:[%s950 + $0x176] sm:$0xff]
        %v3093 = vld [vmem:[%s950 + $0x1a6] sm:$0xff]
        %v3094 = vld [vmem:[%s950 + $0x1ae] sm:$0xff]
        %3111 = vrot.lane.b32.xlu0 %v3079, 16
        %v3112 = vpop.permute.xlu0 %3111
        %3113 = vrot.lane.b32.xlu0 %v3080, 16
        %v3114 = vpop.permute.xlu0 %3113
        %3115 = vrot.lane.b32.xlu0 %v3081, 16
        %v3116 = vpop.permute.xlu0 %3115
        %3117 = vrot.lane.b32.xlu0 %v3082, 16
        %v3118 = vpop.permute.xlu0 %3117
        %3119 = vrot.lane.b32.xlu0 %v3083, 16
        %v3120 = vpop.permute.xlu0 %3119
        %3121 = vrot.lane.b32.xlu0 %v3084, 16
        %v3122 = vpop.permute.xlu0 %3121
        %3123 = vrot.lane.b32.xlu0 %v3085, 16
        %v3124 = vpop.permute.xlu0 %3123
        %3125 = vrot.lane.b32.xlu0 %v3086, 16
        %v3126 = vpop.permute.xlu0 %3125
        %3127 = vrot.lane.b32.xlu0 %v3087, 16
        %v3128 = vpop.permute.xlu0 %3127
        %3129 = vrot.lane.b32.xlu0 %v3088, 16
        %v3130 = vpop.permute.xlu0 %3129
        %3131 = vrot.lane.b32.xlu0 %v3089, 16
        %v3132 = vpop.permute.xlu0 %3131
        %3133 = vrot.lane.b32.xlu0 %v3090, 16
        %v3134 = vpop.permute.xlu0 %3133
        %3135 = vrot.lane.b32.xlu0 %v3091, 16
        %v3136 = vpop.permute.xlu0 %3135
        %3137 = vrot.lane.b32.xlu0 %v3092, 16
        %v3138 = vpop.permute.xlu0 %3137
        %3139 = vrot.lane.b32.xlu0 %v3093, 16
        %v3140 = vpop.permute.xlu0 %3139
        %3141 = vrot.lane.b32.xlu0 %v3094, 16
        %v3142 = vpop.permute.xlu0 %3141
        %v3159 = vsel %vm903, %v3063, %v1016
        %v3160 = vsel %vm903, %v3064, %v1018
        %v3161 = vsel %vm903, %v3065, %v1020
        %v3162 = vsel %vm903, %v3066, %v1022
        %v3163 = vsel %vm903, %v3067, %v1024
        %v3164 = vsel %vm903, %v3068, %v1026
        %v3165 = vsel %vm903, %v3069, %v1028
        %v3166 = vsel %vm903, %v3070, %v1030
        %v3167 = vsel %vm903, %v3071, %v1032
        %v3168 = vsel %vm903, %v3072, %v1034
        %v3169 = vsel %vm903, %v3073, %v1036
        %v3170 = vsel %vm903, %v3074, %v1038
        %v3171 = vsel %vm903, %v3075, %v1040
        %v3172 = vsel %vm903, %v3076, %v1042
        %v3173 = vsel %vm903, %v3077, %v1044
        %v3174 = vsel %vm903, %v3078, %v1046
        %v3175 = vsel %vm920, %v3159, %v3112
        %v3176 = vsel %vm920, %v3160, %v3114
        %v3177 = vsel %vm920, %v3161, %v3116
        %v3178 = vsel %vm920, %v3162, %v3118
        %v3179 = vsel %vm920, %v3163, %v3120
        %v3180 = vsel %vm920, %v3164, %v3122
        %v3181 = vsel %vm920, %v3165, %v3124
        %v3182 = vsel %vm920, %v3166, %v3126
        %v3183 = vsel %vm920, %v3167, %v3128
        %v3184 = vsel %vm920, %v3168, %v3130
        %v3185 = vsel %vm920, %v3169, %v3132
        %v3186 = vsel %vm920, %v3170, %v3134
        %v3187 = vsel %vm920, %v3171, %v3136
        %v3188 = vsel %vm920, %v3172, %v3138
        %v3189 = vsel %vm920, %v3173, %v3140
        %v3190 = vsel %vm920, %v3174, %v3142
        %v3191 = vpack.c.bf16 %v3176, %v3175
        %v3192 = vpack.c.bf16 %v3178, %v3177
        %v3193 = vpack.c.bf16 %v3180, %v3179
        %v3194 = vpack.c.bf16 %v3182, %v3181
        %v3195 = vpack.c.bf16 %v3184, %v3183
        %v3196 = vpack.c.bf16 %v3186, %v3185
        %v3197 = vpack.c.bf16 %v3188, %v3187
        %v3198 = vpack.c.bf16 %v3190, %v3189
        %s3199 = scalar_lea.vmem [#allocation3], 84
        %v3200 = vld [vmem:[%s3199] sm:$0xf]
        %v3201 = vld [vmem:[%s3199 + $0x4] sm:$0xf]
        %v3202 = vld [vmem:[%s3199 + $0x8] sm:$0xf]
        %v3206 = vunpack.c.l.b16 %v3200
        %v3207 = vunpack.c.l.b16 %v3201
        %v3208 = vunpack.c.l.b16 %v3202
        %v3209 = vpack.c.b16 %v3207, %v3206
        %v3210 = vpack.c.b16 %v3208, %v3208
        %v3213 = vsel %vm1180, %v3191, 0
        %v3216 = vsel %vm1180, %v3192, 0
        %v3219 = vsel %vm1180, %v3193, 0
        %v3222 = vsel %vm1180, %v3194, 0
        %v3225 = vsel %vm1180, %v3195, 0
        %v3228 = vsel %vm1180, %v3196, 0
        %v3231 = vsel %vm1180, %v3197, 0
        %v3234 = vsel %vm1180, %v3198, 0
        %v3237 = vsel %vm1205, %v3210, 0
        %3239 = vmatpush.bf16.msra.mxu0 0
        %3240 = vmatpush.bf16.msra.mxu0 0
        %3241 = vmatpush.bf16.msra.mxu0 0
        %3242 = vmatpush.bf16.msra.mxu0 0
        %3243 = vmatpush.bf16.msra.mxu0 0
        %3244 = vmatpush.bf16.msra.mxu0 0
        %3245 = vmatpush.bf16.msra.mxu0 %v3237
        %3246 = vmatpush.bf16.msra.mxu0 %v3209
        %3247 = vmatmul.bf16.gmra.mxu0 %v3213
        %v3248 = vpop.f32.mrf.mxu0
        %v3249 = vadd.f32 0.0, %v3248
        %v3250 = vpop.f32.mrf.mxu0
        %v3251 = vadd.f32 0.0, %v3250
        %3252 = vmatmul.bf16.gmra.mxu0 %v3216
        %v3253 = vpop.f32.mrf.mxu0
        %v3254 = vadd.f32 0.0, %v3253
        %v3255 = vpop.f32.mrf.mxu0
        %v3256 = vadd.f32 0.0, %v3255
        %3257 = vmatmul.bf16.gmra.mxu0 %v3219
        %v3258 = vpop.f32.mrf.mxu0
        %v3259 = vadd.f32 0.0, %v3258
        %v3260 = vpop.f32.mrf.mxu0
        %v3261 = vadd.f32 0.0, %v3260
        %3262 = vmatmul.bf16.gmra.mxu0 %v3222
        %v3263 = vpop.f32.mrf.mxu0
        %v3264 = vadd.f32 0.0, %v3263
        %v3265 = vpop.f32.mrf.mxu0
        %v3266 = vadd.f32 0.0, %v3265
        %3267 = vmatmul.bf16.gmra.mxu0 %v3225
        %v3268 = vpop.f32.mrf.mxu0
        %v3269 = vadd.f32 0.0, %v3268
        %v3270 = vpop.f32.mrf.mxu0
        %v3271 = vadd.f32 0.0, %v3270
        %3272 = vmatmul.bf16.gmra.mxu0 %v3228
        %v3273 = vpop.f32.mrf.mxu0
        %v3274 = vadd.f32 0.0, %v3273
        %v3275 = vpop.f32.mrf.mxu0
        %v3276 = vadd.f32 0.0, %v3275
        %3277 = vmatmul.bf16.gmra.mxu0 %v3231
        %v3278 = vpop.f32.mrf.mxu0
        %v3279 = vadd.f32 0.0, %v3278
        %v3280 = vpop.f32.mrf.mxu0
        %v3281 = vadd.f32 0.0, %v3280
        %3282 = vmatmul.bf16.gmra.mxu0 %v3234
        %v3283 = vpop.f32.mrf.mxu0
        %v3284 = vadd.f32 0.0, %v3283
        %v3285 = vpop.f32.mrf.mxu0
        %v3286 = vadd.f32 0.0, %v3285
        %3287 = vdwg.mxu0
        %v3291 = vunpack.c.l.b16 %v3060
        %v3292 = vunpack.c.l.b16 %v3061
        %v3293 = vunpack.c.l.b16 %v3062
        %v3294 = vpack.c.b16 %v3292, %v3291
        %v3295 = vpack.c.b16 %v3293, %v3293
        %v3298 = vsel %vm1180, %v3051, 0
        %v3301 = vsel %vm1180, %v3052, 0
        %v3304 = vsel %vm1180, %v3053, 0
        %v3307 = vsel %vm1180, %v3054, 0
        %v3310 = vsel %vm1180, %v3055, 0
        %v3313 = vsel %vm1180, %v3056, 0
        %v3316 = vsel %vm1180, %v3057, 0
        %v3319 = vsel %vm1180, %v3058, 0
        %v3322 = vsel %vm1205, %v3295, 0
        %3324 = vmatpush.bf16.msra.mxu0 0
        %3325 = vmatpush.bf16.msra.mxu0 0
        %3326 = vmatpush.bf16.msra.mxu0 0
        %3327 = vmatpush.bf16.msra.mxu0 0
        %3328 = vmatpush.bf16.msra.mxu0 0
        %3329 = vmatpush.bf16.msra.mxu0 0
        %3330 = vmatpush.bf16.msra.mxu0 %v3322
        %3331 = vmatpush.bf16.msra.mxu0 %v3294
        %3332 = vmatmul.bf16.gmra.mxu0 %v3298
        %v3333 = vpop.f32.mrf.mxu0
        %v3334 = vadd.f32 %v3249, %v3333
        %v3335 = vpop.f32.mrf.mxu0
        %v3336 = vadd.f32 %v3251, %v3335
        %3337 = vmatmul.bf16.gmra.mxu0 %v3301
        %v3338 = vpop.f32.mrf.mxu0
        %v3339 = vadd.f32 %v3254, %v3338
        %v3340 = vpop.f32.mrf.mxu0
        %v3341 = vadd.f32 %v3256, %v3340
        %3342 = vmatmul.bf16.gmra.mxu0 %v3304
        %v3343 = vpop.f32.mrf.mxu0
        %v3344 = vadd.f32 %v3259, %v3343
        %v3345 = vpop.f32.mrf.mxu0
        %v3346 = vadd.f32 %v3261, %v3345
        %3347 = vmatmul.bf16.gmra.mxu0 %v3307
        %v3348 = vpop.f32.mrf.mxu0
        %v3349 = vadd.f32 %v3264, %v3348
        %v3350 = vpop.f32.mrf.mxu0
        %v3351 = vadd.f32 %v3266, %v3350
        %3352 = vmatmul.bf16.gmra.mxu0 %v3310
        %v3353 = vpop.f32.mrf.mxu0
        %v3354 = vadd.f32 %v3269, %v3353
        %v3355 = vpop.f32.mrf.mxu0
        %v3356 = vadd.f32 %v3271, %v3355
        %3357 = vmatmul.bf16.gmra.mxu0 %v3313
        %v3358 = vpop.f32.mrf.mxu0
        %v3359 = vadd.f32 %v3274, %v3358
        %v3360 = vpop.f32.mrf.mxu0
        %v3361 = vadd.f32 %v3276, %v3360
        %3362 = vmatmul.bf16.gmra.mxu0 %v3316
        %v3363 = vpop.f32.mrf.mxu0
        %v3364 = vadd.f32 %v3279, %v3363
        %v3365 = vpop.f32.mrf.mxu0
        %v3366 = vadd.f32 %v3281, %v3365
        %3367 = vmatmul.bf16.gmra.mxu0 %v3319
        %v3368 = vpop.f32.mrf.mxu0
        %v3369 = vadd.f32 %v3284, %v3368
        %v3370 = vpop.f32.mrf.mxu0
        %v3371 = vadd.f32 %v3286, %v3370
        %3372 = vdwg.mxu0
        %s3373 = sadd.s32 %s723, 30
        %s3374 = smul.u32 %s3373, 56
        %s3375 = scalar_lea.vmem [#allocation2], %s3374
        %v3376 = vld [vmem:[%s3375 + $0x6] sm:$0xff]
        %v3377 = vld [vmem:[%s3375 + $0xe] sm:$0xff]
        %v3378 = vld [vmem:[%s3375 + $0x3e] sm:$0xff]
        %v3379 = vld [vmem:[%s3375 + $0x46] sm:$0xff]
        %v3380 = vld [vmem:[%s3375 + $0x76] sm:$0xff]
        %v3381 = vld [vmem:[%s3375 + $0x7e] sm:$0xff]
        %v3382 = vld [vmem:[%s3375 + $0xae] sm:$0xff]
        %v3383 = vld [vmem:[%s3375 + $0xb6] sm:$0xff]
        %v3384 = vld [vmem:[%s3375 + $0xe6] sm:$0xff]
        %v3385 = vld [vmem:[%s3375 + $0xee] sm:$0xff]
        %v3386 = vld [vmem:[%s3375 + $0x11e] sm:$0xff]
        %v3387 = vld [vmem:[%s3375 + $0x126] sm:$0xff]
        %v3388 = vld [vmem:[%s3375 + $0x156] sm:$0xff]
        %v3389 = vld [vmem:[%s3375 + $0x15e] sm:$0xff]
        %v3390 = vld [vmem:[%s3375 + $0x18e] sm:$0xff]
        %v3391 = vld [vmem:[%s3375 + $0x196] sm:$0xff]
        %v3392 = vld [vmem:[%s3375 + $0x12] sm:$0xff]
        %v3393 = vld [vmem:[%s3375 + $0x1a] sm:$0xff]
        %v3394 = vld [vmem:[%s3375 + $0x4a] sm:$0xff]
        %v3395 = vld [vmem:[%s3375 + $0x52] sm:$0xff]
        %v3396 = vld [vmem:[%s3375 + $0x82] sm:$0xff]
        %v3397 = vld [vmem:[%s3375 + $0x8a] sm:$0xff]
        %v3398 = vld [vmem:[%s3375 + $0xba] sm:$0xff]
        %v3399 = vld [vmem:[%s3375 + $0xc2] sm:$0xff]
        %v3400 = vld [vmem:[%s3375 + $0xf2] sm:$0xff]
        %v3401 = vld [vmem:[%s3375 + $0xfa] sm:$0xff]
        %v3402 = vld [vmem:[%s3375 + $0x12a] sm:$0xff]
        %v3403 = vld [vmem:[%s3375 + $0x132] sm:$0xff]
        %v3404 = vld [vmem:[%s3375 + $0x162] sm:$0xff]
        %v3405 = vld [vmem:[%s3375 + $0x16a] sm:$0xff]
        %v3406 = vld [vmem:[%s3375 + $0x19a] sm:$0xff]
        %v3407 = vld [vmem:[%s3375 + $0x1a2] sm:$0xff]
        %v3408 = vld [vmem:[%s3375 + $0x1e] sm:$0xff]
        %v3409 = vld [vmem:[%s3375 + $0x26] sm:$0xff]
        %v3410 = vld [vmem:[%s3375 + $0x56] sm:$0xff]
        %v3411 = vld [vmem:[%s3375 + $0x5e] sm:$0xff]
        %v3412 = vld [vmem:[%s3375 + $0x8e] sm:$0xff]
        %v3413 = vld [vmem:[%s3375 + $0x96] sm:$0xff]
        %v3414 = vld [vmem:[%s3375 + $0xc6] sm:$0xff]
        %v3415 = vld [vmem:[%s3375 + $0xce] sm:$0xff]
        %v3416 = vld [vmem:[%s3375 + $0xfe] sm:$0xff]
        %v3417 = vld [vmem:[%s3375 + $0x106] sm:$0xff]
        %v3418 = vld [vmem:[%s3375 + $0x136] sm:$0xff]
        %v3419 = vld [vmem:[%s3375 + $0x13e] sm:$0xff]
        %v3420 = vld [vmem:[%s3375 + $0x16e] sm:$0xff]
        %v3421 = vld [vmem:[%s3375 + $0x176] sm:$0xff]
        %v3422 = vld [vmem:[%s3375 + $0x1a6] sm:$0xff]
        %v3423 = vld [vmem:[%s3375 + $0x1ae] sm:$0xff]
        %3440 = vrot.lane.b32.xlu0 %v3392, 8
        %v3441 = vpop.permute.xlu0 %3440
        %3442 = vrot.lane.b32.xlu0 %v3393, 8
        %v3443 = vpop.permute.xlu0 %3442
        %3444 = vrot.lane.b32.xlu0 %v3394, 8
        %v3445 = vpop.permute.xlu0 %3444
        %3446 = vrot.lane.b32.xlu0 %v3395, 8
        %v3447 = vpop.permute.xlu0 %3446
        %3448 = vrot.lane.b32.xlu0 %v3396, 8
        %v3449 = vpop.permute.xlu0 %3448
        %3450 = vrot.lane.b32.xlu0 %v3397, 8
        %v3451 = vpop.permute.xlu0 %3450
        %3452 = vrot.lane.b32.xlu0 %v3398, 8
        %v3453 = vpop.permute.xlu0 %3452
        %3454 = vrot.lane.b32.xlu0 %v3399, 8
        %v3455 = vpop.permute.xlu0 %3454
        %3456 = vrot.lane.b32.xlu0 %v3400, 8
        %v3457 = vpop.permute.xlu0 %3456
        %3458 = vrot.lane.b32.xlu0 %v3401, 8
        %v3459 = vpop.permute.xlu0 %3458
        %3460 = vrot.lane.b32.xlu0 %v3402, 8
        %v3461 = vpop.permute.xlu0 %3460
        %3462 = vrot.lane.b32.xlu0 %v3403, 8
        %v3463 = vpop.permute.xlu0 %3462
        %3464 = vrot.lane.b32.xlu0 %v3404, 8
        %v3465 = vpop.permute.xlu0 %3464
        %3466 = vrot.lane.b32.xlu0 %v3405, 8
        %v3467 = vpop.permute.xlu0 %3466
        %3468 = vrot.lane.b32.xlu0 %v3406, 8
        %v3469 = vpop.permute.xlu0 %3468
        %3470 = vrot.lane.b32.xlu0 %v3407, 8
        %v3471 = vpop.permute.xlu0 %3470
        %3504 = vrot.lane.b32.xlu0 %v3408, 16
        %v3505 = vpop.permute.xlu0 %3504
        %3506 = vrot.lane.b32.xlu0 %v3409, 16
        %v3507 = vpop.permute.xlu0 %3506
        %3508 = vrot.lane.b32.xlu0 %v3410, 16
        %v3509 = vpop.permute.xlu0 %3508
        %3510 = vrot.lane.b32.xlu0 %v3411, 16
        %v3511 = vpop.permute.xlu0 %3510
        %3512 = vrot.lane.b32.xlu0 %v3412, 16
        %v3513 = vpop.permute.xlu0 %3512
        %3514 = vrot.lane.b32.xlu0 %v3413, 16
        %v3515 = vpop.permute.xlu0 %3514
        %3516 = vrot.lane.b32.xlu0 %v3414, 16
        %v3517 = vpop.permute.xlu0 %3516
        %3518 = vrot.lane.b32.xlu0 %v3415, 16
        %v3519 = vpop.permute.xlu0 %3518
        %3520 = vrot.lane.b32.xlu0 %v3416, 16
        %v3521 = vpop.permute.xlu0 %3520
        %3522 = vrot.lane.b32.xlu0 %v3417, 16
        %v3523 = vpop.permute.xlu0 %3522
        %3524 = vrot.lane.b32.xlu0 %v3418, 16
        %v3525 = vpop.permute.xlu0 %3524
        %3526 = vrot.lane.b32.xlu0 %v3419, 16
        %v3527 = vpop.permute.xlu0 %3526
        %3528 = vrot.lane.b32.xlu0 %v3420, 16
        %v3529 = vpop.permute.xlu0 %3528
        %3530 = vrot.lane.b32.xlu0 %v3421, 16
        %v3531 = vpop.permute.xlu0 %3530
        %3532 = vrot.lane.b32.xlu0 %v3422, 16
        %v3533 = vpop.permute.xlu0 %3532
        %3534 = vrot.lane.b32.xlu0 %v3423, 16
        %v3535 = vpop.permute.xlu0 %3534
        %v3552 = vsel %vm903, %v3376, %v3441
        %v3553 = vsel %vm903, %v3377, %v3443
        %v3554 = vsel %vm903, %v3378, %v3445
        %v3555 = vsel %vm903, %v3379, %v3447
        %v3556 = vsel %vm903, %v3380, %v3449
        %v3557 = vsel %vm903, %v3381, %v3451
        %v3558 = vsel %vm903, %v3382, %v3453
        %v3559 = vsel %vm903, %v3383, %v3455
        %v3560 = vsel %vm903, %v3384, %v3457
        %v3561 = vsel %vm903, %v3385, %v3459
        %v3562 = vsel %vm903, %v3386, %v3461
        %v3563 = vsel %vm903, %v3387, %v3463
        %v3564 = vsel %vm903, %v3388, %v3465
        %v3565 = vsel %vm903, %v3389, %v3467
        %v3566 = vsel %vm903, %v3390, %v3469
        %v3567 = vsel %vm903, %v3391, %v3471
        %v3568 = vsel %vm920, %v3552, %v3505
        %v3569 = vsel %vm920, %v3553, %v3507
        %v3570 = vsel %vm920, %v3554, %v3509
        %v3571 = vsel %vm920, %v3555, %v3511
        %v3572 = vsel %vm920, %v3556, %v3513
        %v3573 = vsel %vm920, %v3557, %v3515
        %v3574 = vsel %vm920, %v3558, %v3517
        %v3575 = vsel %vm920, %v3559, %v3519
        %v3576 = vsel %vm920, %v3560, %v3521
        %v3577 = vsel %vm920, %v3561, %v3523
        %v3578 = vsel %vm920, %v3562, %v3525
        %v3579 = vsel %vm920, %v3563, %v3527
        %v3580 = vsel %vm920, %v3564, %v3529
        %v3581 = vsel %vm920, %v3565, %v3531
        %v3582 = vsel %vm920, %v3566, %v3533
        %v3583 = vsel %vm920, %v3567, %v3535
        %v3584 = vpack.c.bf16 %v3569, %v3568
        %v3585 = vpack.c.bf16 %v3571, %v3570
        %v3586 = vpack.c.bf16 %v3573, %v3572
        %v3587 = vpack.c.bf16 %v3575, %v3574
        %v3588 = vpack.c.bf16 %v3577, %v3576
        %v3589 = vpack.c.bf16 %v3579, %v3578
        %v3590 = vpack.c.bf16 %v3581, %v3580
        %v3591 = vpack.c.bf16 %v3583, %v3582
        %s3592 = scalar_lea.vmem [#allocation3], 96
        %v3593 = vld [vmem:[%s3592] sm:$0xf]
        %v3594 = vld [vmem:[%s3592 + $0x4] sm:$0xf]
        %v3595 = vld [vmem:[%s3592 + $0x8] sm:$0xf]
        %v3599 = vunpack.c.l.b16 %v3593
        %v3600 = vunpack.c.l.b16 %v3594
        %v3601 = vunpack.c.l.b16 %v3595
        %v3602 = vpack.c.b16 %v3600, %v3599
        %v3603 = vpack.c.b16 %v3601, %v3601
        %v3606 = vsel %vm1180, %v3584, 0
        %v3609 = vsel %vm1180, %v3585, 0
        %v3612 = vsel %vm1180, %v3586, 0
        %v3615 = vsel %vm1180, %v3587, 0
        %v3618 = vsel %vm1180, %v3588, 0
        %v3621 = vsel %vm1180, %v3589, 0
        %v3624 = vsel %vm1180, %v3590, 0
        %v3627 = vsel %vm1180, %v3591, 0
        %v3630 = vsel %vm1205, %v3603, 0
        %3632 = vmatpush.bf16.msra.mxu0 0
        %3633 = vmatpush.bf16.msra.mxu0 0
        %3634 = vmatpush.bf16.msra.mxu0 0
        %3635 = vmatpush.bf16.msra.mxu0 0
        %3636 = vmatpush.bf16.msra.mxu0 0
        %3637 = vmatpush.bf16.msra.mxu0 0
        %3638 = vmatpush.bf16.msra.mxu0 %v3630
        %3639 = vmatpush.bf16.msra.mxu0 %v3602
        %3640 = vmatmul.bf16.gmra.mxu0 %v3606
        %v3641 = vpop.f32.mrf.mxu0
        %v3642 = vadd.f32 0.0, %v3641
        %v3643 = vpop.f32.mrf.mxu0
        %v3644 = vadd.f32 0.0, %v3643
        %3645 = vmatmul.bf16.gmra.mxu0 %v3609
        %v3646 = vpop.f32.mrf.mxu0
        %v3647 = vadd.f32 0.0, %v3646
        %v3648 = vpop.f32.mrf.mxu0
        %v3649 = vadd.f32 0.0, %v3648
        %3650 = vmatmul.bf16.gmra.mxu0 %v3612
        %v3651 = vpop.f32.mrf.mxu0
        %v3652 = vadd.f32 0.0, %v3651
        %v3653 = vpop.f32.mrf.mxu0
        %v3654 = vadd.f32 0.0, %v3653
        %3655 = vmatmul.bf16.gmra.mxu0 %v3615
        %v3656 = vpop.f32.mrf.mxu0
        %v3657 = vadd.f32 0.0, %v3656
        %v3658 = vpop.f32.mrf.mxu0
        %v3659 = vadd.f32 0.0, %v3658
        %3660 = vmatmul.bf16.gmra.mxu0 %v3618
        %v3661 = vpop.f32.mrf.mxu0
        %v3662 = vadd.f32 0.0, %v3661
        %v3663 = vpop.f32.mrf.mxu0
        %v3664 = vadd.f32 0.0, %v3663
        %3665 = vmatmul.bf16.gmra.mxu0 %v3621
        %v3666 = vpop.f32.mrf.mxu0
        %v3667 = vadd.f32 0.0, %v3666
        %v3668 = vpop.f32.mrf.mxu0
        %v3669 = vadd.f32 0.0, %v3668
        %3670 = vmatmul.bf16.gmra.mxu0 %v3624
        %v3671 = vpop.f32.mrf.mxu0
        %v3672 = vadd.f32 0.0, %v3671
        %v3673 = vpop.f32.mrf.mxu0
        %v3674 = vadd.f32 0.0, %v3673
        %3675 = vmatmul.bf16.gmra.mxu0 %v3627
        %v3676 = vpop.f32.mrf.mxu0
        %v3677 = vadd.f32 0.0, %v3676
        %v3678 = vpop.f32.mrf.mxu0
        %v3679 = vadd.f32 0.0, %v3678
        %3680 = vdwg.mxu0
        %v3681 = vadd.f32 %v3334, %v3642
        %v3682 = vadd.f32 %v3336, %v3644
        %v3683 = vadd.f32 %v3339, %v3647
        %v3684 = vadd.f32 %v3341, %v3649
        %v3685 = vadd.f32 %v3344, %v3652
        %v3686 = vadd.f32 %v3346, %v3654
        %v3687 = vadd.f32 %v3349, %v3657
        %v3688 = vadd.f32 %v3351, %v3659
        %v3689 = vadd.f32 %v3354, %v3662
        %v3690 = vadd.f32 %v3356, %v3664
        %v3691 = vadd.f32 %v3359, %v3667
        %v3692 = vadd.f32 %v3361, %v3669
        %v3693 = vadd.f32 %v3364, %v3672
        %v3694 = vadd.f32 %v3366, %v3674
        %v3695 = vadd.f32 %v3369, %v3677
        %v3696 = vadd.f32 %v3371, %v3679
        %s3697 = scalar_lea.vmem %s2, 2
        %v3698 = vld [vmem:[%s3697] sm:$0x1]
        %v3700 = vperm.slane %v3698, 0
        %v3702 = vadd.f32 %v3681, %v3700
        %v3703 = vadd.f32 %v3682, %v3700
        %v3704 = vadd.f32 %v3683, %v3700
        %v3705 = vadd.f32 %v3684, %v3700
        %v3706 = vadd.f32 %v3685, %v3700
        %v3707 = vadd.f32 %v3686, %v3700
        %v3708 = vadd.f32 %v3687, %v3700
        %v3709 = vadd.f32 %v3688, %v3700
        %v3710 = vadd.f32 %v3689, %v3700
        %v3711 = vadd.f32 %v3690, %v3700
        %v3712 = vadd.f32 %v3691, %v3700
        %v3713 = vadd.f32 %v3692, %v3700
        %v3714 = vadd.f32 %v3693, %v3700
        %v3715 = vadd.f32 %v3694, %v3700
        %v3716 = vadd.f32 %v3695, %v3700
        %v3717 = vadd.f32 %v3696, %v3700
        %v3718 = vmax.f32 %v3702, 0.0
        %v3719 = vmax.f32 %v3703, 0.0
        %v3720 = vmax.f32 %v3704, 0.0
        %v3721 = vmax.f32 %v3705, 0.0
        %v3722 = vmax.f32 %v3706, 0.0
        %v3723 = vmax.f32 %v3707, 0.0
        %v3724 = vmax.f32 %v3708, 0.0
        %v3725 = vmax.f32 %v3709, 0.0
        %v3726 = vmax.f32 %v3710, 0.0
        %v3727 = vmax.f32 %v3711, 0.0
        %v3728 = vmax.f32 %v3712, 0.0
        %v3729 = vmax.f32 %v3713, 0.0
        %v3730 = vmax.f32 %v3714, 0.0
        %v3731 = vmax.f32 %v3715, 0.0
        %v3732 = vmax.f32 %v3716, 0.0
        %v3733 = vmax.f32 %v3717, 0.0
        %v3734 = vpack.c.bf16 %v3719, %v3718
        %v3735 = vpack.c.bf16 %v3721, %v3720
        %v3736 = vpack.c.bf16 %v3723, %v3722
        %v3737 = vpack.c.bf16 %v3725, %v3724
        %v3738 = vpack.c.bf16 %v3727, %v3726
        %v3739 = vpack.c.bf16 %v3729, %v3728
        %v3740 = vpack.c.bf16 %v3731, %v3730
        %v3741 = vpack.c.bf16 %v3733, %v3732
        %s3742 = scalar_lea.vmem %s3, 128
        %v3743 = vld [vmem:[%s3742] sm:$0xf]
        %v3744 = vld [vmem:[%s3742 + $0x4] sm:$0xf]
        %v3745 = vld [vmem:[%s3742 + $0x8] sm:$0xf]
        %v3746 = vld [vmem:[%s3742 + $0xc] sm:$0xf]
        %v3747 = vld [vmem:[%s3742 + $0x10] sm:$0xf]
        %v3748 = vld [vmem:[%s3742 + $0x14] sm:$0xf]
        %v3749 = vld [vmem:[%s3742 + $0x18] sm:$0xf]
        %v3750 = vld [vmem:[%s3742 + $0x1c] sm:$0xf]
        %v3751 = vld [vmem:[%s3742 + $0x20] sm:$0xf]
        %v3752 = vld [vmem:[%s3742 + $0x24] sm:$0xf]
        %v3753 = vld [vmem:[%s3742 + $0x28] sm:$0xf]
        %v3754 = vld [vmem:[%s3742 + $0x2c] sm:$0xf]
        %v3755 = vld [vmem:[%s3742 + $0x30] sm:$0xf]
        %v3756 = vld [vmem:[%s3742 + $0x34] sm:$0xf]
        %v3757 = vld [vmem:[%s3742 + $0x38] sm:$0xf]
        %v3758 = vld [vmem:[%s3742 + $0x3c] sm:$0xf]
        %v3775 = vunpack.c.l.b16 %v3743
        %v3776 = vunpack.c.l.b16 %v3744
        %v3777 = vunpack.c.l.b16 %v3745
        %v3778 = vunpack.c.l.b16 %v3746
        %v3779 = vunpack.c.l.b16 %v3747
        %v3780 = vunpack.c.l.b16 %v3748
        %v3781 = vunpack.c.l.b16 %v3749
        %v3782 = vunpack.c.l.b16 %v3750
        %v3783 = vunpack.c.l.b16 %v3751
        %v3784 = vunpack.c.l.b16 %v3752
        %v3785 = vunpack.c.l.b16 %v3753
        %v3786 = vunpack.c.l.b16 %v3754
        %v3787 = vunpack.c.l.b16 %v3755
        %v3788 = vunpack.c.l.b16 %v3756
        %v3789 = vunpack.c.l.b16 %v3757
        %v3790 = vunpack.c.l.b16 %v3758
        %v3791 = vpack.c.b16 %v3776, %v3775
        %v3792 = vpack.c.b16 %v3778, %v3777
        %v3793 = vpack.c.b16 %v3780, %v3779
        %v3794 = vpack.c.b16 %v3782, %v3781
        %v3795 = vpack.c.b16 %v3784, %v3783
        %v3796 = vpack.c.b16 %v3786, %v3785
        %v3797 = vpack.c.b16 %v3788, %v3787
        %v3798 = vpack.c.b16 %v3790, %v3789
        %3807 = vmatpush.bf16.msra.mxu0 %v3798
        %3808 = vmatpush.bf16.msra.mxu0 %v3797
        %3809 = vmatpush.bf16.msra.mxu0 %v3796
        %3810 = vmatpush.bf16.msra.mxu0 %v3795
        %3811 = vmatpush.bf16.msra.mxu0 %v3794
        %3812 = vmatpush.bf16.msra.mxu0 %v3793
        %3813 = vmatpush.bf16.msra.mxu0 %v3792
        %3814 = vmatpush.bf16.msra.mxu0 %v3791
        %3815 = vmatmul.bf16.gmra.mxu0 %v3734
        %v3816 = vpop.f32.mrf.mxu0
        %v3817 = vadd.f32 0.0, %v3816
        %v3818 = vpop.f32.mrf.mxu0
        %v3819 = vadd.f32 0.0, %v3818
        %3820 = vmatmul.bf16.gmra.mxu0 %v3735
        %v3821 = vpop.f32.mrf.mxu0
        %v3822 = vadd.f32 0.0, %v3821
        %v3823 = vpop.f32.mrf.mxu0
        %v3824 = vadd.f32 0.0, %v3823
        %3825 = vmatmul.bf16.gmra.mxu0 %v3736
        %v3826 = vpop.f32.mrf.mxu0
        %v3827 = vadd.f32 0.0, %v3826
        %v3828 = vpop.f32.mrf.mxu0
        %v3829 = vadd.f32 0.0, %v3828
        %3830 = vmatmul.bf16.gmra.mxu0 %v3737
        %v3831 = vpop.f32.mrf.mxu0
        %v3832 = vadd.f32 0.0, %v3831
        %v3833 = vpop.f32.mrf.mxu0
        %v3834 = vadd.f32 0.0, %v3833
        %3835 = vmatmul.bf16.gmra.mxu0 %v3738
        %v3836 = vpop.f32.mrf.mxu0
        %v3837 = vadd.f32 0.0, %v3836
        %v3838 = vpop.f32.mrf.mxu0
        %v3839 = vadd.f32 0.0, %v3838
        %3840 = vmatmul.bf16.gmra.mxu0 %v3739
        %v3841 = vpop.f32.mrf.mxu0
        %v3842 = vadd.f32 0.0, %v3841
        %v3843 = vpop.f32.mrf.mxu0
        %v3844 = vadd.f32 0.0, %v3843
        %3845 = vmatmul.bf16.gmra.mxu0 %v3740
        %v3846 = vpop.f32.mrf.mxu0
        %v3847 = vadd.f32 0.0, %v3846
        %v3848 = vpop.f32.mrf.mxu0
        %v3849 = vadd.f32 0.0, %v3848
        %3850 = vmatmul.bf16.gmra.mxu0 %v3741
        %v3851 = vpop.f32.mrf.mxu0
        %v3852 = vadd.f32 0.0, %v3851
        %v3853 = vpop.f32.mrf.mxu0
        %v3854 = vadd.f32 0.0, %v3853
        %3855 = vdwg.mxu0
        %v3856 = vadd.f32 %v2801, %v3817
        %v3857 = vadd.f32 %v2803, %v3819
        %v3858 = vadd.f32 %v2806, %v3822
        %v3859 = vadd.f32 %v2808, %v3824
        %v3860 = vadd.f32 %v2811, %v3827
        %v3861 = vadd.f32 %v2813, %v3829
        %v3862 = vadd.f32 %v2816, %v3832
        %v3863 = vadd.f32 %v2818, %v3834
        %v3864 = vadd.f32 %v2821, %v3837
        %v3865 = vadd.f32 %v2823, %v3839
        %v3866 = vadd.f32 %v2826, %v3842
        %v3867 = vadd.f32 %v2828, %v3844
        %v3868 = vadd.f32 %v2831, %v3847
        %v3869 = vadd.f32 %v2833, %v3849
        %v3870 = vadd.f32 %v2836, %v3852
        %v3871 = vadd.f32 %v2838, %v3854
        %s3872 = smul.u32 %s723, 56
        %s3873 = scalar_lea.vmem [#allocation2], %s3872
        %v3874 = vld [vmem:[%s3873] sm:$0xff]
        %v3875 = vld [vmem:[%s3873 + $0x8] sm:$0xff]
        %v3876 = vld [vmem:[%s3873 + $0x38] sm:$0xff]
        %v3877 = vld [vmem:[%s3873 + $0x40] sm:$0xff]
        %v3878 = vld [vmem:[%s3873 + $0x70] sm:$0xff]
        %v3879 = vld [vmem:[%s3873 + $0x78] sm:$0xff]
        %v3880 = vld [vmem:[%s3873 + $0xa8] sm:$0xff]
        %v3881 = vld [vmem:[%s3873 + $0xb0] sm:$0xff]
        %v3882 = vld [vmem:[%s3873 + $0xe0] sm:$0xff]
        %v3883 = vld [vmem:[%s3873 + $0xe8] sm:$0xff]
        %v3884 = vld [vmem:[%s3873 + $0x118] sm:$0xff]
        %v3885 = vld [vmem:[%s3873 + $0x120] sm:$0xff]
        %v3886 = vld [vmem:[%s3873 + $0x150] sm:$0xff]
        %v3887 = vld [vmem:[%s3873 + $0x158] sm:$0xff]
        %v3888 = vld [vmem:[%s3873 + $0x188] sm:$0xff]
        %v3889 = vld [vmem:[%s3873 + $0x190] sm:$0xff]
        %v3890 = vld [vmem:[%s3873 + $0x12] sm:$0xff]
        %v3891 = vld [vmem:[%s3873 + $0x1a] sm:$0xff]
        %v3892 = vld [vmem:[%s3873 + $0x4a] sm:$0xff]
        %v3893 = vld [vmem:[%s3873 + $0x52] sm:$0xff]
        %v3894 = vld [vmem:[%s3873 + $0x82] sm:$0xff]
        %v3895 = vld [vmem:[%s3873 + $0x8a] sm:$0xff]
        %v3896 = vld [vmem:[%s3873 + $0xba] sm:$0xff]
        %v3897 = vld [vmem:[%s3873 + $0xc2] sm:$0xff]
        %v3898 = vld [vmem:[%s3873 + $0xf2] sm:$0xff]
        %v3899 = vld [vmem:[%s3873 + $0xfa] sm:$0xff]
        %v3900 = vld [vmem:[%s3873 + $0x12a] sm:$0xff]
        %v3901 = vld [vmem:[%s3873 + $0x132] sm:$0xff]
        %v3902 = vld [vmem:[%s3873 + $0x162] sm:$0xff]
        %v3903 = vld [vmem:[%s3873 + $0x16a] sm:$0xff]
        %v3904 = vld [vmem:[%s3873 + $0x19a] sm:$0xff]
        %v3905 = vld [vmem:[%s3873 + $0x1a2] sm:$0xff]
        %v3906 = vld [vmem:[%s3873 + $0x24] sm:$0xff]
        %v3907 = vld [vmem:[%s3873 + $0x2c] sm:$0xff]
        %v3908 = vld [vmem:[%s3873 + $0x5c] sm:$0xff]
        %v3909 = vld [vmem:[%s3873 + $0x64] sm:$0xff]
        %v3910 = vld [vmem:[%s3873 + $0x94] sm:$0xff]
        %v3911 = vld [vmem:[%s3873 + $0x9c] sm:$0xff]
        %v3912 = vld [vmem:[%s3873 + $0xcc] sm:$0xff]
        %v3913 = vld [vmem:[%s3873 + $0xd4] sm:$0xff]
        %v3914 = vld [vmem:[%s3873 + $0x104] sm:$0xff]
        %v3915 = vld [vmem:[%s3873 + $0x10c] sm:$0xff]
        %v3916 = vld [vmem:[%s3873 + $0x13c] sm:$0xff]
        %v3917 = vld [vmem:[%s3873 + $0x144] sm:$0xff]
        %v3918 = vld [vmem:[%s3873 + $0x174] sm:$0xff]
        %v3919 = vld [vmem:[%s3873 + $0x17c] sm:$0xff]
        %v3920 = vld [vmem:[%s3873 + $0x1ac] sm:$0xff]
        %v3921 = vld [vmem:[%s3873 + $0x1b4] sm:$0xff]
        %3938 = vrot.lane.b32.xlu0 %v3890, 8
        %v3939 = vpop.permute.xlu0 %3938
        %3940 = vrot.lane.b32.xlu0 %v3891, 8
        %v3941 = vpop.permute.xlu0 %3940
        %3942 = vrot.lane.b32.xlu0 %v3892, 8
        %v3943 = vpop.permute.xlu0 %3942
        %3944 = vrot.lane.b32.xlu0 %v3893, 8
        %v3945 = vpop.permute.xlu0 %3944
        %3946 = vrot.lane.b32.xlu0 %v3894, 8
        %v3947 = vpop.permute.xlu0 %3946
        %3948 = vrot.lane.b32.xlu0 %v3895, 8
        %v3949 = vpop.permute.xlu0 %3948
        %3950 = vrot.lane.b32.xlu0 %v3896, 8
        %v3951 = vpop.permute.xlu0 %3950
        %3952 = vrot.lane.b32.xlu0 %v3897, 8
        %v3953 = vpop.permute.xlu0 %3952
        %3954 = vrot.lane.b32.xlu0 %v3898, 8
        %v3955 = vpop.permute.xlu0 %3954
        %3956 = vrot.lane.b32.xlu0 %v3899, 8
        %v3957 = vpop.permute.xlu0 %3956
        %3958 = vrot.lane.b32.xlu0 %v3900, 8
        %v3959 = vpop.permute.xlu0 %3958
        %3960 = vrot.lane.b32.xlu0 %v3901, 8
        %v3961 = vpop.permute.xlu0 %3960
        %3962 = vrot.lane.b32.xlu0 %v3902, 8
        %v3963 = vpop.permute.xlu0 %3962
        %3964 = vrot.lane.b32.xlu0 %v3903, 8
        %v3965 = vpop.permute.xlu0 %3964
        %3966 = vrot.lane.b32.xlu0 %v3904, 8
        %v3967 = vpop.permute.xlu0 %3966
        %3968 = vrot.lane.b32.xlu0 %v3905, 8
        %v3969 = vpop.permute.xlu0 %3968
        %4002 = vrot.lane.b32.xlu0 %v3906, 16
        %v4003 = vpop.permute.xlu0 %4002
        %4004 = vrot.lane.b32.xlu0 %v3907, 16
        %v4005 = vpop.permute.xlu0 %4004
        %4006 = vrot.lane.b32.xlu0 %v3908, 16
        %v4007 = vpop.permute.xlu0 %4006
        %4008 = vrot.lane.b32.xlu0 %v3909, 16
        %v4009 = vpop.permute.xlu0 %4008
        %4010 = vrot.lane.b32.xlu0 %v3910, 16
        %v4011 = vpop.permute.xlu0 %4010
        %4012 = vrot.lane.b32.xlu0 %v3911, 16
        %v4013 = vpop.permute.xlu0 %4012
        %4014 = vrot.lane.b32.xlu0 %v3912, 16
        %v4015 = vpop.permute.xlu0 %4014
        %4016 = vrot.lane.b32.xlu0 %v3913, 16
        %v4017 = vpop.permute.xlu0 %4016
        %4018 = vrot.lane.b32.xlu0 %v3914, 16
        %v4019 = vpop.permute.xlu0 %4018
        %4020 = vrot.lane.b32.xlu0 %v3915, 16
        %v4021 = vpop.permute.xlu0 %4020
        %4022 = vrot.lane.b32.xlu0 %v3916, 16
        %v4023 = vpop.permute.xlu0 %4022
        %4024 = vrot.lane.b32.xlu0 %v3917, 16
        %v4025 = vpop.permute.xlu0 %4024
        %4026 = vrot.lane.b32.xlu0 %v3918, 16
        %v4027 = vpop.permute.xlu0 %4026
        %4028 = vrot.lane.b32.xlu0 %v3919, 16
        %v4029 = vpop.permute.xlu0 %4028
        %4030 = vrot.lane.b32.xlu0 %v3920, 16
        %v4031 = vpop.permute.xlu0 %4030
        %4032 = vrot.lane.b32.xlu0 %v3921, 16
        %v4033 = vpop.permute.xlu0 %4032
        %v4050 = vsel %vm903, %v3874, %v3939
        %v4051 = vsel %vm903, %v3875, %v3941
        %v4052 = vsel %vm903, %v3876, %v3943
        %v4053 = vsel %vm903, %v3877, %v3945
        %v4054 = vsel %vm903, %v3878, %v3947
        %v4055 = vsel %vm903, %v3879, %v3949
        %v4056 = vsel %vm903, %v3880, %v3951
        %v4057 = vsel %vm903, %v3881, %v3953
        %v4058 = vsel %vm903, %v3882, %v3955
        %v4059 = vsel %vm903, %v3883, %v3957
        %v4060 = vsel %vm903, %v3884, %v3959
        %v4061 = vsel %vm903, %v3885, %v3961
        %v4062 = vsel %vm903, %v3886, %v3963
        %v4063 = vsel %vm903, %v3887, %v3965
        %v4064 = vsel %vm903, %v3888, %v3967
        %v4065 = vsel %vm903, %v3889, %v3969
        %v4066 = vsel %vm920, %v4050, %v4003
        %v4067 = vsel %vm920, %v4051, %v4005
        %v4068 = vsel %vm920, %v4052, %v4007
        %v4069 = vsel %vm920, %v4053, %v4009
        %v4070 = vsel %vm920, %v4054, %v4011
        %v4071 = vsel %vm920, %v4055, %v4013
        %v4072 = vsel %vm920, %v4056, %v4015
        %v4073 = vsel %vm920, %v4057, %v4017
        %v4074 = vsel %vm920, %v4058, %v4019
        %v4075 = vsel %vm920, %v4059, %v4021
        %v4076 = vsel %vm920, %v4060, %v4023
        %v4077 = vsel %vm920, %v4061, %v4025
        %v4078 = vsel %vm920, %v4062, %v4027
        %v4079 = vsel %vm920, %v4063, %v4029
        %v4080 = vsel %vm920, %v4064, %v4031
        %v4081 = vsel %vm920, %v4065, %v4033
        %v4082 = vpack.c.bf16 %v4067, %v4066
        %v4083 = vpack.c.bf16 %v4069, %v4068
        %v4084 = vpack.c.bf16 %v4071, %v4070
        %v4085 = vpack.c.bf16 %v4073, %v4072
        %v4086 = vpack.c.bf16 %v4075, %v4074
        %v4087 = vpack.c.bf16 %v4077, %v4076
        %v4088 = vpack.c.bf16 %v4079, %v4078
        %v4089 = vpack.c.bf16 %v4081, %v4080
        %s4090 = scalar_lea.vmem [#allocation3], 108
        %v4091 = vld [vmem:[%s4090] sm:$0xf]
        %v4092 = vld [vmem:[%s4090 + $0x4] sm:$0xf]
        %v4093 = vld [vmem:[%s4090 + $0x8] sm:$0xf]
        %v4094 = vld [vmem:[%s950] sm:$0xff]
        %v4095 = vld [vmem:[%s950 + $0x8] sm:$0xff]
        %v4096 = vld [vmem:[%s950 + $0x38] sm:$0xff]
        %v4097 = vld [vmem:[%s950 + $0x40] sm:$0xff]
        %v4098 = vld [vmem:[%s950 + $0x70] sm:$0xff]
        %v4099 = vld [vmem:[%s950 + $0x78] sm:$0xff]
        %v4100 = vld [vmem:[%s950 + $0xa8] sm:$0xff]
        %v4101 = vld [vmem:[%s950 + $0xb0] sm:$0xff]
        %v4102 = vld [vmem:[%s950 + $0xe0] sm:$0xff]
        %v4103 = vld [vmem:[%s950 + $0xe8] sm:$0xff]
        %v4104 = vld [vmem:[%s950 + $0x118] sm:$0xff]
        %v4105 = vld [vmem:[%s950 + $0x120] sm:$0xff]
        %v4106 = vld [vmem:[%s950 + $0x150] sm:$0xff]
        %v4107 = vld [vmem:[%s950 + $0x158] sm:$0xff]
        %v4108 = vld [vmem:[%s950 + $0x188] sm:$0xff]
        %v4109 = vld [vmem:[%s950 + $0x190] sm:$0xff]
        %v4110 = vld [vmem:[%s950 + $0x24] sm:$0xff]
        %v4111 = vld [vmem:[%s950 + $0x2c] sm:$0xff]
        %v4112 = vld [vmem:[%s950 + $0x5c] sm:$0xff]
        %v4113 = vld [vmem:[%s950 + $0x64] sm:$0xff]
        %v4114 = vld [vmem:[%s950 + $0x94] sm:$0xff]
        %v4115 = vld [vmem:[%s950 + $0x9c] sm:$0xff]
        %v4116 = vld [vmem:[%s950 + $0xcc] sm:$0xff]
        %v4117 = vld [vmem:[%s950 + $0xd4] sm:$0xff]
        %v4118 = vld [vmem:[%s950 + $0x104] sm:$0xff]
        %v4119 = vld [vmem:[%s950 + $0x10c] sm:$0xff]
        %v4120 = vld [vmem:[%s950 + $0x13c] sm:$0xff]
        %v4121 = vld [vmem:[%s950 + $0x144] sm:$0xff]
        %v4122 = vld [vmem:[%s950 + $0x174] sm:$0xff]
        %v4123 = vld [vmem:[%s950 + $0x17c] sm:$0xff]
        %v4124 = vld [vmem:[%s950 + $0x1ac] sm:$0xff]
        %v4125 = vld [vmem:[%s950 + $0x1b4] sm:$0xff]
        %4142 = vrot.lane.b32.xlu0 %v4110, 16
        %v4143 = vpop.permute.xlu0 %4142
        %4144 = vrot.lane.b32.xlu0 %v4111, 16
        %v4145 = vpop.permute.xlu0 %4144
        %4146 = vrot.lane.b32.xlu0 %v4112, 16
        %v4147 = vpop.permute.xlu0 %4146
        %4148 = vrot.lane.b32.xlu0 %v4113, 16
        %v4149 = vpop.permute.xlu0 %4148
        %4150 = vrot.lane.b32.xlu0 %v4114, 16
        %v4151 = vpop.permute.xlu0 %4150
        %4152 = vrot.lane.b32.xlu0 %v4115, 16
        %v4153 = vpop.permute.xlu0 %4152
        %4154 = vrot.lane.b32.xlu0 %v4116, 16
        %v4155 = vpop.permute.xlu0 %4154
        %4156 = vrot.lane.b32.xlu0 %v4117, 16
        %v4157 = vpop.permute.xlu0 %4156
        %4158 = vrot.lane.b32.xlu0 %v4118, 16
        %v4159 = vpop.permute.xlu0 %4158
        %4160 = vrot.lane.b32.xlu0 %v4119, 16
        %v4161 = vpop.permute.xlu0 %4160
        %4162 = vrot.lane.b32.xlu0 %v4120, 16
        %v4163 = vpop.permute.xlu0 %4162
        %4164 = vrot.lane.b32.xlu0 %v4121, 16
        %v4165 = vpop.permute.xlu0 %4164
        %4166 = vrot.lane.b32.xlu0 %v4122, 16
        %v4167 = vpop.permute.xlu0 %4166
        %4168 = vrot.lane.b32.xlu0 %v4123, 16
        %v4169 = vpop.permute.xlu0 %4168
        %4170 = vrot.lane.b32.xlu0 %v4124, 16
        %v4171 = vpop.permute.xlu0 %4170
        %4172 = vrot.lane.b32.xlu0 %v4125, 16
        %v4173 = vpop.permute.xlu0 %4172
        %v4190 = vsel %vm903, %v4094, %v1016
        %v4191 = vsel %vm903, %v4095, %v1018
        %v4192 = vsel %vm903, %v4096, %v1020
        %v4193 = vsel %vm903, %v4097, %v1022
        %v4194 = vsel %vm903, %v4098, %v1024
        %v4195 = vsel %vm903, %v4099, %v1026
        %v4196 = vsel %vm903, %v4100, %v1028
        %v4197 = vsel %vm903, %v4101, %v1030
        %v4198 = vsel %vm903, %v4102, %v1032
        %v4199 = vsel %vm903, %v4103, %v1034
        %v4200 = vsel %vm903, %v4104, %v1036
        %v4201 = vsel %vm903, %v4105, %v1038
        %v4202 = vsel %vm903, %v4106, %v1040
        %v4203 = vsel %vm903, %v4107, %v1042
        %v4204 = vsel %vm903, %v4108, %v1044
        %v4205 = vsel %vm903, %v4109, %v1046
        %v4206 = vsel %vm920, %v4190, %v4143
        %v4207 = vsel %vm920, %v4191, %v4145
        %v4208 = vsel %vm920, %v4192, %v4147
        %v4209 = vsel %vm920, %v4193, %v4149
        %v4210 = vsel %vm920, %v4194, %v4151
        %v4211 = vsel %vm920, %v4195, %v4153
        %v4212 = vsel %vm920, %v4196, %v4155
        %v4213 = vsel %vm920, %v4197, %v4157
        %v4214 = vsel %vm920, %v4198, %v4159
        %v4215 = vsel %vm920, %v4199, %v4161
        %v4216 = vsel %vm920, %v4200, %v4163
        %v4217 = vsel %vm920, %v4201, %v4165
        %v4218 = vsel %vm920, %v4202, %v4167
        %v4219 = vsel %vm920, %v4203, %v4169
        %v4220 = vsel %vm920, %v4204, %v4171
        %v4221 = vsel %vm920, %v4205, %v4173
        %v4222 = vpack.c.bf16 %v4207, %v4206
        %v4223 = vpack.c.bf16 %v4209, %v4208
        %v4224 = vpack.c.bf16 %v4211, %v4210
        %v4225 = vpack.c.bf16 %v4213, %v4212
        %v4226 = vpack.c.bf16 %v4215, %v4214
        %v4227 = vpack.c.bf16 %v4217, %v4216
        %v4228 = vpack.c.bf16 %v4219, %v4218
        %v4229 = vpack.c.bf16 %v4221, %v4220
        %s4230 = scalar_lea.vmem [#allocation3], 120
        %v4231 = vld [vmem:[%s4230] sm:$0xf]
        %v4232 = vld [vmem:[%s4230 + $0x4] sm:$0xf]
        %v4233 = vld [vmem:[%s4230 + $0x8] sm:$0xf]
        %v4237 = vunpack.c.l.b16 %v4231
        %v4238 = vunpack.c.l.b16 %v4232
        %v4239 = vunpack.c.l.b16 %v4233
        %v4240 = vpack.c.b16 %v4238, %v4237
        %v4241 = vpack.c.b16 %v4239, %v4239
        %v4244 = vsel %vm1180, %v4222, 0
        %v4247 = vsel %vm1180, %v4223, 0
        %v4250 = vsel %vm1180, %v4224, 0
        %v4253 = vsel %vm1180, %v4225, 0
        %v4256 = vsel %vm1180, %v4226, 0
        %v4259 = vsel %vm1180, %v4227, 0
        %v4262 = vsel %vm1180, %v4228, 0
        %v4265 = vsel %vm1180, %v4229, 0
        %v4268 = vsel %vm1205, %v4241, 0
        %4270 = vmatpush.bf16.msra.mxu0 0
        %4271 = vmatpush.bf16.msra.mxu0 0
        %4272 = vmatpush.bf16.msra.mxu0 0
        %4273 = vmatpush.bf16.msra.mxu0 0
        %4274 = vmatpush.bf16.msra.mxu0 0
        %4275 = vmatpush.bf16.msra.mxu0 0
        %4276 = vmatpush.bf16.msra.mxu0 %v4268
        %4277 = vmatpush.bf16.msra.mxu0 %v4240
        %4278 = vmatmul.bf16.gmra.mxu0 %v4244
        %v4279 = vpop.f32.mrf.mxu0
        %v4280 = vadd.f32 0.0, %v4279
        %v4281 = vpop.f32.mrf.mxu0
        %v4282 = vadd.f32 0.0, %v4281
        %4283 = vmatmul.bf16.gmra.mxu0 %v4247
        %v4284 = vpop.f32.mrf.mxu0
        %v4285 = vadd.f32 0.0, %v4284
        %v4286 = vpop.f32.mrf.mxu0
        %v4287 = vadd.f32 0.0, %v4286
        %4288 = vmatmul.bf16.gmra.mxu0 %v4250
        %v4289 = vpop.f32.mrf.mxu0
        %v4290 = vadd.f32 0.0, %v4289
        %v4291 = vpop.f32.mrf.mxu0
        %v4292 = vadd.f32 0.0, %v4291
        %4293 = vmatmul.bf16.gmra.mxu0 %v4253
        %v4294 = vpop.f32.mrf.mxu0
        %v4295 = vadd.f32 0.0, %v4294
        %v4296 = vpop.f32.mrf.mxu0
        %v4297 = vadd.f32 0.0, %v4296
        %4298 = vmatmul.bf16.gmra.mxu0 %v4256
        %v4299 = vpop.f32.mrf.mxu0
        %v4300 = vadd.f32 0.0, %v4299
        %v4301 = vpop.f32.mrf.mxu0
        %v4302 = vadd.f32 0.0, %v4301
        %4303 = vmatmul.bf16.gmra.mxu0 %v4259
        %v4304 = vpop.f32.mrf.mxu0
        %v4305 = vadd.f32 0.0, %v4304
        %v4306 = vpop.f32.mrf.mxu0
        %v4307 = vadd.f32 0.0, %v4306
        %4308 = vmatmul.bf16.gmra.mxu0 %v4262
        %v4309 = vpop.f32.mrf.mxu0
        %v4310 = vadd.f32 0.0, %v4309
        %v4311 = vpop.f32.mrf.mxu0
        %v4312 = vadd.f32 0.0, %v4311
        %4313 = vmatmul.bf16.gmra.mxu0 %v4265
        %v4314 = vpop.f32.mrf.mxu0
        %v4315 = vadd.f32 0.0, %v4314
        %v4316 = vpop.f32.mrf.mxu0
        %v4317 = vadd.f32 0.0, %v4316
        %4318 = vdwg.mxu0
        %v4322 = vunpack.c.l.b16 %v4091
        %v4323 = vunpack.c.l.b16 %v4092
        %v4324 = vunpack.c.l.b16 %v4093
        %v4325 = vpack.c.b16 %v4323, %v4322
        %v4326 = vpack.c.b16 %v4324, %v4324
        %v4329 = vsel %vm1180, %v4082, 0
        %v4332 = vsel %vm1180, %v4083, 0
        %v4335 = vsel %vm1180, %v4084, 0
        %v4338 = vsel %vm1180, %v4085, 0
        %v4341 = vsel %vm1180, %v4086, 0
        %v4344 = vsel %vm1180, %v4087, 0
        %v4347 = vsel %vm1180, %v4088, 0
        %v4350 = vsel %vm1180, %v4089, 0
        %v4353 = vsel %vm1205, %v4326, 0
        %4355 = vmatpush.bf16.msra.mxu0 0
        %4356 = vmatpush.bf16.msra.mxu0 0
        %4357 = vmatpush.bf16.msra.mxu0 0
        %4358 = vmatpush.bf16.msra.mxu0 0
        %4359 = vmatpush.bf16.msra.mxu0 0
        %4360 = vmatpush.bf16.msra.mxu0 0
        %4361 = vmatpush.bf16.msra.mxu0 %v4353
        %4362 = vmatpush.bf16.msra.mxu0 %v4325
        %4363 = vmatmul.bf16.gmra.mxu0 %v4329
        %v4364 = vpop.f32.mrf.mxu0
        %v4365 = vadd.f32 %v4280, %v4364
        %v4366 = vpop.f32.mrf.mxu0
        %v4367 = vadd.f32 %v4282, %v4366
        %4368 = vmatmul.bf16.gmra.mxu0 %v4332
        %v4369 = vpop.f32.mrf.mxu0
        %v4370 = vadd.f32 %v4285, %v4369
        %v4371 = vpop.f32.mrf.mxu0
        %v4372 = vadd.f32 %v4287, %v4371
        %4373 = vmatmul.bf16.gmra.mxu0 %v4335
        %v4374 = vpop.f32.mrf.mxu0
        %v4375 = vadd.f32 %v4290, %v4374
        %v4376 = vpop.f32.mrf.mxu0
        %v4377 = vadd.f32 %v4292, %v4376
        %4378 = vmatmul.bf16.gmra.mxu0 %v4338
        %v4379 = vpop.f32.mrf.mxu0
        %v4380 = vadd.f32 %v4295, %v4379
        %v4381 = vpop.f32.mrf.mxu0
        %v4382 = vadd.f32 %v4297, %v4381
        %4383 = vmatmul.bf16.gmra.mxu0 %v4341
        %v4384 = vpop.f32.mrf.mxu0
        %v4385 = vadd.f32 %v4300, %v4384
        %v4386 = vpop.f32.mrf.mxu0
        %v4387 = vadd.f32 %v4302, %v4386
        %4388 = vmatmul.bf16.gmra.mxu0 %v4344
        %v4389 = vpop.f32.mrf.mxu0
        %v4390 = vadd.f32 %v4305, %v4389
        %v4391 = vpop.f32.mrf.mxu0
        %v4392 = vadd.f32 %v4307, %v4391
        %4393 = vmatmul.bf16.gmra.mxu0 %v4347
        %v4394 = vpop.f32.mrf.mxu0
        %v4395 = vadd.f32 %v4310, %v4394
        %v4396 = vpop.f32.mrf.mxu0
        %v4397 = vadd.f32 %v4312, %v4396
        %4398 = vmatmul.bf16.gmra.mxu0 %v4350
        %v4399 = vpop.f32.mrf.mxu0
        %v4400 = vadd.f32 %v4315, %v4399
        %v4401 = vpop.f32.mrf.mxu0
        %v4402 = vadd.f32 %v4317, %v4401
        %4403 = vdwg.mxu0
        %s4404 = sadd.s32 %s723, 36
        %s4405 = smul.u32 %s4404, 56
        %s4406 = scalar_lea.vmem [#allocation2], %s4405
        %v4407 = vld [vmem:[%s4406] sm:$0xff]
        %v4408 = vld [vmem:[%s4406 + $0x8] sm:$0xff]
        %v4409 = vld [vmem:[%s4406 + $0x38] sm:$0xff]
        %v4410 = vld [vmem:[%s4406 + $0x40] sm:$0xff]
        %v4411 = vld [vmem:[%s4406 + $0x70] sm:$0xff]
        %v4412 = vld [vmem:[%s4406 + $0x78] sm:$0xff]
        %v4413 = vld [vmem:[%s4406 + $0xa8] sm:$0xff]
        %v4414 = vld [vmem:[%s4406 + $0xb0] sm:$0xff]
        %v4415 = vld [vmem:[%s4406 + $0xe0] sm:$0xff]
        %v4416 = vld [vmem:[%s4406 + $0xe8] sm:$0xff]
        %v4417 = vld [vmem:[%s4406 + $0x118] sm:$0xff]
        %v4418 = vld [vmem:[%s4406 + $0x120] sm:$0xff]
        %v4419 = vld [vmem:[%s4406 + $0x150] sm:$0xff]
        %v4420 = vld [vmem:[%s4406 + $0x158] sm:$0xff]
        %v4421 = vld [vmem:[%s4406 + $0x188] sm:$0xff]
        %v4422 = vld [vmem:[%s4406 + $0x190] sm:$0xff]
        %v4423 = vld [vmem:[%s4406 + $0x12] sm:$0xff]
        %v4424 = vld [vmem:[%s4406 + $0x1a] sm:$0xff]
        %v4425 = vld [vmem:[%s4406 + $0x4a] sm:$0xff]
        %v4426 = vld [vmem:[%s4406 + $0x52] sm:$0xff]
        %v4427 = vld [vmem:[%s4406 + $0x82] sm:$0xff]
        %v4428 = vld [vmem:[%s4406 + $0x8a] sm:$0xff]
        %v4429 = vld [vmem:[%s4406 + $0xba] sm:$0xff]
        %v4430 = vld [vmem:[%s4406 + $0xc2] sm:$0xff]
        %v4431 = vld [vmem:[%s4406 + $0xf2] sm:$0xff]
        %v4432 = vld [vmem:[%s4406 + $0xfa] sm:$0xff]
        %v4433 = vld [vmem:[%s4406 + $0x12a] sm:$0xff]
        %v4434 = vld [vmem:[%s4406 + $0x132] sm:$0xff]
        %v4435 = vld [vmem:[%s4406 + $0x162] sm:$0xff]
        %v4436 = vld [vmem:[%s4406 + $0x16a] sm:$0xff]
        %v4437 = vld [vmem:[%s4406 + $0x19a] sm:$0xff]
        %v4438 = vld [vmem:[%s4406 + $0x1a2] sm:$0xff]
        %v4439 = vld [vmem:[%s4406 + $0x24] sm:$0xff]
        %v4440 = vld [vmem:[%s4406 + $0x2c] sm:$0xff]
        %v4441 = vld [vmem:[%s4406 + $0x5c] sm:$0xff]
        %v4442 = vld [vmem:[%s4406 + $0x64] sm:$0xff]
        %v4443 = vld [vmem:[%s4406 + $0x94] sm:$0xff]
        %v4444 = vld [vmem:[%s4406 + $0x9c] sm:$0xff]
        %v4445 = vld [vmem:[%s4406 + $0xcc] sm:$0xff]
        %v4446 = vld [vmem:[%s4406 + $0xd4] sm:$0xff]
        %v4447 = vld [vmem:[%s4406 + $0x104] sm:$0xff]
        %v4448 = vld [vmem:[%s4406 + $0x10c] sm:$0xff]
        %v4449 = vld [vmem:[%s4406 + $0x13c] sm:$0xff]
        %v4450 = vld [vmem:[%s4406 + $0x144] sm:$0xff]
        %v4451 = vld [vmem:[%s4406 + $0x174] sm:$0xff]
        %v4452 = vld [vmem:[%s4406 + $0x17c] sm:$0xff]
        %v4453 = vld [vmem:[%s4406 + $0x1ac] sm:$0xff]
        %v4454 = vld [vmem:[%s4406 + $0x1b4] sm:$0xff]
        %4471 = vrot.lane.b32.xlu0 %v4423, 8
        %v4472 = vpop.permute.xlu0 %4471
        %4473 = vrot.lane.b32.xlu0 %v4424, 8
        %v4474 = vpop.permute.xlu0 %4473
        %4475 = vrot.lane.b32.xlu0 %v4425, 8
        %v4476 = vpop.permute.xlu0 %4475
        %4477 = vrot.lane.b32.xlu0 %v4426, 8
        %v4478 = vpop.permute.xlu0 %4477
        %4479 = vrot.lane.b32.xlu0 %v4427, 8
        %v4480 = vpop.permute.xlu0 %4479
        %4481 = vrot.lane.b32.xlu0 %v4428, 8
        %v4482 = vpop.permute.xlu0 %4481
        %4483 = vrot.lane.b32.xlu0 %v4429, 8
        %v4484 = vpop.permute.xlu0 %4483
        %4485 = vrot.lane.b32.xlu0 %v4430, 8
        %v4486 = vpop.permute.xlu0 %4485
        %4487 = vrot.lane.b32.xlu0 %v4431, 8
        %v4488 = vpop.permute.xlu0 %4487
        %4489 = vrot.lane.b32.xlu0 %v4432, 8
        %v4490 = vpop.permute.xlu0 %4489
        %4491 = vrot.lane.b32.xlu0 %v4433, 8
        %v4492 = vpop.permute.xlu0 %4491
        %4493 = vrot.lane.b32.xlu0 %v4434, 8
        %v4494 = vpop.permute.xlu0 %4493
        %4495 = vrot.lane.b32.xlu0 %v4435, 8
        %v4496 = vpop.permute.xlu0 %4495
        %4497 = vrot.lane.b32.xlu0 %v4436, 8
        %v4498 = vpop.permute.xlu0 %4497
        %4499 = vrot.lane.b32.xlu0 %v4437, 8
        %v4500 = vpop.permute.xlu0 %4499
        %4501 = vrot.lane.b32.xlu0 %v4438, 8
        %v4502 = vpop.permute.xlu0 %4501
        %4535 = vrot.lane.b32.xlu0 %v4439, 16
        %v4536 = vpop.permute.xlu0 %4535
        %4537 = vrot.lane.b32.xlu0 %v4440, 16
        %v4538 = vpop.permute.xlu0 %4537
        %4539 = vrot.lane.b32.xlu0 %v4441, 16
        %v4540 = vpop.permute.xlu0 %4539
        %4541 = vrot.lane.b32.xlu0 %v4442, 16
        %v4542 = vpop.permute.xlu0 %4541
        %4543 = vrot.lane.b32.xlu0 %v4443, 16
        %v4544 = vpop.permute.xlu0 %4543
        %4545 = vrot.lane.b32.xlu0 %v4444, 16
        %v4546 = vpop.permute.xlu0 %4545
        %4547 = vrot.lane.b32.xlu0 %v4445, 16
        %v4548 = vpop.permute.xlu0 %4547
        %4549 = vrot.lane.b32.xlu0 %v4446, 16
        %v4550 = vpop.permute.xlu0 %4549
        %4551 = vrot.lane.b32.xlu0 %v4447, 16
        %v4552 = vpop.permute.xlu0 %4551
        %4553 = vrot.lane.b32.xlu0 %v4448, 16
        %v4554 = vpop.permute.xlu0 %4553
        %4555 = vrot.lane.b32.xlu0 %v4449, 16
        %v4556 = vpop.permute.xlu0 %4555
        %4557 = vrot.lane.b32.xlu0 %v4450, 16
        %v4558 = vpop.permute.xlu0 %4557
        %4559 = vrot.lane.b32.xlu0 %v4451, 16
        %v4560 = vpop.permute.xlu0 %4559
        %4561 = vrot.lane.b32.xlu0 %v4452, 16
        %v4562 = vpop.permute.xlu0 %4561
        %4563 = vrot.lane.b32.xlu0 %v4453, 16
        %v4564 = vpop.permute.xlu0 %4563
        %4565 = vrot.lane.b32.xlu0 %v4454, 16
        %v4566 = vpop.permute.xlu0 %4565
        %v4583 = vsel %vm903, %v4407, %v4472
        %v4584 = vsel %vm903, %v4408, %v4474
        %v4585 = vsel %vm903, %v4409, %v4476
        %v4586 = vsel %vm903, %v4410, %v4478
        %v4587 = vsel %vm903, %v4411, %v4480
        %v4588 = vsel %vm903, %v4412, %v4482
        %v4589 = vsel %vm903, %v4413, %v4484
        %v4590 = vsel %vm903, %v4414, %v4486
        %v4591 = vsel %vm903, %v4415, %v4488
        %v4592 = vsel %vm903, %v4416, %v4490
        %v4593 = vsel %vm903, %v4417, %v4492
        %v4594 = vsel %vm903, %v4418, %v4494
        %v4595 = vsel %vm903, %v4419, %v4496
        %v4596 = vsel %vm903, %v4420, %v4498
        %v4597 = vsel %vm903, %v4421, %v4500
        %v4598 = vsel %vm903, %v4422, %v4502
        %v4599 = vsel %vm920, %v4583, %v4536
        %v4600 = vsel %vm920, %v4584, %v4538
        %v4601 = vsel %vm920, %v4585, %v4540
        %v4602 = vsel %vm920, %v4586, %v4542
        %v4603 = vsel %vm920, %v4587, %v4544
        %v4604 = vsel %vm920, %v4588, %v4546
        %v4605 = vsel %vm920, %v4589, %v4548
        %v4606 = vsel %vm920, %v4590, %v4550
        %v4607 = vsel %vm920, %v4591, %v4552
        %v4608 = vsel %vm920, %v4592, %v4554
        %v4609 = vsel %vm920, %v4593, %v4556
        %v4610 = vsel %vm920, %v4594, %v4558
        %v4611 = vsel %vm920, %v4595, %v4560
        %v4612 = vsel %vm920, %v4596, %v4562
        %v4613 = vsel %vm920, %v4597, %v4564
        %v4614 = vsel %vm920, %v4598, %v4566
        %v4615 = vpack.c.bf16 %v4600, %v4599
        %v4616 = vpack.c.bf16 %v4602, %v4601
        %v4617 = vpack.c.bf16 %v4604, %v4603
        %v4618 = vpack.c.bf16 %v4606, %v4605
        %v4619 = vpack.c.bf16 %v4608, %v4607
        %v4620 = vpack.c.bf16 %v4610, %v4609
        %v4621 = vpack.c.bf16 %v4612, %v4611
        %v4622 = vpack.c.bf16 %v4614, %v4613
        %s4623 = scalar_lea.vmem [#allocation3], 132
        %v4624 = vld [vmem:[%s4623] sm:$0xf]
        %v4625 = vld [vmem:[%s4623 + $0x4] sm:$0xf]
        %v4626 = vld [vmem:[%s4623 + $0x8] sm:$0xf]
        %v4630 = vunpack.c.l.b16 %v4624
        %v4631 = vunpack.c.l.b16 %v4625
        %v4632 = vunpack.c.l.b16 %v4626
        %v4633 = vpack.c.b16 %v4631, %v4630
        %v4634 = vpack.c.b16 %v4632, %v4632
        %v4637 = vsel %vm1180, %v4615, 0
        %v4640 = vsel %vm1180, %v4616, 0
        %v4643 = vsel %vm1180, %v4617, 0
        %v4646 = vsel %vm1180, %v4618, 0
        %v4649 = vsel %vm1180, %v4619, 0
        %v4652 = vsel %vm1180, %v4620, 0
        %v4655 = vsel %vm1180, %v4621, 0
        %v4658 = vsel %vm1180, %v4622, 0
        %v4661 = vsel %vm1205, %v4634, 0
        %4663 = vmatpush.bf16.msra.mxu0 0
        %4664 = vmatpush.bf16.msra.mxu0 0
        %4665 = vmatpush.bf16.msra.mxu0 0
        %4666 = vmatpush.bf16.msra.mxu0 0
        %4667 = vmatpush.bf16.msra.mxu0 0
        %4668 = vmatpush.bf16.msra.mxu0 0
        %4669 = vmatpush.bf16.msra.mxu0 %v4661
        %4670 = vmatpush.bf16.msra.mxu0 %v4633
        %4671 = vmatmul.bf16.gmra.mxu0 %v4637
        %v4672 = vpop.f32.mrf.mxu0
        %v4673 = vadd.f32 0.0, %v4672
        %v4674 = vpop.f32.mrf.mxu0
        %v4675 = vadd.f32 0.0, %v4674
        %4676 = vmatmul.bf16.gmra.mxu0 %v4640
        %v4677 = vpop.f32.mrf.mxu0
        %v4678 = vadd.f32 0.0, %v4677
        %v4679 = vpop.f32.mrf.mxu0
        %v4680 = vadd.f32 0.0, %v4679
        %4681 = vmatmul.bf16.gmra.mxu0 %v4643
        %v4682 = vpop.f32.mrf.mxu0
        %v4683 = vadd.f32 0.0, %v4682
        %v4684 = vpop.f32.mrf.mxu0
        %v4685 = vadd.f32 0.0, %v4684
        %4686 = vmatmul.bf16.gmra.mxu0 %v4646
        %v4687 = vpop.f32.mrf.mxu0
        %v4688 = vadd.f32 0.0, %v4687
        %v4689 = vpop.f32.mrf.mxu0
        %v4690 = vadd.f32 0.0, %v4689
        %4691 = vmatmul.bf16.gmra.mxu0 %v4649
        %v4692 = vpop.f32.mrf.mxu0
        %v4693 = vadd.f32 0.0, %v4692
        %v4694 = vpop.f32.mrf.mxu0
        %v4695 = vadd.f32 0.0, %v4694
        %4696 = vmatmul.bf16.gmra.mxu0 %v4652
        %v4697 = vpop.f32.mrf.mxu0
        %v4698 = vadd.f32 0.0, %v4697
        %v4699 = vpop.f32.mrf.mxu0
        %v4700 = vadd.f32 0.0, %v4699
        %4701 = vmatmul.bf16.gmra.mxu0 %v4655
        %v4702 = vpop.f32.mrf.mxu0
        %v4703 = vadd.f32 0.0, %v4702
        %v4704 = vpop.f32.mrf.mxu0
        %v4705 = vadd.f32 0.0, %v4704
        %4706 = vmatmul.bf16.gmra.mxu0 %v4658
        %v4707 = vpop.f32.mrf.mxu0
        %v4708 = vadd.f32 0.0, %v4707
        %v4709 = vpop.f32.mrf.mxu0
        %v4710 = vadd.f32 0.0, %v4709
        %4711 = vdwg.mxu0
        %v4712 = vadd.f32 %v4365, %v4673
        %v4713 = vadd.f32 %v4367, %v4675
        %v4714 = vadd.f32 %v4370, %v4678
        %v4715 = vadd.f32 %v4372, %v4680
        %v4716 = vadd.f32 %v4375, %v4683
        %v4717 = vadd.f32 %v4377, %v4685
        %v4718 = vadd.f32 %v4380, %v4688
        %v4719 = vadd.f32 %v4382, %v4690
        %v4720 = vadd.f32 %v4385, %v4693
        %v4721 = vadd.f32 %v4387, %v4695
        %v4722 = vadd.f32 %v4390, %v4698
        %v4723 = vadd.f32 %v4392, %v4700
        %v4724 = vadd.f32 %v4395, %v4703
        %v4725 = vadd.f32 %v4397, %v4705
        %v4726 = vadd.f32 %v4400, %v4708
        %v4727 = vadd.f32 %v4402, %v4710
        %s4728 = scalar_lea.vmem %s2, 3
        %v4729 = vld [vmem:[%s4728] sm:$0x1]
        %v4731 = vperm.slane %v4729, 0
        %v4733 = vadd.f32 %v4712, %v4731
        %v4734 = vadd.f32 %v4713, %v4731
        %v4735 = vadd.f32 %v4714, %v4731
        %v4736 = vadd.f32 %v4715, %v4731
        %v4737 = vadd.f32 %v4716, %v4731
        %v4738 = vadd.f32 %v4717, %v4731
        %v4739 = vadd.f32 %v4718, %v4731
        %v4740 = vadd.f32 %v4719, %v4731
        %v4741 = vadd.f32 %v4720, %v4731
        %v4742 = vadd.f32 %v4721, %v4731
        %v4743 = vadd.f32 %v4722, %v4731
        %v4744 = vadd.f32 %v4723, %v4731
        %v4745 = vadd.f32 %v4724, %v4731
        %v4746 = vadd.f32 %v4725, %v4731
        %v4747 = vadd.f32 %v4726, %v4731
        %v4748 = vadd.f32 %v4727, %v4731
        %v4749 = vmax.f32 %v4733, 0.0
        %v4750 = vmax.f32 %v4734, 0.0
        %v4751 = vmax.f32 %v4735, 0.0
        %v4752 = vmax.f32 %v4736, 0.0
        %v4753 = vmax.f32 %v4737, 0.0
        %v4754 = vmax.f32 %v4738, 0.0
        %v4755 = vmax.f32 %v4739, 0.0
        %v4756 = vmax.f32 %v4740, 0.0
        %v4757 = vmax.f32 %v4741, 0.0
        %v4758 = vmax.f32 %v4742, 0.0
        %v4759 = vmax.f32 %v4743, 0.0
        %v4760 = vmax.f32 %v4744, 0.0
        %v4761 = vmax.f32 %v4745, 0.0
        %v4762 = vmax.f32 %v4746, 0.0
        %v4763 = vmax.f32 %v4747, 0.0
        %v4764 = vmax.f32 %v4748, 0.0
        %v4765 = vpack.c.bf16 %v4750, %v4749
        %v4766 = vpack.c.bf16 %v4752, %v4751
        %v4767 = vpack.c.bf16 %v4754, %v4753
        %v4768 = vpack.c.bf16 %v4756, %v4755
        %v4769 = vpack.c.bf16 %v4758, %v4757
        %v4770 = vpack.c.bf16 %v4760, %v4759
        %v4771 = vpack.c.bf16 %v4762, %v4761
        %v4772 = vpack.c.bf16 %v4764, %v4763
        %s4773 = scalar_lea.vmem %s3, 192
        %v4774 = vld [vmem:[%s4773] sm:$0xf]
        %v4775 = vld [vmem:[%s4773 + $0x4] sm:$0xf]
        %v4776 = vld [vmem:[%s4773 + $0x8] sm:$0xf]
        %v4777 = vld [vmem:[%s4773 + $0xc] sm:$0xf]
        %v4778 = vld [vmem:[%s4773 + $0x10] sm:$0xf]
        %v4779 = vld [vmem:[%s4773 + $0x14] sm:$0xf]
        %v4780 = vld [vmem:[%s4773 + $0x18] sm:$0xf]
        %v4781 = vld [vmem:[%s4773 + $0x1c] sm:$0xf]
        %v4782 = vld [vmem:[%s4773 + $0x20] sm:$0xf]
        %v4783 = vld [vmem:[%s4773 + $0x24] sm:$0xf]
        %v4784 = vld [vmem:[%s4773 + $0x28] sm:$0xf]
        %v4785 = vld [vmem:[%s4773 + $0x2c] sm:$0xf]
        %v4786 = vld [vmem:[%s4773 + $0x30] sm:$0xf]
        %v4787 = vld [vmem:[%s4773 + $0x34] sm:$0xf]
        %v4788 = vld [vmem:[%s4773 + $0x38] sm:$0xf]
        %v4789 = vld [vmem:[%s4773 + $0x3c] sm:$0xf]
        %v4806 = vunpack.c.l.b16 %v4774
        %v4807 = vunpack.c.l.b16 %v4775
        %v4808 = vunpack.c.l.b16 %v4776
        %v4809 = vunpack.c.l.b16 %v4777
        %v4810 = vunpack.c.l.b16 %v4778
        %v4811 = vunpack.c.l.b16 %v4779
        %v4812 = vunpack.c.l.b16 %v4780
        %v4813 = vunpack.c.l.b16 %v4781
        %v4814 = vunpack.c.l.b16 %v4782
        %v4815 = vunpack.c.l.b16 %v4783
        %v4816 = vunpack.c.l.b16 %v4784
        %v4817 = vunpack.c.l.b16 %v4785
        %v4818 = vunpack.c.l.b16 %v4786
        %v4819 = vunpack.c.l.b16 %v4787
        %v4820 = vunpack.c.l.b16 %v4788
        %v4821 = vunpack.c.l.b16 %v4789
        %v4822 = vpack.c.b16 %v4807, %v4806
        %v4823 = vpack.c.b16 %v4809, %v4808
        %v4824 = vpack.c.b16 %v4811, %v4810
        %v4825 = vpack.c.b16 %v4813, %v4812
        %v4826 = vpack.c.b16 %v4815, %v4814
        %v4827 = vpack.c.b16 %v4817, %v4816
        %v4828 = vpack.c.b16 %v4819, %v4818
        %v4829 = vpack.c.b16 %v4821, %v4820
        %4838 = vmatpush.bf16.msra.mxu0 %v4829
        %4839 = vmatpush.bf16.msra.mxu0 %v4828
        %4840 = vmatpush.bf16.msra.mxu0 %v4827
        %4841 = vmatpush.bf16.msra.mxu0 %v4826
        %4842 = vmatpush.bf16.msra.mxu0 %v4825
        %4843 = vmatpush.bf16.msra.mxu0 %v4824
        %4844 = vmatpush.bf16.msra.mxu0 %v4823
        %4845 = vmatpush.bf16.msra.mxu0 %v4822
        %4846 = vmatmul.bf16.gmra.mxu0 %v4765
        %v4847 = vpop.f32.mrf.mxu0
        %v4848 = vadd.f32 0.0, %v4847
        %v4849 = vpop.f32.mrf.mxu0
        %v4850 = vadd.f32 0.0, %v4849
        %4851 = vmatmul.bf16.gmra.mxu0 %v4766
        %v4852 = vpop.f32.mrf.mxu0
        %v4853 = vadd.f32 0.0, %v4852
        %v4854 = vpop.f32.mrf.mxu0
        %v4855 = vadd.f32 0.0, %v4854
        %4856 = vmatmul.bf16.gmra.mxu0 %v4767
        %v4857 = vpop.f32.mrf.mxu0
        %v4858 = vadd.f32 0.0, %v4857
        %v4859 = vpop.f32.mrf.mxu0
        %v4860 = vadd.f32 0.0, %v4859
        %4861 = vmatmul.bf16.gmra.mxu0 %v4768
        %v4862 = vpop.f32.mrf.mxu0
        %v4863 = vadd.f32 0.0, %v4862
        %v4864 = vpop.f32.mrf.mxu0
        %v4865 = vadd.f32 0.0, %v4864
        %4866 = vmatmul.bf16.gmra.mxu0 %v4769
        %v4867 = vpop.f32.mrf.mxu0
        %v4868 = vadd.f32 0.0, %v4867
        %v4869 = vpop.f32.mrf.mxu0
        %v4870 = vadd.f32 0.0, %v4869
        %4871 = vmatmul.bf16.gmra.mxu0 %v4770
        %v4872 = vpop.f32.mrf.mxu0
        %v4873 = vadd.f32 0.0, %v4872
        %v4874 = vpop.f32.mrf.mxu0
        %v4875 = vadd.f32 0.0, %v4874
        %4876 = vmatmul.bf16.gmra.mxu0 %v4771
        %v4877 = vpop.f32.mrf.mxu0
        %v4878 = vadd.f32 0.0, %v4877
        %v4879 = vpop.f32.mrf.mxu0
        %v4880 = vadd.f32 0.0, %v4879
        %4881 = vmatmul.bf16.gmra.mxu0 %v4772
        %v4882 = vpop.f32.mrf.mxu0
        %v4883 = vadd.f32 0.0, %v4882
        %v4884 = vpop.f32.mrf.mxu0
        %v4885 = vadd.f32 0.0, %v4884
        %4886 = vdwg.mxu0
        %v4887 = vadd.f32 %v3856, %v4848
        %v4888 = vadd.f32 %v3857, %v4850
        %v4889 = vadd.f32 %v3858, %v4853
        %v4890 = vadd.f32 %v3859, %v4855
        %v4891 = vadd.f32 %v3860, %v4858
        %v4892 = vadd.f32 %v3861, %v4860
        %v4893 = vadd.f32 %v3862, %v4863
        %v4894 = vadd.f32 %v3863, %v4865
        %v4895 = vadd.f32 %v3864, %v4868
        %v4896 = vadd.f32 %v3865, %v4870
        %v4897 = vadd.f32 %v3866, %v4873
        %v4898 = vadd.f32 %v3867, %v4875
        %v4899 = vadd.f32 %v3868, %v4878
        %v4900 = vadd.f32 %v3869, %v4880
        %v4901 = vadd.f32 %v3870, %v4883
        %v4902 = vadd.f32 %v3871, %v4885
        %v4903 = vld [vmem:[%s267] sm:$0x1]
        %v4905 = vperm.slane %v4903, 0
        %v4907 = vadd.f32 %v4887, %v4905
        %v4908 = vadd.f32 %v4888, %v4905
        %v4909 = vadd.f32 %v4889, %v4905
        %v4910 = vadd.f32 %v4890, %v4905
        %v4911 = vadd.f32 %v4891, %v4905
        %v4912 = vadd.f32 %v4892, %v4905
        %v4913 = vadd.f32 %v4893, %v4905
        %v4914 = vadd.f32 %v4894, %v4905
        %v4915 = vadd.f32 %v4895, %v4905
        %v4916 = vadd.f32 %v4896, %v4905
        %v4917 = vadd.f32 %v4897, %v4905
        %v4918 = vadd.f32 %v4898, %v4905
        %v4919 = vadd.f32 %v4899, %v4905
        %v4920 = vadd.f32 %v4900, %v4905
        %v4921 = vadd.f32 %v4901, %v4905
        %v4922 = vadd.f32 %v4902, %v4905
        %v4923 = vmax.f32 %v4907, 0.0
        %v4924 = vmax.f32 %v4908, 0.0
        %v4925 = vmax.f32 %v4909, 0.0
        %v4926 = vmax.f32 %v4910, 0.0
        %v4927 = vmax.f32 %v4911, 0.0
        %v4928 = vmax.f32 %v4912, 0.0
        %v4929 = vmax.f32 %v4913, 0.0
        %v4930 = vmax.f32 %v4914, 0.0
        %v4931 = vmax.f32 %v4915, 0.0
        %v4932 = vmax.f32 %v4916, 0.0
        %v4933 = vmax.f32 %v4917, 0.0
        %v4934 = vmax.f32 %v4918, 0.0
        %v4935 = vmax.f32 %v4919, 0.0
        %v4936 = vmax.f32 %v4920, 0.0
        %v4937 = vmax.f32 %v4921, 0.0
        %v4938 = vmax.f32 %v4922, 0.0
        %4939 = vst [vmem:[%s259] sm:$0xff] %v4923
        %4940 = vst [vmem:[%s259 + $0x8] sm:$0xff] %v4924
        %4941 = vst [vmem:[%s259 + $0x10] sm:$0xff] %v4925
        %4942 = vst [vmem:[%s259 + $0x18] sm:$0xff] %v4926
        %4943 = vst [vmem:[%s259 + $0x20] sm:$0xff] %v4927
        %4944 = vst [vmem:[%s259 + $0x28] sm:$0xff] %v4928
        %4945 = vst [vmem:[%s259 + $0x30] sm:$0xff] %v4929
        %4946 = vst [vmem:[%s259 + $0x38] sm:$0xff] %v4930
        %4947 = vst [vmem:[%s259 + $0x40] sm:$0xff] %v4931
        %4948 = vst [vmem:[%s259 + $0x48] sm:$0xff] %v4932
        %4949 = vst [vmem:[%s259 + $0x50] sm:$0xff] %v4933
        %4950 = vst [vmem:[%s259 + $0x58] sm:$0xff] %v4934
        %4951 = vst [vmem:[%s259 + $0x60] sm:$0xff] %v4935
        %4952 = vst [vmem:[%s259 + $0x68] sm:$0xff] %v4936
        %4953 = vst [vmem:[%s259 + $0x70] sm:$0xff] %v4937
        %4954 = vst [vmem:[%s259 + $0x78] sm:$0xff] %v4938
        %s4955 = sand.u32 %s157, 1
        %s4956 = scalar_lea.sflag [#allocation5], %s4955
        %s4957 = sand.u32 %s157, 1
        %s4958 = smul.addr %s4957, 128
        %s4959 = scalar_lea.vmem [#allocation6], %s4958
        // Predicated region
        $region49: #{tpu_custom_call.1} parent=39 // pred_check
          %p4960 = pneg %p167
        $region50: #{tpu_custom_call.1} parent=39 // pred_check_branch
          %4962 = sbr.rel (%p4960) target = $region52
        $region51: #{tpu_custom_call.1} parent=39 // pred_region
          %s4963 = smul.u32 8, %s25
          %4965 = vsyncadd %s4956, 0
          %s4966 = smul.addr %s4963, 2
          %s4967 = smul.addr %s24, 32
          %s4968 = sadd.s32 %s4966, %s4967
          %s4969 = smul.addr %s4968, 8
          %s4970 = scalar_lea.hbm %s5, %s4969
          %s4971 = sshll.u32 %s4959, 4
          %s4972 = int_to_ptr.vmem [resolvable:$true] %s4971
          %s4973 = sshll.u32 %s4970, 4
          %s4974 = int_to_ptr.hbm [resolvable:$true] %s4973
          %4979 = dma.vmem_to_hbm [thread:$0]  %s4972, 2048, %s4974, %s4956, 128, 128, 8
        $region52: #{tpu_custom_call.1} parent=39 // pred_fallthru
          _
      $region40: #{tpu_custom_call.1} parent=5 // pred_fallthru
        _
      %p4980 = scmp.le.s32.totalorder 2, %s15
      // Predicated region
      $region53: #{tpu_custom_call.1} parent=5 // pred_check
        %p4981 = pneg %p4980
      $region54: #{tpu_custom_call.1} parent=5 // pred_check_branch
        %4983 = sbr.rel (%p4981) target = $region56
      $region55: #{tpu_custom_call.1} parent=5 // pred_region
        %s4984 = ssub.s32 %s15, 2
        // Predicated region
        $region57: #{tpu_custom_call.1} parent=55 // pred_check
          %p4985 = pneg %p173
        $region58: #{tpu_custom_call.1} parent=55 // pred_check_branch
          %4987 = sbr.rel (%p4985) target = $region60
        $region59: #{tpu_custom_call.1} parent=55 // pred_region
          %s4988 = sand.u32 %s158, 1
          %s4989 = scalar_lea.sflag [#allocation5], %s4988
          %s4990 = sand.u32 %s158, 1
          %s4991 = smul.addr %s4990, 128
          %s4992 = scalar_lea.vmem [#allocation6], %s4991
          %4994 = dma.done %s4989, 2048
        $region60: #{tpu_custom_call.1} parent=55 // pred_fallthru
          _
      $region56: #{tpu_custom_call.1} parent=5 // pred_fallthru
        _
    $region6: #{tpu_custom_call.1} parent=1 // loop_footer
      %s19 = sadd.s32 1, %s15
    $region7: #{tpu_custom_call.1} parent=1 // loop_footer_branch
      %14 = sbr.rel target = $region3
    $region8: #{tpu_custom_call.1} parent=1 // loop_exit
      _
    %4995 = vsyncpa [#allocation4], 1
    %s4996 = scalar_lea.sflag [#allocation4], 1
    %4997 = vsyncpa %s4996, 1
    %4998 = vsyncpa [#allocation5], 1
    %s4999 = scalar_lea.sflag [#allocation5], 1
    %5000 = vsyncpa %s4999, 1

</llo_original>
